<compile_context>
chip_gen: v6e
topology: v6e:2x2x1
jax: 0.10.0
libtpu: 0.0.40
codegen_flags: <defaults>
</compile_context>

<pallas_src>
import jax
import jax.numpy as jnp
from jax.experimental import pallas as pl
from jax.experimental.pallas import tpu as pltpu


def _round_up(x, m):
    return ((x + m - 1) // m) * m


def _vmem_budget_bytes():
    """Per-generation VMEM budget: ~48 MiB on v7x (64 MiB), ~96 MiB on v5e/v6e."""
    cap = 64 * 1024 * 1024                      # conservative fallback (v7x per-TC VMEM)
    try:
        info = pltpu.get_tpu_info()
        for name in ("vmem_capacity_bytes", "vmem_bytes", "vmem_size_bytes"):
            v = getattr(info, name, None)
            if v:
                cap = int(v)
                break
    except Exception:
        pass
    return max(16 * 1024 * 1024, min(cap * 3 // 4, 112 * 1024 * 1024))


def _auto_tiles(n_node, n_edge, d_edge, tile_n, tile_e, vmem_budget):
    n_node_8 = _round_up(n_node, 8)
    n_edge_128 = _round_up(n_edge, 128)
    if tile_n is None:
        # Keep >= 2 node blocks so v7x's two TensorCores both get work on the
        # "parallel" axis; v5e/v6e just see the same (big enough) tile.
        tile_n = min(256, max(8, _round_up(pl.cdiv(n_node_8, 2), 8)))
    tile_n = max(8, min(_round_up(tile_n, 8), n_node_8))
    if tile_e is None:
        # Edge-resident slab when it fits the per-generation VMEM budget
        # (double-buffered bf16 edge features + receiver row + headroom).
        edge_budget = int(vmem_budget * 0.6)
        per_edge = 2 * 2 * d_edge + 96
        cap = max(128, (edge_budget // per_edge) // 128 * 128)
        tile_e = min(n_edge_128, cap)
    tile_e = max(128, min(_round_up(tile_e, 128), n_edge_128))
    return tile_n, tile_e


def node_processor_kernel(eblk_ref, ecnt_ref,              # scalar prefetch (SMEM)
                          recv_ref, nf_ref, ef_ref,
                          w1n_ref, w1e_ref, b1_ref,
                          w2_ref, b2_ref,
                          w3_ref, b3_ref,
                          gamma_ref, beta_ref,
                          out_ref, acc_ref):
    del eblk_ref                                           # only used by the index_maps
    i = pl.program_id(0)                                   # node tile   ("parallel")
    s = pl.program_id(1)                                   # edge step   ("arbitrary")
    n_steps = pl.num_programs(1)
    tile_n = acc_ref.shape[0]
    tile_e = recv_ref.shape[1]

    # ---- init the per-node-tile aggregation accumulator ----
    @pl.when(s == 0)
    def _():
        acc_ref[...] = jnp.zeros_like(acc_ref)

    # ---- scatter_add(edge_feature, receiver) over this tile's own edge range ----
    # Steps beyond ecnt[i] are padding (their index_map repeats the previous block,
    # so the DMA is deduped) and are skipped here.
    @pl.when(s < ecnt_ref[i])
    def _():
        # Shift the narrow [1, tile_e] receiver row by node_base (a few vregs of int
        # sub) and compare against a grid-invariant plain sublane iota, instead of
        # adding node_base into the [tile_n, tile_e] iota.
        rel = recv_ref[...] - i * tile_n                            # [1, tile_e]
        row_iota = jax.lax.broadcasted_iota(jnp.int32, (tile_n, tile_e), 0)
        onehot = (row_iota == rel).astype(jnp.bfloat16)             # 0/1 exact
        # TODO(synk): if the 1->tile_n sublane broadcast of `rel` shows up on the XLU
        # in the bundle dump, route it through the load path (sublane-broadcast read
        # of a small VMEM scratch) instead.
        acc_ref[...] += jnp.dot(onehot, ef_ref[...],
                                preferred_element_type=jnp.float32)

    # ---- last step of this node tile: MLP + LayerNorm + residual, all in VMEM ----
    @pl.when(s == n_steps - 1)
    def _():
        nf = nf_ref[...]
        agg = acc_ref[...]

        # layer 1: Linear(concat([nf, agg])) + ReLU   (concat folded into split W1)
        h = (jnp.dot(nf, w1n_ref[...], preferred_element_type=jnp.float32)
             + jnp.dot(agg, w1e_ref[...], preferred_element_type=jnp.float32)
             + b1_ref[...])
        h = jnp.maximum(h, 0.0)

        # layer 2: Linear + ReLU
        h = jnp.dot(h, w2_ref[...], preferred_element_type=jnp.float32) + b2_ref[...]
        h = jnp.maximum(h, 0.0)

        # output layer
        y = jnp.dot(h, w3_ref[...], preferred_element_type=jnp.float32) + b3_ref[...]

        # LayerNorm(out_dim): biased variance, eps=1e-5, elementwise affine
        mean = jnp.mean(y, axis=-1, keepdims=True)
        var = jnp.mean((y - mean) ** 2, axis=-1, keepdims=True)
        y = (y - mean) * jax.lax.rsqrt(var + 1e-5)
        y = y * gamma_ref[...] + beta_ref[...]

        # residual
        out_ref[...] = y + nf


def node_processor(node_feature, edge_matrix, edge_feature, params,
                   tile_n=None, tile_e=None):
    """NodeProcessor.forward (aggregation='sum', norm_type='LayerNorm')."""
    (w1n, w1e, b1, w2, b2, w3, b3, gamma, beta) = params
    n_node, d_node = node_feature.shape
    n_edge, d_edge = edge_feature.shape
    hidden = w2.shape[0]

    vmem_budget = _vmem_budget_bytes()
    tile_n, tile_e = _auto_tiles(n_node, n_edge, d_edge, tile_n, tile_e, vmem_budget)
    n_node_p = _round_up(n_node, tile_n)
    n_edge_p = _round_up(n_edge, tile_e)
    n_tiles = n_node_p // tile_n
    n_eblocks = n_edge_p // tile_e

    # ---- wrapper prep: receiver-sorted edges + per-tile edge-block tables ----
    receiver_idx = edge_matrix.T[:, 1].astype(jnp.int32)            # as in the module
    order = jnp.argsort(receiver_idx)
    recv_sorted = receiver_idx[order]
    ef_sorted = edge_feature[order].astype(jnp.bfloat16)            # f32 accumulation below

    nf = node_feature
    if n_node_p != n_node:
        nf = jnp.pad(nf, ((0, n_node_p - n_node), (0, 0)))
    if n_edge_p != n_edge:
        ef_sorted = jnp.pad(ef_sorted, ((0, n_edge_p - n_edge), (0, 0)))
        recv_sorted = jnp.pad(recv_sorted, (0, n_edge_p - n_edge),
                              constant_values=n_node_p)             # sentinel: never matches
    recv2d = recv_sorted.reshape(1, n_edge_p)

    tile_lo = jnp.arange(n_tiles, dtype=jnp.int32) * tile_n
    starts = jnp.searchsorted(recv_sorted, tile_lo, side="left")
    ends = jnp.searchsorted(recv_sorted, tile_lo + tile_n, side="left")
    has_edges = ends > starts
    first_blk = jnp.minimum(starts // tile_e, n_eblocks - 1)
    last_blk = jnp.where(has_edges, (ends - 1) // tile_e, first_blk)
    ecnt = jnp.where(has_edges, last_blk - first_blk + 1, 0).astype(jnp.int32)

    try:                                    # tight static bound when metadata is concrete
        max_steps = max(int(jax.device_get(jnp.max(ecnt))), 1)
        n_visits = max(int(jax.device_get(jnp.sum(ecnt))), 1)
    except Exception:                       # traced metadata: static worst case
        max_steps = n_eblocks
        n_visits = n_tiles * n_eblocks

    steps = jnp.arange(max_steps, dtype=jnp.int32)
    eblk = first_blk[:, None] + jnp.minimum(steps[None, :],
                                            jnp.maximum(ecnt[:, None] - 1, 0))
    # Flattened (SMEM-friendly) [n_tiles * max_steps]; padding steps repeat the last
    # real block so the pipeline dedups the DMA.
    eblk_flat = jnp.clip(eblk, 0, n_eblocks - 1).astype(jnp.int32).reshape(-1)

    const = lambda i, s, eb, ec: (0, 0)      # weights / norm params stay VMEM-resident
    in_specs = [
        pl.BlockSpec((1, tile_e), lambda i, s, eb, ec: (0, eb[i * max_steps + s])),
        pl.BlockSpec((tile_n, d_node), lambda i, s, eb, ec: (i, 0)),
        pl.BlockSpec((tile_e, d_edge), lambda i, s, eb, ec: (eb[i * max_steps + s], 0)),
        pl.BlockSpec((d_node, hidden), const),        # w1 (node half)
        pl.BlockSpec((d_edge, hidden), const),        # w1 (edge half)
        pl.BlockSpec((1, hidden), const),             # b1
        pl.BlockSpec((hidden, hidden), const),        # w2
        pl.BlockSpec((1, hidden), const),             # b2
        pl.BlockSpec((hidden, d_node), const),        # w3
        pl.BlockSpec((1, d_node), const),             # b3
        pl.BlockSpec((1, d_node), const),             # gamma
        pl.BlockSpec((1, d_node), const),             # beta
    ]
    out_spec = pl.BlockSpec((tile_n, d_node), lambda i, s, eb, ec: (i, 0))

    mlp_flops = 2 * n_node_p * (d_node * hidden + d_edge * hidden
                                + hidden * hidden + hidden * d_node)
    flops = 2 * n_visits * tile_n * tile_e * d_edge + mlp_flops
    param_bytes = sum(int(p.size) * 4 for p in params)
    bytes_accessed = (n_visits * tile_e * (2 * d_edge + 4)           # edge blocks + recv
                      + int(nf.size) * 4 + n_node_p * d_node * 4 + param_bytes)

    out = pl.pallas_call(
        node_processor_kernel,
        out_shape=jax.ShapeDtypeStruct((n_node_p, d_node), jnp.float32),
        grid_spec=pltpu.PrefetchScalarGridSpec(
            num_scalar_prefetch=2,
            grid=(n_tiles, max_steps),
            in_specs=in_specs,
            out_specs=out_spec,
            scratch_shapes=[pltpu.VMEM((tile_n, d_edge), jnp.float32)],
        ),
        compiler_params=pltpu.CompilerParams(
            dimension_semantics=("parallel", "arbitrary"),
            vmem_limit_bytes=int(vmem_budget),
        ),
        cost_estimate=pl.CostEstimate(
            flops=int(flops), transcendentals=int(n_node_p),
            bytes_accessed=int(bytes_accessed)),
    )(eblk_flat, ecnt, recv2d, nf, ef_sorted,
      w1n, w1e, b1, w2, b2, w3, b3, gamma, beta)

    return out[:n_node]


def init_params(key, in_dim_node, in_dim_edge, hidden_dim):
    """Linear-style init (uniform +-1/sqrt(fan_in)); LayerNorm gamma=1, beta=0."""
    def linear(k, fan_in, fan_out):
        kw, kb = jax.random.split(k)
        bound = 1.0 / jnp.sqrt(fan_in)
        w = jax.random.uniform(kw, (fan_in, fan_out), jnp.float32, -bound, bound)
        b = jax.random.uniform(kb, (1, fan_out), jnp.float32, -bound, bound)
        return w, b

    k1, k2, k3 = jax.random.split(key, 3)
    in_dim = in_dim_node + in_dim_edge
    w1, b1 = linear(k1, in_dim, hidden_dim)
    w1n, w1e = w1[:in_dim_node], w1[in_dim_node:]     # split weight == concat input
    w2, b2 = linear(k2, hidden_dim, hidden_dim)
    w3, b3 = linear(k3, hidden_dim, in_dim_node)
    gamma = jnp.ones((1, in_dim_node), jnp.float32)
    beta = jnp.zeros((1, in_dim_node), jnp.float32)
    return (w1n, w1e, b1, w2, b2, w3, b3, gamma, beta)


def reference(node_feature, edge_matrix, edge_feature, params):
    """Pure-JAX f32 reference mirroring the PyTorch forward."""
    (w1n, w1e, b1, w2, b2, w3, b3, gamma, beta) = params
    n_node = node_feature.shape[0]
    receiver_idx = edge_matrix.T[:, 1]
    agg = jax.ops.segment_sum(edge_feature, receiver_idx, num_segments=n_node)
    h = jnp.maximum(node_feature @ w1n + agg @ w1e + b1, 0.0)
    h = jnp.maximum(h @ w2 + b2, 0.0)
    y = h @ w3 + b3
    mean = jnp.mean(y, axis=-1, keepdims=True)
    var = jnp.mean((y - mean) ** 2, axis=-1, keepdims=True)
    y = (y - mean) / jnp.sqrt(var + 1e-5) * gamma + beta
    return y + node_feature


if __name__ == "__main__":
    # Module defaults: in_dim_node = in_dim_edge = hidden_dim = 128 (lane-aligned).
    N_NODE, N_EDGE = 512, 1024
    D_NODE, D_EDGE, HIDDEN = 128, 128, 128

    key = jax.random.PRNGKey(0)
    k_nf, k_ef, k_send, k_recv, k_par = jax.random.split(key, 5)

    node_feature = jax.random.normal(k_nf, (N_NODE, D_NODE), jnp.float32)
    edge_feature = jax.random.normal(k_ef, (N_EDGE, D_EDGE), jnp.float32)
    senders = jax.random.randint(k_send, (1, N_EDGE), 0, N_NODE, jnp.int32)
    receivers = jax.random.randint(k_recv, (1, N_EDGE), 0, N_NODE, jnp.int32)
    edge_matrix = jnp.concatenate([senders, receivers], axis=0)      # [2, N_edge]

    params = init_params(k_par, D_NODE, D_EDGE, HIDDEN)
    ref = reference(node_feature, edge_matrix, edge_feature, params)

    # 1) auto tiling: resident edge slab + 2 node blocks (grid collapses to (2, 1)).
    out = node_processor(node_feature, edge_matrix, edge_feature, params)
    out = jax.block_until_ready(out)
    assert out.shape == (N_NODE, D_NODE)
    # bf16 cast of edge features in the aggregation => ~1e-3-scale deviation
    assert jnp.allclose(out, ref, atol=2e-2, rtol=2e-2)

    # 2) forced small tiles: exercises the sorted multi-block / count-gated path.
    out2 = node_processor(node_feature, edge_matrix, edge_feature, params,
                          tile_n=128, tile_e=256)
    out2 = jax.block_until_ready(out2)
    assert jnp.allclose(out2, ref, atol=2e-2, rtol=2e-2)

    print("KERNEL_OK")
</pallas_src>

<mosaic_0001>
module attributes {stable_mosaic.version = 11 : i64} {
  func.func @node_processor_kernel(%arg0: i32, %arg1: i32, %arg2: memref<2xi32, #tpu.memory_space<smem>>, %arg3: memref<2xi32, #tpu.memory_space<smem>>, %arg4: memref<1x1024xi32, #tpu.memory_space<vmem>>, %arg5: memref<256x128xf32, #tpu.memory_space<vmem>>, %arg6: memref<1024x128xbf16, #tpu.memory_space<vmem>>, %arg7: memref<128x128xf32, #tpu.memory_space<vmem>>, %arg8: memref<128x128xf32, #tpu.memory_space<vmem>>, %arg9: memref<1x128xf32, #tpu.memory_space<vmem>>, %arg10: memref<128x128xf32, #tpu.memory_space<vmem>>, %arg11: memref<1x128xf32, #tpu.memory_space<vmem>>, %arg12: memref<128x128xf32, #tpu.memory_space<vmem>>, %arg13: memref<1x128xf32, #tpu.memory_space<vmem>>, %arg14: memref<1x128xf32, #tpu.memory_space<vmem>>, %arg15: memref<1x128xf32, #tpu.memory_space<vmem>>, %arg16: memref<256x128xf32, #tpu.memory_space<vmem>>, %arg17: memref<256x128xf32, #tpu.memory_space<vmem>>) attributes {dimension_semantics = [#tpu.dimension_semantics<parallel>, #tpu.dimension_semantics<arbitrary>], iteration_bounds = array<i64: 2, 1>, scalar_prefetch = 2 : i64, scratch_operands = 1 : i64, tpu.core_type = #tpu.core_type<tc>, window_params = [{transform_indices = @transform_0, window_bounds = array<i64: 1, 1024>}, {transform_indices = @transform_1, window_bounds = array<i64: 256, 128>}, {transform_indices = @transform_2, window_bounds = array<i64: 1024, 128>}, {pipeline_mode = #tpu.pipeline_mode<synchronous>, transform_indices = @transform_3, window_bounds = array<i64: 128, 128>}, {pipeline_mode = #tpu.pipeline_mode<synchronous>, transform_indices = @transform_4, window_bounds = array<i64: 128, 128>}, {pipeline_mode = #tpu.pipeline_mode<synchronous>, transform_indices = @transform_5, window_bounds = array<i64: 1, 128>}, {pipeline_mode = #tpu.pipeline_mode<synchronous>, transform_indices = @transform_6, window_bounds = array<i64: 128, 128>}, {pipeline_mode = #tpu.pipeline_mode<synchronous>, transform_indices = @transform_7, window_bounds = array<i64: 1, 128>}, {pipeline_mode = #tpu.pipeline_mode<synchronous>, transform_indices = @transform_8, window_bounds = array<i64: 128, 128>}, {pipeline_mode = #tpu.pipeline_mode<synchronous>, transform_indices = @transform_9, window_bounds = array<i64: 1, 128>}, {pipeline_mode = #tpu.pipeline_mode<synchronous>, transform_indices = @transform_10, window_bounds = array<i64: 1, 128>}, {pipeline_mode = #tpu.pipeline_mode<synchronous>, transform_indices = @transform_11, window_bounds = array<i64: 1, 128>}, {transform_indices = @transform_12, window_bounds = array<i64: 256, 128>}]} {
    %c0_i32 = arith.constant 0 : i32
    %0 = arith.cmpi eq, %arg1, %c0_i32 : i32
    %1 = arith.extui %0 : i1 to i32
    %c0_i32_0 = arith.constant 0 : i32
    %2 = arith.cmpi ne, %1, %c0_i32_0 : i32
    scf.if %2 {
      %cst = arith.constant 0.000000e+00 : f32
      %11 = vector.broadcast %cst : f32 to vector<256x128xf32>
      %c0 = arith.constant 0 : index
      %c0_4 = arith.constant 0 : index
      %12 = vector.load %arg17[%c0, %c0_4] : memref<256x128xf32, #tpu.memory_space<vmem>>, vector<256x128xf32>
      tpu.vector_store %arg17[%c0, %c0_4], %11 {strides = array<i32>} : memref<256x128xf32, #tpu.memory_space<vmem>>, vector<256x128xf32>,
    } else {
    }
    %3 = arith.index_cast %arg0 : i32 to index
    %4 = memref.load %arg3[%3] : memref<2xi32, #tpu.memory_space<smem>>
    %5 = arith.cmpi slt, %arg1, %4 : i32
    %6 = arith.extui %5 : i1 to i32
    %c0_i32_1 = arith.constant 0 : i32
    %7 = arith.cmpi ne, %6, %c0_i32_1 : i32
    scf.if %7 {
      %c0 = arith.constant 0 : index
      %c0_4 = arith.constant 0 : index
      %11 = vector.load %arg4[%c0, %c0_4] : memref<1x1024xi32, #tpu.memory_space<vmem>>, vector<1x1024xi32>
      %c256_i32 = arith.constant 256 : i32
      %12 = arith.muli %arg0, %c256_i32 : i32
      %13 = vector.broadcast %12 : i32 to vector<1x1024xi32>
      %14 = arith.subi %11, %13 : vector<1x1024xi32>
      %15 = tpu.iota {dimensions = array<i32: 0>} : vector<256x1024xi32>
      %16 = vector.broadcast %14 : vector<1x1024xi32> to vector<256x1024xi32>
      %17 = arith.cmpi eq, %15, %16 : vector<256x1024xi32>
      %18 = arith.extui %17 : vector<256x1024xi1> to vector<256x1024xi32>
      %19 = arith.sitofp %18 : vector<256x1024xi32> to vector<256x1024xf32>
      %20 = arith.truncf %19 : vector<256x1024xf32> to vector<256x1024xbf16>
      %c0_5 = arith.constant 0 : index
      %c0_6 = arith.constant 0 : index
      %21 = vector.load %arg17[%c0_5, %c0_6] : memref<256x128xf32, #tpu.memory_space<vmem>>, vector<256x128xf32>
      %c0_7 = arith.constant 0 : index
      %c0_8 = arith.constant 0 : index
      %22 = vector.load %arg6[%c0_7, %c0_8] : memref<1024x128xbf16, #tpu.memory_space<vmem>>, vector<1024x128xbf16>
      %cst = arith.constant dense<0.000000e+00> : vector<256x128xf32>
      %23 = tpu.matmul %20, %22, %cst {dimension_numbers = #tpu.dot_dimension_numbers<[1], [0], [0], [1], [0, 0, 1, 1], [], []>} : vector<256x1024xbf16>, vector<1024x128xbf16>, vector<256x128xf32> -> vector<256x128xf32>
      %24 = arith.addf %21, %23 : vector<256x128xf32>
      %c0_9 = arith.constant 0 : index
      %c0_10 = arith.constant 0 : index
      %25 = vector.load %arg17[%c0_9, %c0_10] : memref<256x128xf32, #tpu.memory_space<vmem>>, vector<256x128xf32>
      tpu.vector_store %arg17[%c0_9, %c0_10], %24 {strides = array<i32>} : memref<256x128xf32, #tpu.memory_space<vmem>>, vector<256x128xf32>,
    } else {
    }
    %c0_i32_2 = arith.constant 0 : i32
    %8 = arith.cmpi eq, %arg1, %c0_i32_2 : i32
    %9 = arith.extui %8 : i1 to i32
    %c0_i32_3 = arith.constant 0 : i32
    %10 = arith.cmpi ne, %9, %c0_i32_3 : i32
    scf.if %10 {
      %c0 = arith.constant 0 : index
      %c0_4 = arith.constant 0 : index
      %11 = vector.load %arg5[%c0, %c0_4] : memref<256x128xf32, #tpu.memory_space<vmem>>, vector<256x128xf32>
      %c0_5 = arith.constant 0 : index
      %c0_6 = arith.constant 0 : index
      %12 = vector.load %arg17[%c0_5, %c0_6] : memref<256x128xf32, #tpu.memory_space<vmem>>, vector<256x128xf32>
      %c0_7 = arith.constant 0 : index
      %c0_8 = arith.constant 0 : index
      %13 = vector.load %arg7[%c0_7, %c0_8] : memref<128x128xf32, #tpu.memory_space<vmem>>, vector<128x128xf32>
      %cst = arith.constant dense<0.000000e+00> : vector<256x128xf32>
      %14 = tpu.matmul %11, %13, %cst {dimension_numbers = #tpu.dot_dimension_numbers<[1], [0], [0], [1], [0, 0, 1, 1], [], []>} : vector<256x128xf32>, vector<128x128xf32>, vector<256x128xf32> -> vector<256x128xf32>
      %c0_9 = arith.constant 0 : index
      %c0_10 = arith.constant 0 : index
      %15 = vector.load %arg8[%c0_9, %c0_10] : memref<128x128xf32, #tpu.memory_space<vmem>>, vector<128x128xf32>
      %cst_11 = arith.constant dense<0.000000e+00> : vector<256x128xf32>
      %16 = tpu.matmul %12, %15, %cst_11 {dimension_numbers = #tpu.dot_dimension_numbers<[1], [0], [0], [1], [0, 0, 1, 1], [], []>} : vector<256x128xf32>, vector<128x128xf32>, vector<256x128xf32> -> vector<256x128xf32>
      %17 = arith.addf %14, %16 : vector<256x128xf32>
      %c0_12 = arith.constant 0 : index
      %c0_13 = arith.constant 0 : index
      %18 = vector.load %arg9[%c0_12, %c0_13] : memref<1x128xf32, #tpu.memory_space<vmem>>, vector<1x128xf32>
      %19 = vector.broadcast %18 : vector<1x128xf32> to vector<256x128xf32>
      %20 = arith.addf %17, %19 : vector<256x128xf32>
      %cst_14 = arith.constant 0.000000e+00 : f32
      %21 = vector.broadcast %cst_14 : f32 to vector<256x128xf32>
      %22 = arith.maximumf %20, %21 : vector<256x128xf32>
      %c0_15 = arith.constant 0 : index
      %c0_16 = arith.constant 0 : index
      %23 = vector.load %arg10[%c0_15, %c0_16] : memref<128x128xf32, #tpu.memory_space<vmem>>, vector<128x128xf32>
      %cst_17 = arith.constant dense<0.000000e+00> : vector<256x128xf32>
      %24 = tpu.matmul %22, %23, %cst_17 {dimension_numbers = #tpu.dot_dimension_numbers<[1], [0], [0], [1], [0, 0, 1, 1], [], []>} : vector<256x128xf32>, vector<128x128xf32>, vector<256x128xf32> -> vector<256x128xf32>
      %c0_18 = arith.constant 0 : index
      %c0_19 = arith.constant 0 : index
      %25 = vector.load %arg11[%c0_18, %c0_19] : memref<1x128xf32, #tpu.memory_space<vmem>>, vector<1x128xf32>
      %26 = vector.broadcast %25 : vector<1x128xf32> to vector<256x128xf32>
      %27 = arith.addf %24, %26 : vector<256x128xf32>
      %cst_20 = arith.constant 0.000000e+00 : f32
      %28 = vector.broadcast %cst_20 : f32 to vector<256x128xf32>
      %29 = arith.maximumf %27, %28 : vector<256x128xf32>
      %c0_21 = arith.constant 0 : index
      %c0_22 = arith.constant 0 : index
      %30 = vector.load %arg12[%c0_21, %c0_22] : memref<128x128xf32, #tpu.memory_space<vmem>>, vector<128x128xf32>
      %cst_23 = arith.constant dense<0.000000e+00> : vector<256x128xf32>
      %31 = tpu.matmul %29, %30, %cst_23 {dimension_numbers = #tpu.dot_dimension_numbers<[1], [0], [0], [1], [0, 0, 1, 1], [], []>} : vector<256x128xf32>, vector<128x128xf32>, vector<256x128xf32> -> vector<256x128xf32>
      %c0_24 = arith.constant 0 : index
      %c0_25 = arith.constant 0 : index
      %32 = vector.load %arg13[%c0_24, %c0_25] : memref<1x128xf32, #tpu.memory_space<vmem>>, vector<1x128xf32>
      %33 = vector.broadcast %32 : vector<1x128xf32> to vector<256x128xf32>
      %34 = arith.addf %31, %33 : vector<256x128xf32>
      %cst_26 = arith.constant dense<0.000000e+00> : vector<256xf32>
      %35 = vector.multi_reduction <add>, %34, %cst_26 [1] : vector<256x128xf32> to vector<256xf32>
      %36 = vector.shape_cast %35 : vector<256xf32> to vector<256x1xf32>
      %cst_27 = arith.constant 1.280000e+02 : f32
      %37 = vector.broadcast %cst_27 : f32 to vector<256x1xf32>
      %38 = arith.divf %36, %37 : vector<256x1xf32>
      %39 = vector.broadcast %38 : vector<256x1xf32> to vector<256x128xf32>
      %40 = arith.subf %34, %39 : vector<256x128xf32>
      %41 = arith.mulf %40, %40 : vector<256x128xf32>
      %cst_28 = arith.constant dense<0.000000e+00> : vector<256xf32>
      %42 = vector.multi_reduction <add>, %41, %cst_28 [1] : vector<256x128xf32> to vector<256xf32>
      %43 = vector.shape_cast %42 : vector<256xf32> to vector<256x1xf32>
      %cst_29 = arith.constant 1.280000e+02 : f32
      %44 = vector.broadcast %cst_29 : f32 to vector<256x1xf32>
      %45 = arith.divf %43, %44 : vector<256x1xf32>
      %46 = vector.broadcast %38 : vector<256x1xf32> to vector<256x128xf32>
      %47 = arith.subf %34, %46 : vector<256x128xf32>
      %cst_30 = arith.constant 9.99999974E-6 : f32
      %48 = vector.broadcast %cst_30 : f32 to vector<256x1xf32>
      %49 = arith.addf %45, %48 : vector<256x1xf32>
      %50 = math.rsqrt %49 : vector<256x1xf32>
      %51 = vector.broadcast %50 : vector<256x1xf32> to vector<256x128xf32>
      %52 = arith.mulf %47, %51 : vector<256x128xf32>
      %c0_31 = arith.constant 0 : index
      %c0_32 = arith.constant 0 : index
      %53 = vector.load %arg14[%c0_31, %c0_32] : memref<1x128xf32, #tpu.memory_space<vmem>>, vector<1x128xf32>
      %54 = vector.broadcast %53 : vector<1x128xf32> to vector<256x128xf32>
      %55 = arith.mulf %52, %54 : vector<256x128xf32>
      %c0_33 = arith.constant 0 : index
      %c0_34 = arith.constant 0 : index
      %56 = vector.load %arg15[%c0_33, %c0_34] : memref<1x128xf32, #tpu.memory_space<vmem>>, vector<1x128xf32>
      %57 = vector.broadcast %56 : vector<1x128xf32> to vector<256x128xf32>
      %58 = arith.addf %55, %57 : vector<256x128xf32>
      %59 = arith.addf %58, %11 : vector<256x128xf32>
      %c0_35 = arith.constant 0 : index
      %c0_36 = arith.constant 0 : index
      %60 = vector.load %arg16[%c0_35, %c0_36] : memref<256x128xf32, #tpu.memory_space<vmem>>, vector<256x128xf32>
      tpu.vector_store %arg16[%c0_35, %c0_36], %59 {strides = array<i32>} : memref<256x128xf32, #tpu.memory_space<vmem>>, vector<256x128xf32>,
    } else {
    }
    return
  }
  func.func @transform_0(%arg0: i32, %arg1: i32, %arg2: memref<2xi32, #tpu.memory_space<smem>>, %arg3: memref<2xi32, #tpu.memory_space<smem>>) -> (i32, i32) {
    %c1_i32 = arith.constant 1 : i32
    %0 = arith.muli %arg0, %c1_i32 : i32
    %1 = arith.addi %0, %arg1 : i32
    %2 = arith.index_cast %1 : i32 to index
    %3 = memref.load %arg2[%2] : memref<2xi32, #tpu.memory_space<smem>>
    %c0_i32 = arith.constant 0 : i32
    %c0_i32_0 = arith.constant 0 : i32
    return %c0_i32, %3 : i32, i32
  }
  func.func @transform_1(%arg0: i32, %arg1: i32, %arg2: memref<2xi32, #tpu.memory_space<smem>>, %arg3: memref<2xi32, #tpu.memory_space<smem>>) -> (i32, i32) {
    %c0_i32 = arith.constant 0 : i32
    %c0_i32_0 = arith.constant 0 : i32
    return %arg0, %c0_i32 : i32, i32
  }
  func.func @transform_2(%arg0: i32, %arg1: i32, %arg2: memref<2xi32, #tpu.memory_space<smem>>, %arg3: memref<2xi32, #tpu.memory_space<smem>>) -> (i32, i32) {
    %c1_i32 = arith.constant 1 : i32
    %0 = arith.muli %arg0, %c1_i32 : i32
    %1 = arith.addi %0, %arg1 : i32
    %2 = arith.index_cast %1 : i32 to index
    %3 = memref.load %arg2[%2] : memref<2xi32, #tpu.memory_space<smem>>
    %c0_i32 = arith.constant 0 : i32
    %c0_i32_0 = arith.constant 0 : i32
    return %3, %c0_i32 : i32, i32
  }
  func.func @transform_3(%arg0: i32, %arg1: i32, %arg2: memref<2xi32, #tpu.memory_space<smem>>, %arg3: memref<2xi32, #tpu.memory_space<smem>>) -> (i32, i32) {
    %c0_i32 = arith.constant 0 : i32
    %c0_i32_0 = arith.constant 0 : i32
    %c0_i32_1 = arith.constant 0 : i32
    return %c0_i32, %c0_i32_0 : i32, i32
  }
  func.func @transform_4(%arg0: i32, %arg1: i32, %arg2: memref<2xi32, #tpu.memory_space<smem>>, %arg3: memref<2xi32, #tpu.memory_space<smem>>) -> (i32, i32) {
    %c0_i32 = arith.constant 0 : i32
    %c0_i32_0 = arith.constant 0 : i32
    %c0_i32_1 = arith.constant 0 : i32
    return %c0_i32, %c0_i32_0 : i32, i32
  }
  func.func @transform_5(%arg0: i32, %arg1: i32, %arg2: memref<2xi32, #tpu.memory_space<smem>>, %arg3: memref<2xi32, #tpu.memory_space<smem>>) -> (i32, i32) {
    %c0_i32 = arith.constant 0 : i32
    %c0_i32_0 = arith.constant 0 : i32
    %c0_i32_1 = arith.constant 0 : i32
    return %c0_i32, %c0_i32_0 : i32, i32
  }
  func.func @transform_6(%arg0: i32, %arg1: i32, %arg2: memref<2xi32, #tpu.memory_space<smem>>, %arg3: memref<2xi32, #tpu.memory_space<smem>>) -> (i32, i32) {
    %c0_i32 = arith.constant 0 : i32
    %c0_i32_0 = arith.constant 0 : i32
    %c0_i32_1 = arith.constant 0 : i32
    return %c0_i32, %c0_i32_0 : i32, i32
  }
  func.func @transform_7(%arg0: i32, %arg1: i32, %arg2: memref<2xi32, #tpu.memory_space<smem>>, %arg3: memref<2xi32, #tpu.memory_space<smem>>) -> (i32, i32) {
    %c0_i32 = arith.constant 0 : i32
    %c0_i32_0 = arith.constant 0 : i32
    %c0_i32_1 = arith.constant 0 : i32
    return %c0_i32, %c0_i32_0 : i32, i32
  }
  func.func @transform_8(%arg0: i32, %arg1: i32, %arg2: memref<2xi32, #tpu.memory_space<smem>>, %arg3: memref<2xi32, #tpu.memory_space<smem>>) -> (i32, i32) {
    %c0_i32 = arith.constant 0 : i32
    %c0_i32_0 = arith.constant 0 : i32
    %c0_i32_1 = arith.constant 0 : i32
    return %c0_i32, %c0_i32_0 : i32, i32
  }
  func.func @transform_9(%arg0: i32, %arg1: i32, %arg2: memref<2xi32, #tpu.memory_space<smem>>, %arg3: memref<2xi32, #tpu.memory_space<smem>>) -> (i32, i32) {
    %c0_i32 = arith.constant 0 : i32
    %c0_i32_0 = arith.constant 0 : i32
    %c0_i32_1 = arith.constant 0 : i32
    return %c0_i32, %c0_i32_0 : i32, i32
  }
  func.func @transform_10(%arg0: i32, %arg1: i32, %arg2: memref<2xi32, #tpu.memory_space<smem>>, %arg3: memref<2xi32, #tpu.memory_space<smem>>) -> (i32, i32) {
    %c0_i32 = arith.constant 0 : i32
    %c0_i32_0 = arith.constant 0 : i32
    %c0_i32_1 = arith.constant 0 : i32
    return %c0_i32, %c0_i32_0 : i32, i32
  }
  func.func @transform_11(%arg0: i32, %arg1: i32, %arg2: memref<2xi32, #tpu.memory_space<smem>>, %arg3: memref<2xi32, #tpu.memory_space<smem>>) -> (i32, i32) {
    %c0_i32 = arith.constant 0 : i32
    %c0_i32_0 = arith.constant 0 : i32
    %c0_i32_1 = arith.constant 0 : i32
    return %c0_i32, %c0_i32_0 : i32, i32
  }
  func.func @transform_12(%arg0: i32, %arg1: i32, %arg2: memref<2xi32, #tpu.memory_space<smem>>, %arg3: memref<2xi32, #tpu.memory_space<smem>>) -> (i32, i32) {
    %c0_i32 = arith.constant 0 : i32
    %c0_i32_0 = arith.constant 0 : i32
    return %arg0, %c0_i32 : i32, i32
  }
}

</mosaic_0001>

<llo_original>
// kernel: tpu_custom_call.1
$region0: #{tpu_custom_call.1}
  #allocation0 [shape = 'u32[]', space=smem, size = 0x4, offset = 0x4, fixed_abs, tag = 'smem constant byte address 0x4 - core index']
  #allocation1 [shape = 'u32[144,128]{1,0:T(1,128)}', space=vmem, size = 0x12000, scoped, tag = 'internal scratch']
  #allocation2 [shape = 'f32[256,128]{1,0:T(8,128)}', space=vmem, size = 0x20000, scoped, tag = 'scratch operand']
  #allocation3 [shape = 's32[1]{0}', space=sflag, size = 0x4, scoped, tag = 'scoped memory for tpu_custom_call.1']
  #allocation4 [shape = 'u8[512]{0}', space=smem, size = 0x200, scoped, tag = 'prefetched SMEM operand 0']
  #allocation5 [shape = 'u8[512]{0}', space=smem, size = 0x200, scoped, tag = 'prefetched SMEM operand 1']
  %s0 = inlined_call_operand.hbm [shape: s32[2], index: 0, kind: input, shape index: {}]
  %s1 = inlined_call_operand.vmem [shape: s32[2], index: 1, kind: input, shape index: {}]
  %s2 = inlined_call_operand.hbm [shape: s32[1,1024], index: 2, kind: input, shape index: {}]
  %s3 = inlined_call_operand.hbm [shape: f32[512,128], index: 3, kind: input, shape index: {}]
  %s4 = inlined_call_operand.hbm [shape: bf16[1024,128], index: 4, kind: input, shape index: {}]
  %s5 = inlined_call_operand.hbm [shape: f32[128,128], index: 5, kind: input, shape index: {}]
  %s6 = inlined_call_operand.hbm [shape: f32[128,128], index: 6, kind: input, shape index: {}]
  %s7 = inlined_call_operand.vmem [shape: f32[1,128], index: 7, kind: input, shape index: {}]
  %s8 = inlined_call_operand.hbm [shape: f32[128,128], index: 8, kind: input, shape index: {}]
  %s9 = inlined_call_operand.vmem [shape: f32[1,128], index: 9, kind: input, shape index: {}]
  %s10 = inlined_call_operand.hbm [shape: f32[128,128], index: 10, kind: input, shape index: {}]
  %s11 = inlined_call_operand.vmem [shape: f32[1,128], index: 11, kind: input, shape index: {}]
  %s12 = inlined_call_operand.vmem [shape: f32[1,128], index: 12, kind: input, shape index: {}]
  %s13 = inlined_call_operand.vmem [shape: f32[1,128], index: 13, kind: input, shape index: {}]
  %s14 = inlined_call_operand.hbm [shape: f32[512,128], index: 14, kind: output, shape index: {}]
  %s15 = sld [smem:[#allocation0]]
  $region121: #{tpu_custom_call.1} parent=0
    _
  %s17 = ssub.s32 1, %s15
  %s18 = scalar_select 0, %s17, %s15
  %20 = dma.hbm_to_smem %s0, 16, [#allocation4], [#allocation3]
  %s21 = sshll.u32 %s1, 4
  %s22 = int_to_ptr.vmem [resolvable:$true] %s21
  %24 = dma.vmem_to_smem %s22, 16, [#allocation5], [#allocation3]
  %25 = dma.done [#allocation3], 32
  %26 = sfence
  $region1: #{tpu_custom_call.1} parent=0
    #allocation6 [shape = 'u8[8192]{0}', space=vmem, size = 0x2000, scoped, tag = 'input window, operand 2']
    #allocation7 [shape = 's32[2]{0}', space=sflag, size = 0x8, scoped, tag = 'scoped memory for tpu_custom_call.1']
    #allocation8 [shape = 's32[2]{0}', space=sflag, size = 0x8, scoped, tag = 'scoped memory for tpu_custom_call.1']
    #allocation9 [shape = 'u8[262144]{0}', space=vmem, size = 0x40000, scoped, tag = 'input window, operand 3']
    #allocation10 [shape = 's32[2]{0}', space=sflag, size = 0x8, scoped, tag = 'scoped memory for tpu_custom_call.1']
    #allocation11 [shape = 'u8[524288]{0}', space=vmem, size = 0x80000, scoped, tag = 'input window, operand 4']
    #allocation12 [shape = 'u8[65536]{0}', space=vmem, size = 0x10000, scoped, tag = 'input window, operand 5, single buffered']
    #allocation13 [shape = 's32[1]{0}', space=sflag, size = 0x4, scoped, tag = 'scoped memory for tpu_custom_call.1']
    #allocation14 [shape = 'u8[65536]{0}', space=vmem, size = 0x10000, scoped, tag = 'input window, operand 6, single buffered']
    #allocation15 [shape = 'u8[65536]{0}', space=vmem, size = 0x10000, scoped, tag = 'input window, operand 8, single buffered']
    #allocation16 [shape = 's32[1]{0}', space=sflag, size = 0x4, scoped, tag = 'scoped memory for tpu_custom_call.1']
    #allocation17 [shape = 'u8[65536]{0}', space=vmem, size = 0x10000, scoped, tag = 'input window, operand 10, single buffered']
    #allocation18 [shape = 'u8[262144]{0}', space=vmem, size = 0x40000, scoped, tag = 'output window, operand 0']
    %27 = vsyncpa [#allocation7], 0
    %s28 = scalar_lea.sflag [#allocation7], 1
    %29 = vsyncpa %s28, 0
    %30 = vsyncpa [#allocation10], 0
    %s31 = scalar_lea.sflag [#allocation10], 1
    %32 = vsyncpa %s31, 0
    %33 = vsyncpa [#allocation13], 0
    %34 = vsyncpa [#allocation16], 0
    %35 = vsyncpa [#allocation8], 0
    %s36 = scalar_lea.sflag [#allocation8], 1
    %37 = vsyncpa %s36, 0
    loop: start=0, step=1, limit=4
    $region2: #{tpu_custom_call.1} parent=1 // loop_pre_header
      _
    $region3: #{tpu_custom_call.1} parent=1 // loop_header
      %s39 = sphi 0, %s43
      %p40 = scmp.ge.s32.totalorder %s39, 4
      %s46 = sphi 0, %s58
      %s47 = sphi 0, %s54
      %s48 = sphi 0, %s46
      %s49 = sphi 0, %s47
      %s50 = sphi 0, %s48
      %s51 = sphi 0, %s49
      %s65 = sphi 0, %s67
      %s68 = sphi 0, %s65
      %s69 = sphi 0, %s68
      %s85 = sphi 0, %s69
      %s91 = sphi 0, %s93
      %s94 = sphi 0, %s91
      %s95 = sphi 0, %s94
      %s111 = sphi 0, %s95
      %s121 = sphi 0, %s123
      %s124 = sphi 0, %s121
      %s125 = sphi 0, %s124
      %s141 = sphi 0, %s125
      %s145 = sphi 0, %s145
      %s147 = sphi 0, %s145
      %s148 = sphi 0, %s147
      %s162 = sphi 0, %s148
      %s166 = sphi 0, %s166
      %s168 = sphi 0, %s166
      %s169 = sphi 0, %s168
      %s183 = sphi 0, %s169
      %s187 = sphi 0, %s187
      %s189 = sphi 0, %s187
      %s190 = sphi 0, %s189
      %s204 = sphi 0, %s190
      %s208 = sphi 0, %s208
      %s210 = sphi 0, %s208
      %s211 = sphi 0, %s210
      %s225 = sphi 0, %s211
      %s229 = sphi 0, %s229
      %s231 = sphi 0, %s229
      %s232 = sphi 0, %s231
      %s246 = sphi 0, %s232
      %s250 = sphi 0, %s250
      %s252 = sphi 0, %s250
      %s253 = sphi 0, %s252
      %s267 = sphi 0, %s253
      %s271 = sphi 0, %s271
      %s273 = sphi 0, %s271
      %s274 = sphi 0, %s273
      %s288 = sphi 0, %s274
      %s292 = sphi 0, %s292
      %s294 = sphi 0, %s292
      %s295 = sphi 0, %s294
      %s309 = sphi 0, %s295
      %s313 = sphi 0, %s313
      %s315 = sphi 0, %s313
      %s316 = sphi 0, %s315
      %s330 = sphi 0, %s316
      %s336 = sphi 0, %s338
      %s339 = sphi 0, %s336
      %s340 = sphi 0, %s339
      %s356 = sphi 0, %s340
    $region4: #{tpu_custom_call.1} parent=1 // loop_header_branch
      %42 = sbr.rel (%p40) target = $region8
    $region5: #{tpu_custom_call.1} parent=1 // loop_body
      %s44 = ssub.s32 %s39, 1
      %s45 = ssub.s32 %s39, 2
      %s52 = sadd.s32 1, %s47
      %p53 = scmp.ge.s32.totalorder %s52, 1
      %s54 = scalar_select %p53, 0, %s52
      %s55 = sadd.s32 1, %s46
      %s56 = scalar_select %p53, %s55, %s46
      %p57 = scmp.ge.s32.totalorder %s56, 2
      %s58 = scalar_select %p57, 0, %s56
      %s59 = sadd.s32 %s46, %s47
      %s60 = sld [smem:[#allocation4 + %s59]]
      %s61 = sadd.s32 %s58, %s54
      %s62 = sld [smem:[#allocation4 + %s61]]
      %s63 = ssub.s32 %s60, %s62
      %p64 = scmp.eq.s32.totalorder %s63, 0
      %s66 = sadd.s32 %s65, 1
      %s67 = scalar_select %p64, %s65, %s66
      %p70 = pneg %p64
      %p71 = scmp.eq.s32.totalorder %s39, 1
      %p72 = por %p70, %p71
      %p73 = scmp.ne.s32.totalorder %s65, %s68
      %p74 = scmp.eq.s32.totalorder %s39, 0
      %p75 = por %p73, %p74
      %p76 = scmp.ne.s32.totalorder %s65, %s68
      %p77 = scmp.eq.s32.totalorder %s44, 1
      %p78 = por %p76, %p77
      %p79 = scmp.ne.s32.totalorder %s68, %s69
      %p80 = scmp.eq.s32.totalorder %s44, 0
      %p81 = por %p79, %p80
      %p82 = scmp.ne.s32.totalorder %s68, %s69
      %p83 = scmp.eq.s32.totalorder %s45, 1
      %p84 = por %p82, %p83
      %p86 = scmp.ne.s32.totalorder %s69, %s85
      %p87 = scmp.eq.s32.totalorder %s45, 0
      %p88 = por %p86, %p87
      %s89 = ssub.s32 %s46, %s58
      %p90 = scmp.eq.s32.totalorder %s89, 0
      %s92 = sadd.s32 %s91, 1
      %s93 = scalar_select %p90, %s91, %s92
      %p96 = pneg %p90
      %p97 = scmp.eq.s32.totalorder %s39, 1
      %p98 = por %p96, %p97
      %p99 = scmp.ne.s32.totalorder %s91, %s94
      %p100 = scmp.eq.s32.totalorder %s39, 0
      %p101 = por %p99, %p100
      %p102 = scmp.ne.s32.totalorder %s91, %s94
      %p103 = scmp.eq.s32.totalorder %s44, 1
      %p104 = por %p102, %p103
      %p105 = scmp.ne.s32.totalorder %s94, %s95
      %p106 = scmp.eq.s32.totalorder %s44, 0
      %p107 = por %p105, %p106
      %p108 = scmp.ne.s32.totalorder %s94, %s95
      %p109 = scmp.eq.s32.totalorder %s45, 1
      %p110 = por %p108, %p109
      %p112 = scmp.ne.s32.totalorder %s95, %s111
      %p113 = scmp.eq.s32.totalorder %s45, 0
      %p114 = por %p112, %p113
      %s115 = sadd.s32 %s46, %s47
      %s116 = sld [smem:[#allocation4 + %s115]]
      %s117 = sadd.s32 %s58, %s54
      %s118 = sld [smem:[#allocation4 + %s117]]
      %s119 = ssub.s32 %s116, %s118
      %p120 = scmp.eq.s32.totalorder %s119, 0
      %s122 = sadd.s32 %s121, 1
      %s123 = scalar_select %p120, %s121, %s122
      %p126 = pneg %p120
      %p127 = scmp.eq.s32.totalorder %s39, 1
      %p128 = por %p126, %p127
      %p129 = scmp.ne.s32.totalorder %s121, %s124
      %p130 = scmp.eq.s32.totalorder %s39, 0
      %p131 = por %p129, %p130
      %p132 = scmp.ne.s32.totalorder %s121, %s124
      %p133 = scmp.eq.s32.totalorder %s44, 1
      %p134 = por %p132, %p133
      %p135 = scmp.ne.s32.totalorder %s124, %s125
      %p136 = scmp.eq.s32.totalorder %s44, 0
      %p137 = por %p135, %p136
      %p138 = scmp.ne.s32.totalorder %s124, %s125
      %p139 = scmp.eq.s32.totalorder %s45, 1
      %p140 = por %p138, %p139
      %p142 = scmp.ne.s32.totalorder %s125, %s141
      %p143 = scmp.eq.s32.totalorder %s45, 0
      %p144 = por %p142, %p143
      %s146 = sadd.s32 %s145, 1
      %p149 = scmp.eq.s32.totalorder %s39, 1
      %p150 = scmp.ne.s32.totalorder %s145, %s147
      %p151 = scmp.eq.s32.totalorder %s39, 0
      %p152 = por %p150, %p151
      %p153 = scmp.ne.s32.totalorder %s145, %s147
      %p154 = scmp.eq.s32.totalorder %s44, 1
      %p155 = por %p153, %p154
      %p156 = scmp.ne.s32.totalorder %s147, %s148
      %p157 = scmp.eq.s32.totalorder %s44, 0
      %p158 = por %p156, %p157
      %p159 = scmp.ne.s32.totalorder %s147, %s148
      %p160 = scmp.eq.s32.totalorder %s45, 1
      %p161 = por %p159, %p160
      %p163 = scmp.ne.s32.totalorder %s148, %s162
      %p164 = scmp.eq.s32.totalorder %s45, 0
      %p165 = por %p163, %p164
      %s167 = sadd.s32 %s166, 1
      %p170 = scmp.eq.s32.totalorder %s39, 1
      %p171 = scmp.ne.s32.totalorder %s166, %s168
      %p172 = scmp.eq.s32.totalorder %s39, 0
      %p173 = por %p171, %p172
      %p174 = scmp.ne.s32.totalorder %s166, %s168
      %p175 = scmp.eq.s32.totalorder %s44, 1
      %p176 = por %p174, %p175
      %p177 = scmp.ne.s32.totalorder %s168, %s169
      %p178 = scmp.eq.s32.totalorder %s44, 0
      %p179 = por %p177, %p178
      %p180 = scmp.ne.s32.totalorder %s168, %s169
      %p181 = scmp.eq.s32.totalorder %s45, 1
      %p182 = por %p180, %p181
      %p184 = scmp.ne.s32.totalorder %s169, %s183
      %p185 = scmp.eq.s32.totalorder %s45, 0
      %p186 = por %p184, %p185
      %s188 = sadd.s32 %s187, 1
      %p191 = scmp.eq.s32.totalorder %s39, 1
      %p192 = scmp.ne.s32.totalorder %s187, %s189
      %p193 = scmp.eq.s32.totalorder %s39, 0
      %p194 = por %p192, %p193
      %p195 = scmp.ne.s32.totalorder %s187, %s189
      %p196 = scmp.eq.s32.totalorder %s44, 1
      %p197 = por %p195, %p196
      %p198 = scmp.ne.s32.totalorder %s189, %s190
      %p199 = scmp.eq.s32.totalorder %s44, 0
      %p200 = por %p198, %p199
      %p201 = scmp.ne.s32.totalorder %s189, %s190
      %p202 = scmp.eq.s32.totalorder %s45, 1
      %p203 = por %p201, %p202
      %p205 = scmp.ne.s32.totalorder %s190, %s204
      %p206 = scmp.eq.s32.totalorder %s45, 0
      %p207 = por %p205, %p206
      %s209 = sadd.s32 %s208, 1
      %p212 = scmp.eq.s32.totalorder %s39, 1
      %p213 = scmp.ne.s32.totalorder %s208, %s210
      %p214 = scmp.eq.s32.totalorder %s39, 0
      %p215 = por %p213, %p214
      %p216 = scmp.ne.s32.totalorder %s208, %s210
      %p217 = scmp.eq.s32.totalorder %s44, 1
      %p218 = por %p216, %p217
      %p219 = scmp.ne.s32.totalorder %s210, %s211
      %p220 = scmp.eq.s32.totalorder %s44, 0
      %p221 = por %p219, %p220
      %p222 = scmp.ne.s32.totalorder %s210, %s211
      %p223 = scmp.eq.s32.totalorder %s45, 1
      %p224 = por %p222, %p223
      %p226 = scmp.ne.s32.totalorder %s211, %s225
      %p227 = scmp.eq.s32.totalorder %s45, 0
      %p228 = por %p226, %p227
      %s230 = sadd.s32 %s229, 1
      %p233 = scmp.eq.s32.totalorder %s39, 1
      %p234 = scmp.ne.s32.totalorder %s229, %s231
      %p235 = scmp.eq.s32.totalorder %s39, 0
      %p236 = por %p234, %p235
      %p237 = scmp.ne.s32.totalorder %s229, %s231
      %p238 = scmp.eq.s32.totalorder %s44, 1
      %p239 = por %p237, %p238
      %p240 = scmp.ne.s32.totalorder %s231, %s232
      %p241 = scmp.eq.s32.totalorder %s44, 0
      %p242 = por %p240, %p241
      %p243 = scmp.ne.s32.totalorder %s231, %s232
      %p244 = scmp.eq.s32.totalorder %s45, 1
      %p245 = por %p243, %p244
      %p247 = scmp.ne.s32.totalorder %s232, %s246
      %p248 = scmp.eq.s32.totalorder %s45, 0
      %p249 = por %p247, %p248
      %s251 = sadd.s32 %s250, 1
      %p254 = scmp.eq.s32.totalorder %s39, 1
      %p255 = scmp.ne.s32.totalorder %s250, %s252
      %p256 = scmp.eq.s32.totalorder %s39, 0
      %p257 = por %p255, %p256
      %p258 = scmp.ne.s32.totalorder %s250, %s252
      %p259 = scmp.eq.s32.totalorder %s44, 1
      %p260 = por %p258, %p259
      %p261 = scmp.ne.s32.totalorder %s252, %s253
      %p262 = scmp.eq.s32.totalorder %s44, 0
      %p263 = por %p261, %p262
      %p264 = scmp.ne.s32.totalorder %s252, %s253
      %p265 = scmp.eq.s32.totalorder %s45, 1
      %p266 = por %p264, %p265
      %p268 = scmp.ne.s32.totalorder %s253, %s267
      %p269 = scmp.eq.s32.totalorder %s45, 0
      %p270 = por %p268, %p269
      %s272 = sadd.s32 %s271, 1
      %p275 = scmp.eq.s32.totalorder %s39, 1
      %p276 = scmp.ne.s32.totalorder %s271, %s273
      %p277 = scmp.eq.s32.totalorder %s39, 0
      %p278 = por %p276, %p277
      %p279 = scmp.ne.s32.totalorder %s271, %s273
      %p280 = scmp.eq.s32.totalorder %s44, 1
      %p281 = por %p279, %p280
      %p282 = scmp.ne.s32.totalorder %s273, %s274
      %p283 = scmp.eq.s32.totalorder %s44, 0
      %p284 = por %p282, %p283
      %p285 = scmp.ne.s32.totalorder %s273, %s274
      %p286 = scmp.eq.s32.totalorder %s45, 1
      %p287 = por %p285, %p286
      %p289 = scmp.ne.s32.totalorder %s274, %s288
      %p290 = scmp.eq.s32.totalorder %s45, 0
      %p291 = por %p289, %p290
      %s293 = sadd.s32 %s292, 1
      %p296 = scmp.eq.s32.totalorder %s39, 1
      %p297 = scmp.ne.s32.totalorder %s292, %s294
      %p298 = scmp.eq.s32.totalorder %s39, 0
      %p299 = por %p297, %p298
      %p300 = scmp.ne.s32.totalorder %s292, %s294
      %p301 = scmp.eq.s32.totalorder %s44, 1
      %p302 = por %p300, %p301
      %p303 = scmp.ne.s32.totalorder %s294, %s295
      %p304 = scmp.eq.s32.totalorder %s44, 0
      %p305 = por %p303, %p304
      %p306 = scmp.ne.s32.totalorder %s294, %s295
      %p307 = scmp.eq.s32.totalorder %s45, 1
      %p308 = por %p306, %p307
      %p310 = scmp.ne.s32.totalorder %s295, %s309
      %p311 = scmp.eq.s32.totalorder %s45, 0
      %p312 = por %p310, %p311
      %s314 = sadd.s32 %s313, 1
      %p317 = scmp.eq.s32.totalorder %s39, 1
      %p318 = scmp.ne.s32.totalorder %s313, %s315
      %p319 = scmp.eq.s32.totalorder %s39, 0
      %p320 = por %p318, %p319
      %p321 = scmp.ne.s32.totalorder %s313, %s315
      %p322 = scmp.eq.s32.totalorder %s44, 1
      %p323 = por %p321, %p322
      %p324 = scmp.ne.s32.totalorder %s315, %s316
      %p325 = scmp.eq.s32.totalorder %s44, 0
      %p326 = por %p324, %p325
      %p327 = scmp.ne.s32.totalorder %s315, %s316
      %p328 = scmp.eq.s32.totalorder %s45, 1
      %p329 = por %p327, %p328
      %p331 = scmp.ne.s32.totalorder %s316, %s330
      %p332 = scmp.eq.s32.totalorder %s45, 0
      %p333 = por %p331, %p332
      %s334 = ssub.s32 %s46, %s58
      %p335 = scmp.eq.s32.totalorder %s334, 0
      %s337 = sadd.s32 %s336, 1
      %s338 = scalar_select %p335, %s336, %s337
      %p341 = pneg %p335
      %p342 = scmp.eq.s32.totalorder %s39, 1
      %p343 = por %p341, %p342
      %p344 = scmp.ne.s32.totalorder %s336, %s339
      %p345 = scmp.eq.s32.totalorder %s39, 0
      %p346 = por %p344, %p345
      %p347 = scmp.ne.s32.totalorder %s336, %s339
      %p348 = scmp.eq.s32.totalorder %s44, 1
      %p349 = por %p347, %p348
      %p350 = scmp.ne.s32.totalorder %s339, %s340
      %p351 = scmp.eq.s32.totalorder %s44, 0
      %p352 = por %p350, %p351
      %p353 = scmp.ne.s32.totalorder %s339, %s340
      %p354 = scmp.eq.s32.totalorder %s45, 1
      %p355 = por %p353, %p354
      %p357 = scmp.ne.s32.totalorder %s340, %s356
      %p358 = scmp.eq.s32.totalorder %s45, 0
      %p359 = por %p357, %p358
      %p360 = scmp.le.s32.totalorder 1, %s39
      %p361 = scmp.lt.s32.totalorder %s39, 3
      %p362 = pnand %p360, %p361
      %p363 = pneg %p362
      // Predicated region
      $region9: #{tpu_custom_call.1} parent=5 // pred_check
        _
      $region10: #{tpu_custom_call.1} parent=5 // pred_check_branch
        %365 = sbr.rel (%p362) target = $region12
      $region11: #{tpu_custom_call.1} parent=5 // pred_region
        %s366 = ssub.s32 %s39, 1
        // Predicated region
        $region13: #{tpu_custom_call.1} parent=11 // pred_check
          %p367 = pneg %p158
        $region14: #{tpu_custom_call.1} parent=11 // pred_check_branch
          %369 = sbr.rel (%p367) target = $region16
        $region15: #{tpu_custom_call.1} parent=11 // pred_region
          %s371 = ssub.s32 2048, 2048
          %372 = vsyncadd [#allocation13], %s371
          %s373 = sshll.u32 [#allocation12], 4
          %s374 = int_to_ptr.vmem [resolvable:$true] %s373
          %379 = dma.hbm_to_vmem [thread:$0]  %s5, 2048, %s374, [#allocation13], 128, 128, 8
        $region16: #{tpu_custom_call.1} parent=11 // pred_fallthru
          _
        // Predicated region
        $region17: #{tpu_custom_call.1} parent=11 // pred_check
          %p380 = pneg %p179
        $region18: #{tpu_custom_call.1} parent=11 // pred_check_branch
          %382 = sbr.rel (%p380) target = $region20
        $region19: #{tpu_custom_call.1} parent=11 // pred_region
          %s384 = ssub.s32 2048, 2048
          %385 = vsyncadd [#allocation13], %s384
          %s386 = sshll.u32 [#allocation14], 4
          %s387 = int_to_ptr.vmem [resolvable:$true] %s386
          %392 = dma.hbm_to_vmem [thread:$0]  %s6, 2048, %s387, [#allocation13], 128, 128, 8
        $region20: #{tpu_custom_call.1} parent=11 // pred_fallthru
          _
        // Predicated region
        $region21: #{tpu_custom_call.1} parent=11 // pred_check
          %p393 = pneg %p200
        $region22: #{tpu_custom_call.1} parent=11 // pred_check_branch
          %395 = sbr.rel (%p393) target = $region24
        $region23: #{tpu_custom_call.1} parent=11 // pred_region
          _
        $region24: #{tpu_custom_call.1} parent=11 // pred_fallthru
          _
        // Predicated region
        $region25: #{tpu_custom_call.1} parent=11 // pred_check
          %p396 = pneg %p221
        $region26: #{tpu_custom_call.1} parent=11 // pred_check_branch
          %398 = sbr.rel (%p396) target = $region28
        $region27: #{tpu_custom_call.1} parent=11 // pred_region
          %s400 = ssub.s32 2048, 2048
          %401 = vsyncadd [#allocation16], %s400
          %s402 = sshll.u32 [#allocation15], 4
          %s403 = int_to_ptr.vmem [resolvable:$true] %s402
          %408 = dma.hbm_to_vmem [thread:$0]  %s8, 2048, %s403, [#allocation16], 128, 128, 8
        $region28: #{tpu_custom_call.1} parent=11 // pred_fallthru
          _
        // Predicated region
        $region29: #{tpu_custom_call.1} parent=11 // pred_check
          %p409 = pneg %p242
        $region30: #{tpu_custom_call.1} parent=11 // pred_check_branch
          %411 = sbr.rel (%p409) target = $region32
        $region31: #{tpu_custom_call.1} parent=11 // pred_region
          _
        $region32: #{tpu_custom_call.1} parent=11 // pred_fallthru
          _
        // Predicated region
        $region33: #{tpu_custom_call.1} parent=11 // pred_check
          %p412 = pneg %p263
        $region34: #{tpu_custom_call.1} parent=11 // pred_check_branch
          %414 = sbr.rel (%p412) target = $region36
        $region35: #{tpu_custom_call.1} parent=11 // pred_region
          %s416 = ssub.s32 2048, 2048
          %417 = vsyncadd [#allocation16], %s416
          %s418 = sshll.u32 [#allocation17], 4
          %s419 = int_to_ptr.vmem [resolvable:$true] %s418
          %424 = dma.hbm_to_vmem [thread:$0]  %s10, 2048, %s419, [#allocation16], 128, 128, 8
        $region36: #{tpu_custom_call.1} parent=11 // pred_fallthru
          _
        // Predicated region
        $region37: #{tpu_custom_call.1} parent=11 // pred_check
          %p425 = pneg %p284
        $region38: #{tpu_custom_call.1} parent=11 // pred_check_branch
          %427 = sbr.rel (%p425) target = $region40
        $region39: #{tpu_custom_call.1} parent=11 // pred_region
          _
        $region40: #{tpu_custom_call.1} parent=11 // pred_fallthru
          _
        // Predicated region
        $region41: #{tpu_custom_call.1} parent=11 // pred_check
          %p428 = pneg %p305
        $region42: #{tpu_custom_call.1} parent=11 // pred_check_branch
          %430 = sbr.rel (%p428) target = $region44
        $region43: #{tpu_custom_call.1} parent=11 // pred_region
          _
        $region44: #{tpu_custom_call.1} parent=11 // pred_fallthru
          _
        // Predicated region
        $region45: #{tpu_custom_call.1} parent=11 // pred_check
          %p431 = pneg %p326
        $region46: #{tpu_custom_call.1} parent=11 // pred_check_branch
          %433 = sbr.rel (%p431) target = $region48
        $region47: #{tpu_custom_call.1} parent=11 // pred_region
          _
        $region48: #{tpu_custom_call.1} parent=11 // pred_fallthru
          _
      $region12: #{tpu_custom_call.1} parent=5 // pred_fallthru
        _
      %p434 = scmp.lt.s32.totalorder %s39, 2
      // Predicated region
      $region49: #{tpu_custom_call.1} parent=5 // pred_check
        %p435 = pneg %p434
      $region50: #{tpu_custom_call.1} parent=5 // pred_check_branch
        %437 = sbr.rel (%p435) target = $region52
      $region51: #{tpu_custom_call.1} parent=5 // pred_region
        // Predicated region
        $region53: #{tpu_custom_call.1} parent=51 // pred_check
          %p438 = pneg %p75
        $region54: #{tpu_custom_call.1} parent=51 // pred_check_branch
          %440 = sbr.rel (%p438) target = $region56
        $region55: #{tpu_custom_call.1} parent=51 // pred_region
          %s441 = sand.u32 %s65, 1
          %s442 = scalar_lea.sflag [#allocation7], %s441
          %s443 = sand.u32 %s65, 1
          %s444 = smul.addr %s443, 8
          %s445 = scalar_lea.vmem [#allocation6], %s444
          %s446 = sadd.s32 %s46, %s47
          %s447 = sld [smem:[#allocation4 + %s446]]
          %s448 = smul.u32 8, %s447
          %s450 = ssub.s32 128, 128
          %451 = vsyncadd %s442, %s450
          %s452 = smul.addr %s448, 16
          %s453 = scalar_lea.hbm %s2, %s452
          %s455 = sshll.u32 %s445, 4
          %s456 = int_to_ptr.vmem [resolvable:$true] %s455
          %458 = dma.hbm_to_vmem [thread:$0]  %s453, 128, %s456, %s442
        $region56: #{tpu_custom_call.1} parent=51 // pred_fallthru
          _
        // Predicated region
        $region57: #{tpu_custom_call.1} parent=51 // pred_check
          %p459 = pneg %p101
        $region58: #{tpu_custom_call.1} parent=51 // pred_check_branch
          %461 = sbr.rel (%p459) target = $region60
        $region59: #{tpu_custom_call.1} parent=51 // pred_region
          %s462 = sand.u32 %s39, 1
          %s463 = scalar_lea.sflag [#allocation10], %s462
          %s464 = sand.u32 %s91, 1
          %s465 = smul.addr %s464, 256
          %s466 = scalar_lea.vmem [#allocation9], %s465
          %s467 = smul.u32 32, %s46
          %s469 = ssub.s32 4096, 4096
          %470 = vsyncadd %s463, %s469
          %s471 = smul.addr %s467, 128
          %s472 = scalar_lea.hbm %s3, %s471
          %s473 = sshll.u32 %s466, 4
          %s474 = int_to_ptr.vmem [resolvable:$true] %s473
          %479 = dma.hbm_to_vmem [thread:$0]  %s472, 4096, %s474, %s463, 128, 128, 8
        $region60: #{tpu_custom_call.1} parent=51 // pred_fallthru
          _
        // Predicated region
        $region61: #{tpu_custom_call.1} parent=51 // pred_check
          %p480 = pneg %p131
        $region62: #{tpu_custom_call.1} parent=51 // pred_check_branch
          %482 = sbr.rel (%p480) target = $region64
        $region63: #{tpu_custom_call.1} parent=51 // pred_region
          %s483 = sand.u32 %s39, 1
          %s484 = scalar_lea.sflag [#allocation10], %s483
          %s485 = sand.u32 %s121, 1
          %s486 = smul.addr %s485, 512
          %s487 = scalar_lea.vmem [#allocation11], %s486
          %s488 = sadd.s32 %s46, %s47
          %s489 = sld [smem:[#allocation4 + %s488]]
          %s490 = smul.u32 128, %s489
          %s492 = ssub.s32 8192, 8192
          %493 = vsyncadd %s484, %s492
          %s494 = smul.addr %s490, 64
          %s495 = scalar_lea.hbm %s4, %s494
          %s496 = sshll.u32 %s487, 4
          %s497 = int_to_ptr.vmem [resolvable:$true] %s496
          %502 = dma.hbm_to_vmem [thread:$0]  %s495, 8192, %s497, %s484, 64, 64, 4
        $region64: #{tpu_custom_call.1} parent=51 // pred_fallthru
          _
      $region52: #{tpu_custom_call.1} parent=5 // pred_fallthru
        _
      %p503 = scmp.le.s32.totalorder 1, %s39
      %p504 = scmp.lt.s32.totalorder %s39, 3
      %p505 = pnand %p503, %p504
      %p506 = pneg %p505
      // Predicated region
      $region65: #{tpu_custom_call.1} parent=5 // pred_check
        _
      $region66: #{tpu_custom_call.1} parent=5 // pred_check_branch
        %508 = sbr.rel (%p505) target = $region68
      $region67: #{tpu_custom_call.1} parent=5 // pred_region
        %s509 = ssub.s32 %s39, 1
        %s510 = sand.u32 %s68, 1
        %s511 = scalar_lea.sflag [#allocation7], %s510
        %s512 = sand.u32 %s68, 1
        %s513 = smul.addr %s512, 8
        %s514 = scalar_lea.vmem [#allocation6], %s513
        // Predicated region
        $region69: #{tpu_custom_call.1} parent=67 // pred_check
          %p515 = pneg %p81
        $region70: #{tpu_custom_call.1} parent=67 // pred_check_branch
          %517 = sbr.rel (%p515) target = $region72
        $region71: #{tpu_custom_call.1} parent=67 // pred_region
          %518 = dma.done %s511, 128
        $region72: #{tpu_custom_call.1} parent=67 // pred_fallthru
          _
        %s519 = sand.u32 %s44, 1
        %s520 = scalar_lea.sflag [#allocation10], %s519
        %s521 = sand.u32 %s94, 1
        %s522 = smul.addr %s521, 256
        %s523 = scalar_lea.vmem [#allocation9], %s522
        // Predicated region
        $region73: #{tpu_custom_call.1} parent=67 // pred_check
          %p524 = pneg %p107
        $region74: #{tpu_custom_call.1} parent=67 // pred_check_branch
          %526 = sbr.rel (%p524) target = $region76
        $region75: #{tpu_custom_call.1} parent=67 // pred_region
          %527 = dma.done %s520, 4096
        $region76: #{tpu_custom_call.1} parent=67 // pred_fallthru
          _
        %s528 = sand.u32 %s44, 1
        %s529 = scalar_lea.sflag [#allocation10], %s528
        %s530 = sand.u32 %s124, 1
        %s531 = smul.addr %s530, 512
        %s532 = scalar_lea.vmem [#allocation11], %s531
        // Predicated region
        $region77: #{tpu_custom_call.1} parent=67 // pred_check
          %p533 = pneg %p137
        $region78: #{tpu_custom_call.1} parent=67 // pred_check_branch
          %535 = sbr.rel (%p533) target = $region80
        $region79: #{tpu_custom_call.1} parent=67 // pred_region
          %536 = dma.done %s529, 8192
        $region80: #{tpu_custom_call.1} parent=67 // pred_fallthru
          _
        // Predicated region
        $region81: #{tpu_custom_call.1} parent=67 // pred_check
          %p537 = pneg %p158
        $region82: #{tpu_custom_call.1} parent=67 // pred_check_branch
          %539 = sbr.rel (%p537) target = $region84
        $region83: #{tpu_custom_call.1} parent=67 // pred_region
          %540 = dma.done [#allocation13], 2048
        $region84: #{tpu_custom_call.1} parent=67 // pred_fallthru
          _
        // Predicated region
        $region85: #{tpu_custom_call.1} parent=67 // pred_check
          %p541 = pneg %p179
        $region86: #{tpu_custom_call.1} parent=67 // pred_check_branch
          %543 = sbr.rel (%p541) target = $region88
        $region87: #{tpu_custom_call.1} parent=67 // pred_region
          %544 = dma.done [#allocation13], 2048
        $region88: #{tpu_custom_call.1} parent=67 // pred_fallthru
          _
        // Predicated region
        $region89: #{tpu_custom_call.1} parent=67 // pred_check
          %p545 = pneg %p221
        $region90: #{tpu_custom_call.1} parent=67 // pred_check_branch
          %547 = sbr.rel (%p545) target = $region92
        $region91: #{tpu_custom_call.1} parent=67 // pred_region
          %548 = dma.done [#allocation16], 2048
        $region92: #{tpu_custom_call.1} parent=67 // pred_fallthru
          _
        // Predicated region
        $region93: #{tpu_custom_call.1} parent=67 // pred_check
          %p549 = pneg %p263
        $region94: #{tpu_custom_call.1} parent=67 // pred_check_branch
          %551 = sbr.rel (%p549) target = $region96
        $region95: #{tpu_custom_call.1} parent=67 // pred_region
          %552 = dma.done [#allocation16], 2048
        $region96: #{tpu_custom_call.1} parent=67 // pred_fallthru
          _
        %s553 = sand.u32 %s68, 1
        %s554 = scalar_lea.sflag [#allocation7], %s553
        %s555 = sand.u32 %s68, 1
        %s556 = smul.addr %s555, 8
        %s557 = scalar_lea.vmem [#allocation6], %s556
        %p558 = pneg %p81
        %p559 = pneg %p78
        %s560 = sand.u32 %s44, 1
        %s561 = scalar_lea.sflag [#allocation10], %s560
        %s562 = sand.u32 %s94, 1
        %s563 = smul.addr %s562, 256
        %s564 = scalar_lea.vmem [#allocation9], %s563
        %p565 = pneg %p107
        %p566 = pneg %p104
        %s567 = sand.u32 %s44, 1
        %s568 = scalar_lea.sflag [#allocation10], %s567
        %s569 = sand.u32 %s124, 1
        %s570 = smul.addr %s569, 512
        %s571 = scalar_lea.vmem [#allocation11], %s570
        %p572 = pneg %p137
        %p573 = pneg %p134
        %p574 = pneg %p158
        %p575 = pneg %p155
        %p576 = pneg %p179
        %p577 = pneg %p176
        %p578 = pneg %p200
        %p579 = pneg %p197
        %p580 = pneg %p221
        %p581 = pneg %p218
        %p582 = pneg %p242
        %p583 = pneg %p239
        %p584 = pneg %p263
        %p585 = pneg %p260
        %p586 = pneg %p284
        %p587 = pneg %p281
        %p588 = pneg %p305
        %p589 = pneg %p302
        %p590 = pneg %p326
        %p591 = pneg %p323
        %p592 = pneg %p352
        %p593 = pneg %p349
        %s594 = sand.u32 %s339, 1
        %s595 = scalar_lea.sflag [#allocation8], %s594
        %s596 = sand.u32 %s339, 1
        %s597 = smul.addr %s596, 256
        %s598 = scalar_lea.vmem [#allocation18], %s597
        %s599 = sadd.s32 %s48, %s49
        %s600 = sld [smem:[#allocation4 + %s599]]
        %s601 = smul.u32 8, %s600
        %s602 = smul.u32 32, %s48
        %s603 = sadd.s32 %s48, %s49
        %s604 = sld [smem:[#allocation4 + %s603]]
        %s605 = smul.u32 128, %s604
        %s606 = smul.u32 32, %s48
        %p608 = scmp.eq.s32.totalorder %s49, 0
        // Predicated region
        $region97: #{tpu_custom_call.1} parent=67 // pred_check
          %p609 = pneg %p608
        $region98: #{tpu_custom_call.1} parent=67 // pred_check_branch
          %611 = sbr.rel (%p609) target = $region100
        $region99: #{tpu_custom_call.1} parent=67 // pred_region
          %612 = vst [vmem:[#allocation2] sm:$0xff] 0.0
          %613 = vst [vmem:[#allocation2 + $0x8] sm:$0xff] 0.0
          %614 = vst [vmem:[#allocation2 + $0x10] sm:$0xff] 0.0
          %615 = vst [vmem:[#allocation2 + $0x18] sm:$0xff] 0.0
          %616 = vst [vmem:[#allocation2 + $0x20] sm:$0xff] 0.0
          %617 = vst [vmem:[#allocation2 + $0x28] sm:$0xff] 0.0
          %618 = vst [vmem:[#allocation2 + $0x30] sm:$0xff] 0.0
          %619 = vst [vmem:[#allocation2 + $0x38] sm:$0xff] 0.0
          %620 = vst [vmem:[#allocation2 + $0x40] sm:$0xff] 0.0
          %621 = vst [vmem:[#allocation2 + $0x48] sm:$0xff] 0.0
          %622 = vst [vmem:[#allocation2 + $0x50] sm:$0xff] 0.0
          %623 = vst [vmem:[#allocation2 + $0x58] sm:$0xff] 0.0
          %624 = vst [vmem:[#allocation2 + $0x60] sm:$0xff] 0.0
          %625 = vst [vmem:[#allocation2 + $0x68] sm:$0xff] 0.0
          %626 = vst [vmem:[#allocation2 + $0x70] sm:$0xff] 0.0
          %627 = vst [vmem:[#allocation2 + $0x78] sm:$0xff] 0.0
          %628 = vst [vmem:[#allocation2 + $0x80] sm:$0xff] 0.0
          %629 = vst [vmem:[#allocation2 + $0x88] sm:$0xff] 0.0
          %630 = vst [vmem:[#allocation2 + $0x90] sm:$0xff] 0.0
          %631 = vst [vmem:[#allocation2 + $0x98] sm:$0xff] 0.0
          %632 = vst [vmem:[#allocation2 + $0xa0] sm:$0xff] 0.0
          %633 = vst [vmem:[#allocation2 + $0xa8] sm:$0xff] 0.0
          %634 = vst [vmem:[#allocation2 + $0xb0] sm:$0xff] 0.0
          %635 = vst [vmem:[#allocation2 + $0xb8] sm:$0xff] 0.0
          %636 = vst [vmem:[#allocation2 + $0xc0] sm:$0xff] 0.0
          %637 = vst [vmem:[#allocation2 + $0xc8] sm:$0xff] 0.0
          %638 = vst [vmem:[#allocation2 + $0xd0] sm:$0xff] 0.0
          %639 = vst [vmem:[#allocation2 + $0xd8] sm:$0xff] 0.0
          %640 = vst [vmem:[#allocation2 + $0xe0] sm:$0xff] 0.0
          %641 = vst [vmem:[#allocation2 + $0xe8] sm:$0xff] 0.0
          %642 = vst [vmem:[#allocation2 + $0xf0] sm:$0xff] 0.0
          %643 = vst [vmem:[#allocation2 + $0xf8] sm:$0xff] 0.0
        $region100: #{tpu_custom_call.1} parent=67 // pred_fallthru
          _
        %s644 = sld [smem:[#allocation5 + %s48]]
        %p645 = scmp.lt.s32.totalorder %s49, %s644
        // Predicated region
        $region101: #{tpu_custom_call.1} parent=67 // pred_check
          %p646 = pneg %p645
        $region102: #{tpu_custom_call.1} parent=67 // pred_check_branch
          %648 = sbr.rel (%p646) target = $region104
        $region103: #{tpu_custom_call.1} parent=67 // pred_region
          %v649 = vld [vmem:[%s514] sm:$0xff]
          %s650 = smul.u32 %s48, 256
          %v651 = vstv %s650
          %v652 = vsub.s32 %v649, %v651
          %v653 = vlaneseq
          %v654 = vshrl.u32 %v653, 7
          %v655 = vadd.s32 %v654, 8
          %v656 = vadd.s32 %v654, 16
          %v657 = vadd.s32 %v654, 24
          %v658 = vadd.s32 %v654, 32
          %v659 = vadd.s32 %v654, 40
          %v660 = vadd.s32 %v654, 48
          %v661 = vadd.s32 %v654, 56
          %v662 = vadd.s32 %v654, 64
          %v663 = vadd.s32 %v654, 72
          %v664 = vadd.s32 %v654, 80
          %v665 = vadd.s32 %v654, 88
          %v666 = vadd.s32 %v654, 96
          %v667 = vadd.s32 %v654, 104
          %v668 = vadd.s32 %v654, 112
          %v669 = vadd.s32 %v654, 120
          %v670 = vadd.s32 %v654, 128
          %v671 = vadd.s32 %v654, 136
          %v672 = vadd.s32 %v654, 144
          %v673 = vadd.s32 %v654, 152
          %v674 = vadd.s32 %v654, 160
          %v675 = vadd.s32 %v654, 168
          %v676 = vadd.s32 %v654, 176
          %v677 = vadd.s32 %v654, 184
          %v678 = vadd.s32 %v654, 192
          %v679 = vadd.s32 %v654, 200
          %v680 = vadd.s32 %v654, 208
          %v681 = vadd.s32 %v654, 216
          %v682 = vadd.s32 %v654, 224
          %v683 = vadd.s32 %v654, 232
          %v684 = vadd.s32 %v654, 240
          %v685 = vadd.s32 %v654, 248
          %v686 = vlaneseq
          %v687 = vshrl.u32 %v686, 7
          %v688 = vsub.s32 0, %v687
          %v689 = vrot.slane %v652, %v688
          %v690 = vlaneseq
          %v691 = vshrl.u32 %v690, 7
          %v692 = vsub.s32 1, %v691
          %v693 = vrot.slane %v652, %v692
          %v694 = vlaneseq
          %v695 = vshrl.u32 %v694, 7
          %v696 = vsub.s32 2, %v695
          %v697 = vrot.slane %v652, %v696
          %v698 = vlaneseq
          %v699 = vshrl.u32 %v698, 7
          %v700 = vsub.s32 3, %v699
          %v701 = vrot.slane %v652, %v700
          %v702 = vlaneseq
          %v703 = vshrl.u32 %v702, 7
          %v704 = vsub.s32 4, %v703
          %v705 = vrot.slane %v652, %v704
          %v706 = vlaneseq
          %v707 = vshrl.u32 %v706, 7
          %v708 = vsub.s32 5, %v707
          %v709 = vrot.slane %v652, %v708
          %v710 = vlaneseq
          %v711 = vshrl.u32 %v710, 7
          %v712 = vsub.s32 6, %v711
          %v713 = vrot.slane %v652, %v712
          %v714 = vlaneseq
          %v715 = vshrl.u32 %v714, 7
          %v716 = vsub.s32 7, %v715
          %v717 = vrot.slane %v652, %v716
          %vm718 = vcmp.eq.s32.totalorder %v654, %v689
          %vm719 = vcmp.eq.s32.totalorder %v654, %v693
          %vm720 = vcmp.eq.s32.totalorder %v654, %v697
          %vm721 = vcmp.eq.s32.totalorder %v654, %v701
          %vm722 = vcmp.eq.s32.totalorder %v654, %v705
          %vm723 = vcmp.eq.s32.totalorder %v654, %v709
          %vm724 = vcmp.eq.s32.totalorder %v654, %v713
          %vm725 = vcmp.eq.s32.totalorder %v654, %v717
          %vm726 = vcmp.eq.s32.totalorder %v655, %v689
          %vm727 = vcmp.eq.s32.totalorder %v655, %v693
          %vm728 = vcmp.eq.s32.totalorder %v655, %v697
          %vm729 = vcmp.eq.s32.totalorder %v655, %v701
          %vm730 = vcmp.eq.s32.totalorder %v655, %v705
          %vm731 = vcmp.eq.s32.totalorder %v655, %v709
          %vm732 = vcmp.eq.s32.totalorder %v655, %v713
          %vm733 = vcmp.eq.s32.totalorder %v655, %v717
          %vm734 = vcmp.eq.s32.totalorder %v656, %v689
          %vm735 = vcmp.eq.s32.totalorder %v656, %v693
          %vm736 = vcmp.eq.s32.totalorder %v656, %v697
          %vm737 = vcmp.eq.s32.totalorder %v656, %v701
          %vm738 = vcmp.eq.s32.totalorder %v656, %v705
          %vm739 = vcmp.eq.s32.totalorder %v656, %v709
          %vm740 = vcmp.eq.s32.totalorder %v656, %v713
          %vm741 = vcmp.eq.s32.totalorder %v656, %v717
          %vm742 = vcmp.eq.s32.totalorder %v657, %v689
          %vm743 = vcmp.eq.s32.totalorder %v657, %v693
          %vm744 = vcmp.eq.s32.totalorder %v657, %v697
          %vm745 = vcmp.eq.s32.totalorder %v657, %v701
          %vm746 = vcmp.eq.s32.totalorder %v657, %v705
          %vm747 = vcmp.eq.s32.totalorder %v657, %v709
          %vm748 = vcmp.eq.s32.totalorder %v657, %v713
          %vm749 = vcmp.eq.s32.totalorder %v657, %v717
          %vm750 = vcmp.eq.s32.totalorder %v658, %v689
          %vm751 = vcmp.eq.s32.totalorder %v658, %v693
          %vm752 = vcmp.eq.s32.totalorder %v658, %v697
          %vm753 = vcmp.eq.s32.totalorder %v658, %v701
          %vm754 = vcmp.eq.s32.totalorder %v658, %v705
          %vm755 = vcmp.eq.s32.totalorder %v658, %v709
          %vm756 = vcmp.eq.s32.totalorder %v658, %v713
          %vm757 = vcmp.eq.s32.totalorder %v658, %v717
          %vm758 = vcmp.eq.s32.totalorder %v659, %v689
          %vm759 = vcmp.eq.s32.totalorder %v659, %v693
          %vm760 = vcmp.eq.s32.totalorder %v659, %v697
          %vm761 = vcmp.eq.s32.totalorder %v659, %v701
          %vm762 = vcmp.eq.s32.totalorder %v659, %v705
          %vm763 = vcmp.eq.s32.totalorder %v659, %v709
          %vm764 = vcmp.eq.s32.totalorder %v659, %v713
          %vm765 = vcmp.eq.s32.totalorder %v659, %v717
          %vm766 = vcmp.eq.s32.totalorder %v660, %v689
          %vm767 = vcmp.eq.s32.totalorder %v660, %v693
          %vm768 = vcmp.eq.s32.totalorder %v660, %v697
          %vm769 = vcmp.eq.s32.totalorder %v660, %v701
          %vm770 = vcmp.eq.s32.totalorder %v660, %v705
          %vm771 = vcmp.eq.s32.totalorder %v660, %v709
          %vm772 = vcmp.eq.s32.totalorder %v660, %v713
          %vm773 = vcmp.eq.s32.totalorder %v660, %v717
          %vm774 = vcmp.eq.s32.totalorder %v661, %v689
          %vm775 = vcmp.eq.s32.totalorder %v661, %v693
          %vm776 = vcmp.eq.s32.totalorder %v661, %v697
          %vm777 = vcmp.eq.s32.totalorder %v661, %v701
          %vm778 = vcmp.eq.s32.totalorder %v661, %v705
          %vm779 = vcmp.eq.s32.totalorder %v661, %v709
          %vm780 = vcmp.eq.s32.totalorder %v661, %v713
          %vm781 = vcmp.eq.s32.totalorder %v661, %v717
          %vm782 = vcmp.eq.s32.totalorder %v662, %v689
          %vm783 = vcmp.eq.s32.totalorder %v662, %v693
          %vm784 = vcmp.eq.s32.totalorder %v662, %v697
          %vm785 = vcmp.eq.s32.totalorder %v662, %v701
          %vm786 = vcmp.eq.s32.totalorder %v662, %v705
          %vm787 = vcmp.eq.s32.totalorder %v662, %v709
          %vm788 = vcmp.eq.s32.totalorder %v662, %v713
          %vm789 = vcmp.eq.s32.totalorder %v662, %v717
          %vm790 = vcmp.eq.s32.totalorder %v663, %v689
          %vm791 = vcmp.eq.s32.totalorder %v663, %v693
          %vm792 = vcmp.eq.s32.totalorder %v663, %v697
          %vm793 = vcmp.eq.s32.totalorder %v663, %v701
          %vm794 = vcmp.eq.s32.totalorder %v663, %v705
          %vm795 = vcmp.eq.s32.totalorder %v663, %v709
          %vm796 = vcmp.eq.s32.totalorder %v663, %v713
          %vm797 = vcmp.eq.s32.totalorder %v663, %v717
          %vm798 = vcmp.eq.s32.totalorder %v664, %v689
          %vm799 = vcmp.eq.s32.totalorder %v664, %v693
          %vm800 = vcmp.eq.s32.totalorder %v664, %v697
          %vm801 = vcmp.eq.s32.totalorder %v664, %v701
          %vm802 = vcmp.eq.s32.totalorder %v664, %v705
          %vm803 = vcmp.eq.s32.totalorder %v664, %v709
          %vm804 = vcmp.eq.s32.totalorder %v664, %v713
          %vm805 = vcmp.eq.s32.totalorder %v664, %v717
          %vm806 = vcmp.eq.s32.totalorder %v665, %v689
          %vm807 = vcmp.eq.s32.totalorder %v665, %v693
          %vm808 = vcmp.eq.s32.totalorder %v665, %v697
          %vm809 = vcmp.eq.s32.totalorder %v665, %v701
          %vm810 = vcmp.eq.s32.totalorder %v665, %v705
          %vm811 = vcmp.eq.s32.totalorder %v665, %v709
          %vm812 = vcmp.eq.s32.totalorder %v665, %v713
          %vm813 = vcmp.eq.s32.totalorder %v665, %v717
          %vm814 = vcmp.eq.s32.totalorder %v666, %v689
          %vm815 = vcmp.eq.s32.totalorder %v666, %v693
          %vm816 = vcmp.eq.s32.totalorder %v666, %v697
          %vm817 = vcmp.eq.s32.totalorder %v666, %v701
          %vm818 = vcmp.eq.s32.totalorder %v666, %v705
          %vm819 = vcmp.eq.s32.totalorder %v666, %v709
          %vm820 = vcmp.eq.s32.totalorder %v666, %v713
          %vm821 = vcmp.eq.s32.totalorder %v666, %v717
          %vm822 = vcmp.eq.s32.totalorder %v667, %v689
          %vm823 = vcmp.eq.s32.totalorder %v667, %v693
          %vm824 = vcmp.eq.s32.totalorder %v667, %v697
          %vm825 = vcmp.eq.s32.totalorder %v667, %v701
          %vm826 = vcmp.eq.s32.totalorder %v667, %v705
          %vm827 = vcmp.eq.s32.totalorder %v667, %v709
          %vm828 = vcmp.eq.s32.totalorder %v667, %v713
          %vm829 = vcmp.eq.s32.totalorder %v667, %v717
          %vm830 = vcmp.eq.s32.totalorder %v668, %v689
          %vm831 = vcmp.eq.s32.totalorder %v668, %v693
          %vm832 = vcmp.eq.s32.totalorder %v668, %v697
          %vm833 = vcmp.eq.s32.totalorder %v668, %v701
          %vm834 = vcmp.eq.s32.totalorder %v668, %v705
          %vm835 = vcmp.eq.s32.totalorder %v668, %v709
          %vm836 = vcmp.eq.s32.totalorder %v668, %v713
          %vm837 = vcmp.eq.s32.totalorder %v668, %v717
          %vm838 = vcmp.eq.s32.totalorder %v669, %v689
          %vm839 = vcmp.eq.s32.totalorder %v669, %v693
          %vm840 = vcmp.eq.s32.totalorder %v669, %v697
          %vm841 = vcmp.eq.s32.totalorder %v669, %v701
          %vm842 = vcmp.eq.s32.totalorder %v669, %v705
          %vm843 = vcmp.eq.s32.totalorder %v669, %v709
          %vm844 = vcmp.eq.s32.totalorder %v669, %v713
          %vm845 = vcmp.eq.s32.totalorder %v669, %v717
          %vm846 = vcmp.eq.s32.totalorder %v670, %v689
          %vm847 = vcmp.eq.s32.totalorder %v670, %v693
          %vm848 = vcmp.eq.s32.totalorder %v670, %v697
          %vm849 = vcmp.eq.s32.totalorder %v670, %v701
          %vm850 = vcmp.eq.s32.totalorder %v670, %v705
          %vm851 = vcmp.eq.s32.totalorder %v670, %v709
          %vm852 = vcmp.eq.s32.totalorder %v670, %v713
          %vm853 = vcmp.eq.s32.totalorder %v670, %v717
          %vm854 = vcmp.eq.s32.totalorder %v671, %v689
          %vm855 = vcmp.eq.s32.totalorder %v671, %v693
          %vm856 = vcmp.eq.s32.totalorder %v671, %v697
          %vm857 = vcmp.eq.s32.totalorder %v671, %v701
          %vm858 = vcmp.eq.s32.totalorder %v671, %v705
          %vm859 = vcmp.eq.s32.totalorder %v671, %v709
          %vm860 = vcmp.eq.s32.totalorder %v671, %v713
          %vm861 = vcmp.eq.s32.totalorder %v671, %v717
          %vm862 = vcmp.eq.s32.totalorder %v672, %v689
          %vm863 = vcmp.eq.s32.totalorder %v672, %v693
          %vm864 = vcmp.eq.s32.totalorder %v672, %v697
          %vm865 = vcmp.eq.s32.totalorder %v672, %v701
          %vm866 = vcmp.eq.s32.totalorder %v672, %v705
          %vm867 = vcmp.eq.s32.totalorder %v672, %v709
          %vm868 = vcmp.eq.s32.totalorder %v672, %v713
          %vm869 = vcmp.eq.s32.totalorder %v672, %v717
          %vm870 = vcmp.eq.s32.totalorder %v673, %v689
          %vm871 = vcmp.eq.s32.totalorder %v673, %v693
          %vm872 = vcmp.eq.s32.totalorder %v673, %v697
          %vm873 = vcmp.eq.s32.totalorder %v673, %v701
          %vm874 = vcmp.eq.s32.totalorder %v673, %v705
          %vm875 = vcmp.eq.s32.totalorder %v673, %v709
          %vm876 = vcmp.eq.s32.totalorder %v673, %v713
          %vm877 = vcmp.eq.s32.totalorder %v673, %v717
          %vm878 = vcmp.eq.s32.totalorder %v674, %v689
          %vm879 = vcmp.eq.s32.totalorder %v674, %v693
          %vm880 = vcmp.eq.s32.totalorder %v674, %v697
          %vm881 = vcmp.eq.s32.totalorder %v674, %v701
          %vm882 = vcmp.eq.s32.totalorder %v674, %v705
          %vm883 = vcmp.eq.s32.totalorder %v674, %v709
          %vm884 = vcmp.eq.s32.totalorder %v674, %v713
          %vm885 = vcmp.eq.s32.totalorder %v674, %v717
          %vm886 = vcmp.eq.s32.totalorder %v675, %v689
          %vm887 = vcmp.eq.s32.totalorder %v675, %v693
          %vm888 = vcmp.eq.s32.totalorder %v675, %v697
          %vm889 = vcmp.eq.s32.totalorder %v675, %v701
          %vm890 = vcmp.eq.s32.totalorder %v675, %v705
          %vm891 = vcmp.eq.s32.totalorder %v675, %v709
          %vm892 = vcmp.eq.s32.totalorder %v675, %v713
          %vm893 = vcmp.eq.s32.totalorder %v675, %v717
          %vm894 = vcmp.eq.s32.totalorder %v676, %v689
          %vm895 = vcmp.eq.s32.totalorder %v676, %v693
          %vm896 = vcmp.eq.s32.totalorder %v676, %v697
          %vm897 = vcmp.eq.s32.totalorder %v676, %v701
          %vm898 = vcmp.eq.s32.totalorder %v676, %v705
          %vm899 = vcmp.eq.s32.totalorder %v676, %v709
          %vm900 = vcmp.eq.s32.totalorder %v676, %v713
          %vm901 = vcmp.eq.s32.totalorder %v676, %v717
          %vm902 = vcmp.eq.s32.totalorder %v677, %v689
          %vm903 = vcmp.eq.s32.totalorder %v677, %v693
          %vm904 = vcmp.eq.s32.totalorder %v677, %v697
          %vm905 = vcmp.eq.s32.totalorder %v677, %v701
          %vm906 = vcmp.eq.s32.totalorder %v677, %v705
          %vm907 = vcmp.eq.s32.totalorder %v677, %v709
          %vm908 = vcmp.eq.s32.totalorder %v677, %v713
          %vm909 = vcmp.eq.s32.totalorder %v677, %v717
          %vm910 = vcmp.eq.s32.totalorder %v678, %v689
          %vm911 = vcmp.eq.s32.totalorder %v678, %v693
          %vm912 = vcmp.eq.s32.totalorder %v678, %v697
          %vm913 = vcmp.eq.s32.totalorder %v678, %v701
          %vm914 = vcmp.eq.s32.totalorder %v678, %v705
          %vm915 = vcmp.eq.s32.totalorder %v678, %v709
          %vm916 = vcmp.eq.s32.totalorder %v678, %v713
          %vm917 = vcmp.eq.s32.totalorder %v678, %v717
          %vm918 = vcmp.eq.s32.totalorder %v679, %v689
          %vm919 = vcmp.eq.s32.totalorder %v679, %v693
          %vm920 = vcmp.eq.s32.totalorder %v679, %v697
          %vm921 = vcmp.eq.s32.totalorder %v679, %v701
          %vm922 = vcmp.eq.s32.totalorder %v679, %v705
          %vm923 = vcmp.eq.s32.totalorder %v679, %v709
          %vm924 = vcmp.eq.s32.totalorder %v679, %v713
          %vm925 = vcmp.eq.s32.totalorder %v679, %v717
          %vm926 = vcmp.eq.s32.totalorder %v680, %v689
          %vm927 = vcmp.eq.s32.totalorder %v680, %v693
          %vm928 = vcmp.eq.s32.totalorder %v680, %v697
          %vm929 = vcmp.eq.s32.totalorder %v680, %v701
          %vm930 = vcmp.eq.s32.totalorder %v680, %v705
          %vm931 = vcmp.eq.s32.totalorder %v680, %v709
          %vm932 = vcmp.eq.s32.totalorder %v680, %v713
          %vm933 = vcmp.eq.s32.totalorder %v680, %v717
          %vm934 = vcmp.eq.s32.totalorder %v681, %v689
          %vm935 = vcmp.eq.s32.totalorder %v681, %v693
          %vm936 = vcmp.eq.s32.totalorder %v681, %v697
          %vm937 = vcmp.eq.s32.totalorder %v681, %v701
          %vm938 = vcmp.eq.s32.totalorder %v681, %v705
          %vm939 = vcmp.eq.s32.totalorder %v681, %v709
          %vm940 = vcmp.eq.s32.totalorder %v681, %v713
          %vm941 = vcmp.eq.s32.totalorder %v681, %v717
          %vm942 = vcmp.eq.s32.totalorder %v682, %v689
          %vm943 = vcmp.eq.s32.totalorder %v682, %v693
          %vm944 = vcmp.eq.s32.totalorder %v682, %v697
          %vm945 = vcmp.eq.s32.totalorder %v682, %v701
          %vm946 = vcmp.eq.s32.totalorder %v682, %v705
          %vm947 = vcmp.eq.s32.totalorder %v682, %v709
          %vm948 = vcmp.eq.s32.totalorder %v682, %v713
          %vm949 = vcmp.eq.s32.totalorder %v682, %v717
          %vm950 = vcmp.eq.s32.totalorder %v683, %v689
          %vm951 = vcmp.eq.s32.totalorder %v683, %v693
          %vm952 = vcmp.eq.s32.totalorder %v683, %v697
          %vm953 = vcmp.eq.s32.totalorder %v683, %v701
          %vm954 = vcmp.eq.s32.totalorder %v683, %v705
          %vm955 = vcmp.eq.s32.totalorder %v683, %v709
          %vm956 = vcmp.eq.s32.totalorder %v683, %v713
          %vm957 = vcmp.eq.s32.totalorder %v683, %v717
          %vm958 = vcmp.eq.s32.totalorder %v684, %v689
          %vm959 = vcmp.eq.s32.totalorder %v684, %v693
          %vm960 = vcmp.eq.s32.totalorder %v684, %v697
          %vm961 = vcmp.eq.s32.totalorder %v684, %v701
          %vm962 = vcmp.eq.s32.totalorder %v684, %v705
          %vm963 = vcmp.eq.s32.totalorder %v684, %v709
          %vm964 = vcmp.eq.s32.totalorder %v684, %v713
          %vm965 = vcmp.eq.s32.totalorder %v684, %v717
          %vm966 = vcmp.eq.s32.totalorder %v685, %v689
          %vm967 = vcmp.eq.s32.totalorder %v685, %v693
          %vm968 = vcmp.eq.s32.totalorder %v685, %v697
          %vm969 = vcmp.eq.s32.totalorder %v685, %v701
          %vm970 = vcmp.eq.s32.totalorder %v685, %v705
          %vm971 = vcmp.eq.s32.totalorder %v685, %v709
          %vm972 = vcmp.eq.s32.totalorder %v685, %v713
          %vm973 = vcmp.eq.s32.totalorder %v685, %v717
          %v974 = vsel %vm718, 1, 0
          %v975 = vsel %vm719, 1, 0
          %v976 = vsel %vm720, 1, 0
          %v977 = vsel %vm721, 1, 0
          %v978 = vsel %vm722, 1, 0
          %v979 = vsel %vm723, 1, 0
          %v980 = vsel %vm724, 1, 0
          %v981 = vsel %vm725, 1, 0
          %v982 = vsel %vm726, 1, 0
          %v983 = vsel %vm727, 1, 0
          %v984 = vsel %vm728, 1, 0
          %v985 = vsel %vm729, 1, 0
          %v986 = vsel %vm730, 1, 0
          %v987 = vsel %vm731, 1, 0
          %v988 = vsel %vm732, 1, 0
          %v989 = vsel %vm733, 1, 0
          %v990 = vsel %vm734, 1, 0
          %v991 = vsel %vm735, 1, 0
          %v992 = vsel %vm736, 1, 0
          %v993 = vsel %vm737, 1, 0
          %v994 = vsel %vm738, 1, 0
          %v995 = vsel %vm739, 1, 0
          %v996 = vsel %vm740, 1, 0
          %v997 = vsel %vm741, 1, 0
          %v998 = vsel %vm742, 1, 0
          %v999 = vsel %vm743, 1, 0
          %v1000 = vsel %vm744, 1, 0
          %v1001 = vsel %vm745, 1, 0
          %v1002 = vsel %vm746, 1, 0
          %v1003 = vsel %vm747, 1, 0
          %v1004 = vsel %vm748, 1, 0
          %v1005 = vsel %vm749, 1, 0
          %v1006 = vsel %vm750, 1, 0
          %v1007 = vsel %vm751, 1, 0
          %v1008 = vsel %vm752, 1, 0
          %v1009 = vsel %vm753, 1, 0
          %v1010 = vsel %vm754, 1, 0
          %v1011 = vsel %vm755, 1, 0
          %v1012 = vsel %vm756, 1, 0
          %v1013 = vsel %vm757, 1, 0
          %v1014 = vsel %vm758, 1, 0
          %v1015 = vsel %vm759, 1, 0
          %v1016 = vsel %vm760, 1, 0
          %v1017 = vsel %vm761, 1, 0
          %v1018 = vsel %vm762, 1, 0
          %v1019 = vsel %vm763, 1, 0
          %v1020 = vsel %vm764, 1, 0
          %v1021 = vsel %vm765, 1, 0
          %v1022 = vsel %vm766, 1, 0
          %v1023 = vsel %vm767, 1, 0
          %v1024 = vsel %vm768, 1, 0
          %v1025 = vsel %vm769, 1, 0
          %v1026 = vsel %vm770, 1, 0
          %v1027 = vsel %vm771, 1, 0
          %v1028 = vsel %vm772, 1, 0
          %v1029 = vsel %vm773, 1, 0
          %v1030 = vsel %vm774, 1, 0
          %v1031 = vsel %vm775, 1, 0
          %v1032 = vsel %vm776, 1, 0
          %v1033 = vsel %vm777, 1, 0
          %v1034 = vsel %vm778, 1, 0
          %v1035 = vsel %vm779, 1, 0
          %v1036 = vsel %vm780, 1, 0
          %v1037 = vsel %vm781, 1, 0
          %v1038 = vsel %vm782, 1, 0
          %v1039 = vsel %vm783, 1, 0
          %v1040 = vsel %vm784, 1, 0
          %v1041 = vsel %vm785, 1, 0
          %v1042 = vsel %vm786, 1, 0
          %v1043 = vsel %vm787, 1, 0
          %v1044 = vsel %vm788, 1, 0
          %v1045 = vsel %vm789, 1, 0
          %v1046 = vsel %vm790, 1, 0
          %v1047 = vsel %vm791, 1, 0
          %v1048 = vsel %vm792, 1, 0
          %v1049 = vsel %vm793, 1, 0
          %v1050 = vsel %vm794, 1, 0
          %v1051 = vsel %vm795, 1, 0
          %v1052 = vsel %vm796, 1, 0
          %v1053 = vsel %vm797, 1, 0
          %v1054 = vsel %vm798, 1, 0
          %v1055 = vsel %vm799, 1, 0
          %v1056 = vsel %vm800, 1, 0
          %v1057 = vsel %vm801, 1, 0
          %v1058 = vsel %vm802, 1, 0
          %v1059 = vsel %vm803, 1, 0
          %v1060 = vsel %vm804, 1, 0
          %v1061 = vsel %vm805, 1, 0
          %v1062 = vsel %vm806, 1, 0
          %v1063 = vsel %vm807, 1, 0
          %v1064 = vsel %vm808, 1, 0
          %v1065 = vsel %vm809, 1, 0
          %v1066 = vsel %vm810, 1, 0
          %v1067 = vsel %vm811, 1, 0
          %v1068 = vsel %vm812, 1, 0
          %v1069 = vsel %vm813, 1, 0
          %v1070 = vsel %vm814, 1, 0
          %v1071 = vsel %vm815, 1, 0
          %v1072 = vsel %vm816, 1, 0
          %v1073 = vsel %vm817, 1, 0
          %v1074 = vsel %vm818, 1, 0
          %v1075 = vsel %vm819, 1, 0
          %v1076 = vsel %vm820, 1, 0
          %v1077 = vsel %vm821, 1, 0
          %v1078 = vsel %vm822, 1, 0
          %v1079 = vsel %vm823, 1, 0
          %v1080 = vsel %vm824, 1, 0
          %v1081 = vsel %vm825, 1, 0
          %v1082 = vsel %vm826, 1, 0
          %v1083 = vsel %vm827, 1, 0
          %v1084 = vsel %vm828, 1, 0
          %v1085 = vsel %vm829, 1, 0
          %v1086 = vsel %vm830, 1, 0
          %v1087 = vsel %vm831, 1, 0
          %v1088 = vsel %vm832, 1, 0
          %v1089 = vsel %vm833, 1, 0
          %v1090 = vsel %vm834, 1, 0
          %v1091 = vsel %vm835, 1, 0
          %v1092 = vsel %vm836, 1, 0
          %v1093 = vsel %vm837, 1, 0
          %v1094 = vsel %vm838, 1, 0
          %v1095 = vsel %vm839, 1, 0
          %v1096 = vsel %vm840, 1, 0
          %v1097 = vsel %vm841, 1, 0
          %v1098 = vsel %vm842, 1, 0
          %v1099 = vsel %vm843, 1, 0
          %v1100 = vsel %vm844, 1, 0
          %v1101 = vsel %vm845, 1, 0
          %v1102 = vsel %vm846, 1, 0
          %v1103 = vsel %vm847, 1, 0
          %v1104 = vsel %vm848, 1, 0
          %v1105 = vsel %vm849, 1, 0
          %v1106 = vsel %vm850, 1, 0
          %v1107 = vsel %vm851, 1, 0
          %v1108 = vsel %vm852, 1, 0
          %v1109 = vsel %vm853, 1, 0
          %v1110 = vsel %vm854, 1, 0
          %v1111 = vsel %vm855, 1, 0
          %v1112 = vsel %vm856, 1, 0
          %v1113 = vsel %vm857, 1, 0
          %v1114 = vsel %vm858, 1, 0
          %v1115 = vsel %vm859, 1, 0
          %v1116 = vsel %vm860, 1, 0
          %v1117 = vsel %vm861, 1, 0
          %v1118 = vsel %vm862, 1, 0
          %v1119 = vsel %vm863, 1, 0
          %v1120 = vsel %vm864, 1, 0
          %v1121 = vsel %vm865, 1, 0
          %v1122 = vsel %vm866, 1, 0
          %v1123 = vsel %vm867, 1, 0
          %v1124 = vsel %vm868, 1, 0
          %v1125 = vsel %vm869, 1, 0
          %v1126 = vsel %vm870, 1, 0
          %v1127 = vsel %vm871, 1, 0
          %v1128 = vsel %vm872, 1, 0
          %v1129 = vsel %vm873, 1, 0
          %v1130 = vsel %vm874, 1, 0
          %v1131 = vsel %vm875, 1, 0
          %v1132 = vsel %vm876, 1, 0
          %v1133 = vsel %vm877, 1, 0
          %v1134 = vsel %vm878, 1, 0
          %v1135 = vsel %vm879, 1, 0
          %v1136 = vsel %vm880, 1, 0
          %v1137 = vsel %vm881, 1, 0
          %v1138 = vsel %vm882, 1, 0
          %v1139 = vsel %vm883, 1, 0
          %v1140 = vsel %vm884, 1, 0
          %v1141 = vsel %vm885, 1, 0
          %v1142 = vsel %vm886, 1, 0
          %v1143 = vsel %vm887, 1, 0
          %v1144 = vsel %vm888, 1, 0
          %v1145 = vsel %vm889, 1, 0
          %v1146 = vsel %vm890, 1, 0
          %v1147 = vsel %vm891, 1, 0
          %v1148 = vsel %vm892, 1, 0
          %v1149 = vsel %vm893, 1, 0
          %v1150 = vsel %vm894, 1, 0
          %v1151 = vsel %vm895, 1, 0
          %v1152 = vsel %vm896, 1, 0
          %v1153 = vsel %vm897, 1, 0
          %v1154 = vsel %vm898, 1, 0
          %v1155 = vsel %vm899, 1, 0
          %v1156 = vsel %vm900, 1, 0
          %v1157 = vsel %vm901, 1, 0
          %v1158 = vsel %vm902, 1, 0
          %v1159 = vsel %vm903, 1, 0
          %v1160 = vsel %vm904, 1, 0
          %v1161 = vsel %vm905, 1, 0
          %v1162 = vsel %vm906, 1, 0
          %v1163 = vsel %vm907, 1, 0
          %v1164 = vsel %vm908, 1, 0
          %v1165 = vsel %vm909, 1, 0
          %v1166 = vsel %vm910, 1, 0
          %v1167 = vsel %vm911, 1, 0
          %v1168 = vsel %vm912, 1, 0
          %v1169 = vsel %vm913, 1, 0
          %v1170 = vsel %vm914, 1, 0
          %v1171 = vsel %vm915, 1, 0
          %v1172 = vsel %vm916, 1, 0
          %v1173 = vsel %vm917, 1, 0
          %v1174 = vsel %vm918, 1, 0
          %v1175 = vsel %vm919, 1, 0
          %v1176 = vsel %vm920, 1, 0
          %v1177 = vsel %vm921, 1, 0
          %v1178 = vsel %vm922, 1, 0
          %v1179 = vsel %vm923, 1, 0
          %v1180 = vsel %vm924, 1, 0
          %v1181 = vsel %vm925, 1, 0
          %v1182 = vsel %vm926, 1, 0
          %v1183 = vsel %vm927, 1, 0
          %v1184 = vsel %vm928, 1, 0
          %v1185 = vsel %vm929, 1, 0
          %v1186 = vsel %vm930, 1, 0
          %v1187 = vsel %vm931, 1, 0
          %v1188 = vsel %vm932, 1, 0
          %v1189 = vsel %vm933, 1, 0
          %v1190 = vsel %vm934, 1, 0
          %v1191 = vsel %vm935, 1, 0
          %v1192 = vsel %vm936, 1, 0
          %v1193 = vsel %vm937, 1, 0
          %v1194 = vsel %vm938, 1, 0
          %v1195 = vsel %vm939, 1, 0
          %v1196 = vsel %vm940, 1, 0
          %v1197 = vsel %vm941, 1, 0
          %v1198 = vsel %vm942, 1, 0
          %v1199 = vsel %vm943, 1, 0
          %v1200 = vsel %vm944, 1, 0
          %v1201 = vsel %vm945, 1, 0
          %v1202 = vsel %vm946, 1, 0
          %v1203 = vsel %vm947, 1, 0
          %v1204 = vsel %vm948, 1, 0
          %v1205 = vsel %vm949, 1, 0
          %v1206 = vsel %vm950, 1, 0
          %v1207 = vsel %vm951, 1, 0
          %v1208 = vsel %vm952, 1, 0
          %v1209 = vsel %vm953, 1, 0
          %v1210 = vsel %vm954, 1, 0
          %v1211 = vsel %vm955, 1, 0
          %v1212 = vsel %vm956, 1, 0
          %v1213 = vsel %vm957, 1, 0
          %v1214 = vsel %vm958, 1, 0
          %v1215 = vsel %vm959, 1, 0
          %v1216 = vsel %vm960, 1, 0
          %v1217 = vsel %vm961, 1, 0
          %v1218 = vsel %vm962, 1, 0
          %v1219 = vsel %vm963, 1, 0
          %v1220 = vsel %vm964, 1, 0
          %v1221 = vsel %vm965, 1, 0
          %v1222 = vsel %vm966, 1, 0
          %v1223 = vsel %vm967, 1, 0
          %v1224 = vsel %vm968, 1, 0
          %v1225 = vsel %vm969, 1, 0
          %v1226 = vsel %vm970, 1, 0
          %v1227 = vsel %vm971, 1, 0
          %v1228 = vsel %vm972, 1, 0
          %v1229 = vsel %vm973, 1, 0
          %v1230 = vcvt.s32.f32 %v974
          %v1231 = vcvt.s32.f32 %v975
          %v1232 = vcvt.s32.f32 %v976
          %v1233 = vcvt.s32.f32 %v977
          %v1234 = vcvt.s32.f32 %v978
          %v1235 = vcvt.s32.f32 %v979
          %v1236 = vcvt.s32.f32 %v980
          %v1237 = vcvt.s32.f32 %v981
          %v1238 = vcvt.s32.f32 %v982
          %v1239 = vcvt.s32.f32 %v983
          %v1240 = vcvt.s32.f32 %v984
          %v1241 = vcvt.s32.f32 %v985
          %v1242 = vcvt.s32.f32 %v986
          %v1243 = vcvt.s32.f32 %v987
          %v1244 = vcvt.s32.f32 %v988
          %v1245 = vcvt.s32.f32 %v989
          %v1246 = vcvt.s32.f32 %v990
          %v1247 = vcvt.s32.f32 %v991
          %v1248 = vcvt.s32.f32 %v992
          %v1249 = vcvt.s32.f32 %v993
          %v1250 = vcvt.s32.f32 %v994
          %v1251 = vcvt.s32.f32 %v995
          %v1252 = vcvt.s32.f32 %v996
          %v1253 = vcvt.s32.f32 %v997
          %v1254 = vcvt.s32.f32 %v998
          %v1255 = vcvt.s32.f32 %v999
          %v1256 = vcvt.s32.f32 %v1000
          %v1257 = vcvt.s32.f32 %v1001
          %v1258 = vcvt.s32.f32 %v1002
          %v1259 = vcvt.s32.f32 %v1003
          %v1260 = vcvt.s32.f32 %v1004
          %v1261 = vcvt.s32.f32 %v1005
          %v1262 = vcvt.s32.f32 %v1006
          %v1263 = vcvt.s32.f32 %v1007
          %v1264 = vcvt.s32.f32 %v1008
          %v1265 = vcvt.s32.f32 %v1009
          %v1266 = vcvt.s32.f32 %v1010
          %v1267 = vcvt.s32.f32 %v1011
          %v1268 = vcvt.s32.f32 %v1012
          %v1269 = vcvt.s32.f32 %v1013
          %v1270 = vcvt.s32.f32 %v1014
          %v1271 = vcvt.s32.f32 %v1015
          %v1272 = vcvt.s32.f32 %v1016
          %v1273 = vcvt.s32.f32 %v1017
          %v1274 = vcvt.s32.f32 %v1018
          %v1275 = vcvt.s32.f32 %v1019
          %v1276 = vcvt.s32.f32 %v1020
          %v1277 = vcvt.s32.f32 %v1021
          %v1278 = vcvt.s32.f32 %v1022
          %v1279 = vcvt.s32.f32 %v1023
          %v1280 = vcvt.s32.f32 %v1024
          %v1281 = vcvt.s32.f32 %v1025
          %v1282 = vcvt.s32.f32 %v1026
          %v1283 = vcvt.s32.f32 %v1027
          %v1284 = vcvt.s32.f32 %v1028
          %v1285 = vcvt.s32.f32 %v1029
          %v1286 = vcvt.s32.f32 %v1030
          %v1287 = vcvt.s32.f32 %v1031
          %v1288 = vcvt.s32.f32 %v1032
          %v1289 = vcvt.s32.f32 %v1033
          %v1290 = vcvt.s32.f32 %v1034
          %v1291 = vcvt.s32.f32 %v1035
          %v1292 = vcvt.s32.f32 %v1036
          %v1293 = vcvt.s32.f32 %v1037
          %v1294 = vcvt.s32.f32 %v1038
          %v1295 = vcvt.s32.f32 %v1039
          %v1296 = vcvt.s32.f32 %v1040
          %v1297 = vcvt.s32.f32 %v1041
          %v1298 = vcvt.s32.f32 %v1042
          %v1299 = vcvt.s32.f32 %v1043
          %v1300 = vcvt.s32.f32 %v1044
          %v1301 = vcvt.s32.f32 %v1045
          %v1302 = vcvt.s32.f32 %v1046
          %v1303 = vcvt.s32.f32 %v1047
          %v1304 = vcvt.s32.f32 %v1048
          %v1305 = vcvt.s32.f32 %v1049
          %v1306 = vcvt.s32.f32 %v1050
          %v1307 = vcvt.s32.f32 %v1051
          %v1308 = vcvt.s32.f32 %v1052
          %v1309 = vcvt.s32.f32 %v1053
          %v1310 = vcvt.s32.f32 %v1054
          %v1311 = vcvt.s32.f32 %v1055
          %v1312 = vcvt.s32.f32 %v1056
          %v1313 = vcvt.s32.f32 %v1057
          %v1314 = vcvt.s32.f32 %v1058
          %v1315 = vcvt.s32.f32 %v1059
          %v1316 = vcvt.s32.f32 %v1060
          %v1317 = vcvt.s32.f32 %v1061
          %v1318 = vcvt.s32.f32 %v1062
          %v1319 = vcvt.s32.f32 %v1063
          %v1320 = vcvt.s32.f32 %v1064
          %v1321 = vcvt.s32.f32 %v1065
          %v1322 = vcvt.s32.f32 %v1066
          %v1323 = vcvt.s32.f32 %v1067
          %v1324 = vcvt.s32.f32 %v1068
          %v1325 = vcvt.s32.f32 %v1069
          %v1326 = vcvt.s32.f32 %v1070
          %v1327 = vcvt.s32.f32 %v1071
          %v1328 = vcvt.s32.f32 %v1072
          %v1329 = vcvt.s32.f32 %v1073
          %v1330 = vcvt.s32.f32 %v1074
          %v1331 = vcvt.s32.f32 %v1075
          %v1332 = vcvt.s32.f32 %v1076
          %v1333 = vcvt.s32.f32 %v1077
          %v1334 = vcvt.s32.f32 %v1078
          %v1335 = vcvt.s32.f32 %v1079
          %v1336 = vcvt.s32.f32 %v1080
          %v1337 = vcvt.s32.f32 %v1081
          %v1338 = vcvt.s32.f32 %v1082
          %v1339 = vcvt.s32.f32 %v1083
          %v1340 = vcvt.s32.f32 %v1084
          %v1341 = vcvt.s32.f32 %v1085
          %v1342 = vcvt.s32.f32 %v1086
          %v1343 = vcvt.s32.f32 %v1087
          %v1344 = vcvt.s32.f32 %v1088
          %v1345 = vcvt.s32.f32 %v1089
          %v1346 = vcvt.s32.f32 %v1090
          %v1347 = vcvt.s32.f32 %v1091
          %v1348 = vcvt.s32.f32 %v1092
          %v1349 = vcvt.s32.f32 %v1093
          %v1350 = vcvt.s32.f32 %v1094
          %v1351 = vcvt.s32.f32 %v1095
          %v1352 = vcvt.s32.f32 %v1096
          %v1353 = vcvt.s32.f32 %v1097
          %v1354 = vcvt.s32.f32 %v1098
          %v1355 = vcvt.s32.f32 %v1099
          %v1356 = vcvt.s32.f32 %v1100
          %v1357 = vcvt.s32.f32 %v1101
          %v1358 = vcvt.s32.f32 %v1102
          %v1359 = vcvt.s32.f32 %v1103
          %v1360 = vcvt.s32.f32 %v1104
          %v1361 = vcvt.s32.f32 %v1105
          %v1362 = vcvt.s32.f32 %v1106
          %v1363 = vcvt.s32.f32 %v1107
          %v1364 = vcvt.s32.f32 %v1108
          %v1365 = vcvt.s32.f32 %v1109
          %v1366 = vcvt.s32.f32 %v1110
          %v1367 = vcvt.s32.f32 %v1111
          %v1368 = vcvt.s32.f32 %v1112
          %v1369 = vcvt.s32.f32 %v1113
          %v1370 = vcvt.s32.f32 %v1114
          %v1371 = vcvt.s32.f32 %v1115
          %v1372 = vcvt.s32.f32 %v1116
          %v1373 = vcvt.s32.f32 %v1117
          %v1374 = vcvt.s32.f32 %v1118
          %v1375 = vcvt.s32.f32 %v1119
          %v1376 = vcvt.s32.f32 %v1120
          %v1377 = vcvt.s32.f32 %v1121
          %v1378 = vcvt.s32.f32 %v1122
          %v1379 = vcvt.s32.f32 %v1123
          %v1380 = vcvt.s32.f32 %v1124
          %v1381 = vcvt.s32.f32 %v1125
          %v1382 = vcvt.s32.f32 %v1126
          %v1383 = vcvt.s32.f32 %v1127
          %v1384 = vcvt.s32.f32 %v1128
          %v1385 = vcvt.s32.f32 %v1129
          %v1386 = vcvt.s32.f32 %v1130
          %v1387 = vcvt.s32.f32 %v1131
          %v1388 = vcvt.s32.f32 %v1132
          %v1389 = vcvt.s32.f32 %v1133
          %v1390 = vcvt.s32.f32 %v1134
          %v1391 = vcvt.s32.f32 %v1135
          %v1392 = vcvt.s32.f32 %v1136
          %v1393 = vcvt.s32.f32 %v1137
          %v1394 = vcvt.s32.f32 %v1138
          %v1395 = vcvt.s32.f32 %v1139
          %v1396 = vcvt.s32.f32 %v1140
          %v1397 = vcvt.s32.f32 %v1141
          %v1398 = vcvt.s32.f32 %v1142
          %v1399 = vcvt.s32.f32 %v1143
          %v1400 = vcvt.s32.f32 %v1144
          %v1401 = vcvt.s32.f32 %v1145
          %v1402 = vcvt.s32.f32 %v1146
          %v1403 = vcvt.s32.f32 %v1147
          %v1404 = vcvt.s32.f32 %v1148
          %v1405 = vcvt.s32.f32 %v1149
          %v1406 = vcvt.s32.f32 %v1150
          %v1407 = vcvt.s32.f32 %v1151
          %v1408 = vcvt.s32.f32 %v1152
          %v1409 = vcvt.s32.f32 %v1153
          %v1410 = vcvt.s32.f32 %v1154
          %v1411 = vcvt.s32.f32 %v1155
          %v1412 = vcvt.s32.f32 %v1156
          %v1413 = vcvt.s32.f32 %v1157
          %v1414 = vcvt.s32.f32 %v1158
          %v1415 = vcvt.s32.f32 %v1159
          %v1416 = vcvt.s32.f32 %v1160
          %v1417 = vcvt.s32.f32 %v1161
          %v1418 = vcvt.s32.f32 %v1162
          %v1419 = vcvt.s32.f32 %v1163
          %v1420 = vcvt.s32.f32 %v1164
          %v1421 = vcvt.s32.f32 %v1165
          %v1422 = vcvt.s32.f32 %v1166
          %v1423 = vcvt.s32.f32 %v1167
          %v1424 = vcvt.s32.f32 %v1168
          %v1425 = vcvt.s32.f32 %v1169
          %v1426 = vcvt.s32.f32 %v1170
          %v1427 = vcvt.s32.f32 %v1171
          %v1428 = vcvt.s32.f32 %v1172
          %v1429 = vcvt.s32.f32 %v1173
          %v1430 = vcvt.s32.f32 %v1174
          %v1431 = vcvt.s32.f32 %v1175
          %v1432 = vcvt.s32.f32 %v1176
          %v1433 = vcvt.s32.f32 %v1177
          %v1434 = vcvt.s32.f32 %v1178
          %v1435 = vcvt.s32.f32 %v1179
          %v1436 = vcvt.s32.f32 %v1180
          %v1437 = vcvt.s32.f32 %v1181
          %v1438 = vcvt.s32.f32 %v1182
          %v1439 = vcvt.s32.f32 %v1183
          %v1440 = vcvt.s32.f32 %v1184
          %v1441 = vcvt.s32.f32 %v1185
          %v1442 = vcvt.s32.f32 %v1186
          %v1443 = vcvt.s32.f32 %v1187
          %v1444 = vcvt.s32.f32 %v1188
          %v1445 = vcvt.s32.f32 %v1189
          %v1446 = vcvt.s32.f32 %v1190
          %v1447 = vcvt.s32.f32 %v1191
          %v1448 = vcvt.s32.f32 %v1192
          %v1449 = vcvt.s32.f32 %v1193
          %v1450 = vcvt.s32.f32 %v1194
          %v1451 = vcvt.s32.f32 %v1195
          %v1452 = vcvt.s32.f32 %v1196
          %v1453 = vcvt.s32.f32 %v1197
          %v1454 = vcvt.s32.f32 %v1198
          %v1455 = vcvt.s32.f32 %v1199
          %v1456 = vcvt.s32.f32 %v1200
          %v1457 = vcvt.s32.f32 %v1201
          %v1458 = vcvt.s32.f32 %v1202
          %v1459 = vcvt.s32.f32 %v1203
          %v1460 = vcvt.s32.f32 %v1204
          %v1461 = vcvt.s32.f32 %v1205
          %v1462 = vcvt.s32.f32 %v1206
          %v1463 = vcvt.s32.f32 %v1207
          %v1464 = vcvt.s32.f32 %v1208
          %v1465 = vcvt.s32.f32 %v1209
          %v1466 = vcvt.s32.f32 %v1210
          %v1467 = vcvt.s32.f32 %v1211
          %v1468 = vcvt.s32.f32 %v1212
          %v1469 = vcvt.s32.f32 %v1213
          %v1470 = vcvt.s32.f32 %v1214
          %v1471 = vcvt.s32.f32 %v1215
          %v1472 = vcvt.s32.f32 %v1216
          %v1473 = vcvt.s32.f32 %v1217
          %v1474 = vcvt.s32.f32 %v1218
          %v1475 = vcvt.s32.f32 %v1219
          %v1476 = vcvt.s32.f32 %v1220
          %v1477 = vcvt.s32.f32 %v1221
          %v1478 = vcvt.s32.f32 %v1222
          %v1479 = vcvt.s32.f32 %v1223
          %v1480 = vcvt.s32.f32 %v1224
          %v1481 = vcvt.s32.f32 %v1225
          %v1482 = vcvt.s32.f32 %v1226
          %v1483 = vcvt.s32.f32 %v1227
          %v1484 = vcvt.s32.f32 %v1228
          %v1485 = vcvt.s32.f32 %v1229
          %v1486 = vpack.c.bf16 %v1238, %v1230
          %v1487 = vpack.c.bf16 %v1239, %v1231
          %v1488 = vpack.c.bf16 %v1240, %v1232
          %v1489 = vpack.c.bf16 %v1241, %v1233
          %v1490 = vpack.c.bf16 %v1242, %v1234
          %v1491 = vpack.c.bf16 %v1243, %v1235
          %v1492 = vpack.c.bf16 %v1244, %v1236
          %v1493 = vpack.c.bf16 %v1245, %v1237
          %v1494 = vpack.c.bf16 %v1254, %v1246
          %v1495 = vpack.c.bf16 %v1255, %v1247
          %v1496 = vpack.c.bf16 %v1256, %v1248
          %v1497 = vpack.c.bf16 %v1257, %v1249
          %v1498 = vpack.c.bf16 %v1258, %v1250
          %v1499 = vpack.c.bf16 %v1259, %v1251
          %v1500 = vpack.c.bf16 %v1260, %v1252
          %v1501 = vpack.c.bf16 %v1261, %v1253
          %v1502 = vpack.c.bf16 %v1270, %v1262
          %v1503 = vpack.c.bf16 %v1271, %v1263
          %v1504 = vpack.c.bf16 %v1272, %v1264
          %v1505 = vpack.c.bf16 %v1273, %v1265
          %v1506 = vpack.c.bf16 %v1274, %v1266
          %v1507 = vpack.c.bf16 %v1275, %v1267
          %v1508 = vpack.c.bf16 %v1276, %v1268
          %v1509 = vpack.c.bf16 %v1277, %v1269
          %v1510 = vpack.c.bf16 %v1286, %v1278
          %v1511 = vpack.c.bf16 %v1287, %v1279
          %v1512 = vpack.c.bf16 %v1288, %v1280
          %v1513 = vpack.c.bf16 %v1289, %v1281
          %v1514 = vpack.c.bf16 %v1290, %v1282
          %v1515 = vpack.c.bf16 %v1291, %v1283
          %v1516 = vpack.c.bf16 %v1292, %v1284
          %v1517 = vpack.c.bf16 %v1293, %v1285
          %v1518 = vpack.c.bf16 %v1302, %v1294
          %v1519 = vpack.c.bf16 %v1303, %v1295
          %v1520 = vpack.c.bf16 %v1304, %v1296
          %v1521 = vpack.c.bf16 %v1305, %v1297
          %v1522 = vpack.c.bf16 %v1306, %v1298
          %v1523 = vpack.c.bf16 %v1307, %v1299
          %v1524 = vpack.c.bf16 %v1308, %v1300
          %v1525 = vpack.c.bf16 %v1309, %v1301
          %v1526 = vpack.c.bf16 %v1318, %v1310
          %v1527 = vpack.c.bf16 %v1319, %v1311
          %v1528 = vpack.c.bf16 %v1320, %v1312
          %v1529 = vpack.c.bf16 %v1321, %v1313
          %v1530 = vpack.c.bf16 %v1322, %v1314
          %v1531 = vpack.c.bf16 %v1323, %v1315
          %v1532 = vpack.c.bf16 %v1324, %v1316
          %v1533 = vpack.c.bf16 %v1325, %v1317
          %v1534 = vpack.c.bf16 %v1334, %v1326
          %v1535 = vpack.c.bf16 %v1335, %v1327
          %v1536 = vpack.c.bf16 %v1336, %v1328
          %v1537 = vpack.c.bf16 %v1337, %v1329
          %v1538 = vpack.c.bf16 %v1338, %v1330
          %v1539 = vpack.c.bf16 %v1339, %v1331
          %v1540 = vpack.c.bf16 %v1340, %v1332
          %v1541 = vpack.c.bf16 %v1341, %v1333
          %v1542 = vpack.c.bf16 %v1350, %v1342
          %v1543 = vpack.c.bf16 %v1351, %v1343
          %v1544 = vpack.c.bf16 %v1352, %v1344
          %v1545 = vpack.c.bf16 %v1353, %v1345
          %v1546 = vpack.c.bf16 %v1354, %v1346
          %v1547 = vpack.c.bf16 %v1355, %v1347
          %v1548 = vpack.c.bf16 %v1356, %v1348
          %v1549 = vpack.c.bf16 %v1357, %v1349
          %v1550 = vpack.c.bf16 %v1366, %v1358
          %v1551 = vpack.c.bf16 %v1367, %v1359
          %v1552 = vpack.c.bf16 %v1368, %v1360
          %v1553 = vpack.c.bf16 %v1369, %v1361
          %v1554 = vpack.c.bf16 %v1370, %v1362
          %v1555 = vpack.c.bf16 %v1371, %v1363
          %v1556 = vpack.c.bf16 %v1372, %v1364
          %v1557 = vpack.c.bf16 %v1373, %v1365
          %v1558 = vpack.c.bf16 %v1382, %v1374
          %v1559 = vpack.c.bf16 %v1383, %v1375
          %v1560 = vpack.c.bf16 %v1384, %v1376
          %v1561 = vpack.c.bf16 %v1385, %v1377
          %v1562 = vpack.c.bf16 %v1386, %v1378
          %v1563 = vpack.c.bf16 %v1387, %v1379
          %v1564 = vpack.c.bf16 %v1388, %v1380
          %v1565 = vpack.c.bf16 %v1389, %v1381
          %v1566 = vpack.c.bf16 %v1398, %v1390
          %v1567 = vpack.c.bf16 %v1399, %v1391
          %v1568 = vpack.c.bf16 %v1400, %v1392
          %v1569 = vpack.c.bf16 %v1401, %v1393
          %v1570 = vpack.c.bf16 %v1402, %v1394
          %v1571 = vpack.c.bf16 %v1403, %v1395
          %v1572 = vpack.c.bf16 %v1404, %v1396
          %v1573 = vpack.c.bf16 %v1405, %v1397
          %v1574 = vpack.c.bf16 %v1414, %v1406
          %v1575 = vpack.c.bf16 %v1415, %v1407
          %v1576 = vpack.c.bf16 %v1416, %v1408
          %v1577 = vpack.c.bf16 %v1417, %v1409
          %v1578 = vpack.c.bf16 %v1418, %v1410
          %v1579 = vpack.c.bf16 %v1419, %v1411
          %v1580 = vpack.c.bf16 %v1420, %v1412
          %v1581 = vpack.c.bf16 %v1421, %v1413
          %v1582 = vpack.c.bf16 %v1430, %v1422
          %v1583 = vpack.c.bf16 %v1431, %v1423
          %v1584 = vpack.c.bf16 %v1432, %v1424
          %v1585 = vpack.c.bf16 %v1433, %v1425
          %v1586 = vpack.c.bf16 %v1434, %v1426
          %v1587 = vpack.c.bf16 %v1435, %v1427
          %v1588 = vpack.c.bf16 %v1436, %v1428
          %v1589 = vpack.c.bf16 %v1437, %v1429
          %v1590 = vpack.c.bf16 %v1446, %v1438
          %v1591 = vpack.c.bf16 %v1447, %v1439
          %v1592 = vpack.c.bf16 %v1448, %v1440
          %v1593 = vpack.c.bf16 %v1449, %v1441
          %v1594 = vpack.c.bf16 %v1450, %v1442
          %v1595 = vpack.c.bf16 %v1451, %v1443
          %v1596 = vpack.c.bf16 %v1452, %v1444
          %v1597 = vpack.c.bf16 %v1453, %v1445
          %v1598 = vpack.c.bf16 %v1462, %v1454
          %v1599 = vpack.c.bf16 %v1463, %v1455
          %v1600 = vpack.c.bf16 %v1464, %v1456
          %v1601 = vpack.c.bf16 %v1465, %v1457
          %v1602 = vpack.c.bf16 %v1466, %v1458
          %v1603 = vpack.c.bf16 %v1467, %v1459
          %v1604 = vpack.c.bf16 %v1468, %v1460
          %v1605 = vpack.c.bf16 %v1469, %v1461
          %v1606 = vpack.c.bf16 %v1478, %v1470
          %v1607 = vpack.c.bf16 %v1479, %v1471
          %v1608 = vpack.c.bf16 %v1480, %v1472
          %v1609 = vpack.c.bf16 %v1481, %v1473
          %v1610 = vpack.c.bf16 %v1482, %v1474
          %v1611 = vpack.c.bf16 %v1483, %v1475
          %v1612 = vpack.c.bf16 %v1484, %v1476
          %v1613 = vpack.c.bf16 %v1485, %v1477
          %v1614 = vld [vmem:[#allocation2] sm:$0xff]
          %v1615 = vld [vmem:[#allocation2 + $0x8] sm:$0xff]
          %v1616 = vld [vmem:[#allocation2 + $0x10] sm:$0xff]
          %v1617 = vld [vmem:[#allocation2 + $0x18] sm:$0xff]
          %v1618 = vld [vmem:[#allocation2 + $0x20] sm:$0xff]
          %v1619 = vld [vmem:[#allocation2 + $0x28] sm:$0xff]
          %v1620 = vld [vmem:[#allocation2 + $0x30] sm:$0xff]
          %v1621 = vld [vmem:[#allocation2 + $0x38] sm:$0xff]
          %v1622 = vld [vmem:[#allocation2 + $0x40] sm:$0xff]
          %v1623 = vld [vmem:[#allocation2 + $0x48] sm:$0xff]
          %v1624 = vld [vmem:[#allocation2 + $0x50] sm:$0xff]
          %v1625 = vld [vmem:[#allocation2 + $0x58] sm:$0xff]
          %v1626 = vld [vmem:[#allocation2 + $0x60] sm:$0xff]
          %v1627 = vld [vmem:[#allocation2 + $0x68] sm:$0xff]
          %v1628 = vld [vmem:[#allocation2 + $0x70] sm:$0xff]
          %v1629 = vld [vmem:[#allocation2 + $0x78] sm:$0xff]
          %v1630 = vld [vmem:[#allocation2 + $0x80] sm:$0xff]
          %v1631 = vld [vmem:[#allocation2 + $0x88] sm:$0xff]
          %v1632 = vld [vmem:[#allocation2 + $0x90] sm:$0xff]
          %v1633 = vld [vmem:[#allocation2 + $0x98] sm:$0xff]
          %v1634 = vld [vmem:[#allocation2 + $0xa0] sm:$0xff]
          %v1635 = vld [vmem:[#allocation2 + $0xa8] sm:$0xff]
          %v1636 = vld [vmem:[#allocation2 + $0xb0] sm:$0xff]
          %v1637 = vld [vmem:[#allocation2 + $0xb8] sm:$0xff]
          %v1638 = vld [vmem:[#allocation2 + $0xc0] sm:$0xff]
          %v1639 = vld [vmem:[#allocation2 + $0xc8] sm:$0xff]
          %v1640 = vld [vmem:[#allocation2 + $0xd0] sm:$0xff]
          %v1641 = vld [vmem:[#allocation2 + $0xd8] sm:$0xff]
          %v1642 = vld [vmem:[#allocation2 + $0xe0] sm:$0xff]
          %v1643 = vld [vmem:[#allocation2 + $0xe8] sm:$0xff]
          %v1644 = vld [vmem:[#allocation2 + $0xf0] sm:$0xff]
          %v1645 = vld [vmem:[#allocation2 + $0xf8] sm:$0xff]
          %v1646 = vld [vmem:[%s532] sm:$0xf]
          %v1647 = vld [vmem:[%s532 + $0x4] sm:$0xf]
          %v1648 = vld [vmem:[%s532 + $0x8] sm:$0xf]
          %v1649 = vld [vmem:[%s532 + $0xc] sm:$0xf]
          %v1650 = vld [vmem:[%s532 + $0x10] sm:$0xf]
          %v1651 = vld [vmem:[%s532 + $0x14] sm:$0xf]
          %v1652 = vld [vmem:[%s532 + $0x18] sm:$0xf]
          %v1653 = vld [vmem:[%s532 + $0x1c] sm:$0xf]
          %v1654 = vld [vmem:[%s532 + $0x20] sm:$0xf]
          %v1655 = vld [vmem:[%s532 + $0x24] sm:$0xf]
          %v1656 = vld [vmem:[%s532 + $0x28] sm:$0xf]
          %v1657 = vld [vmem:[%s532 + $0x2c] sm:$0xf]
          %v1658 = vld [vmem:[%s532 + $0x30] sm:$0xf]
          %v1659 = vld [vmem:[%s532 + $0x34] sm:$0xf]
          %v1660 = vld [vmem:[%s532 + $0x38] sm:$0xf]
          %v1661 = vld [vmem:[%s532 + $0x3c] sm:$0xf]
          %v1662 = vld [vmem:[%s532 + $0x40] sm:$0xf]
          %v1663 = vld [vmem:[%s532 + $0x44] sm:$0xf]
          %v1664 = vld [vmem:[%s532 + $0x48] sm:$0xf]
          %v1665 = vld [vmem:[%s532 + $0x4c] sm:$0xf]
          %v1666 = vld [vmem:[%s532 + $0x50] sm:$0xf]
          %v1667 = vld [vmem:[%s532 + $0x54] sm:$0xf]
          %v1668 = vld [vmem:[%s532 + $0x58] sm:$0xf]
          %v1669 = vld [vmem:[%s532 + $0x5c] sm:$0xf]
          %v1670 = vld [vmem:[%s532 + $0x60] sm:$0xf]
          %v1671 = vld [vmem:[%s532 + $0x64] sm:$0xf]
          %v1672 = vld [vmem:[%s532 + $0x68] sm:$0xf]
          %v1673 = vld [vmem:[%s532 + $0x6c] sm:$0xf]
          %v1674 = vld [vmem:[%s532 + $0x70] sm:$0xf]
          %v1675 = vld [vmem:[%s532 + $0x74] sm:$0xf]
          %v1676 = vld [vmem:[%s532 + $0x78] sm:$0xf]
          %v1677 = vld [vmem:[%s532 + $0x7c] sm:$0xf]
          %v1678 = vld [vmem:[%s532 + $0x80] sm:$0xf]
          %v1679 = vld [vmem:[%s532 + $0x84] sm:$0xf]
          %v1680 = vld [vmem:[%s532 + $0x88] sm:$0xf]
          %v1681 = vld [vmem:[%s532 + $0x8c] sm:$0xf]
          %v1682 = vld [vmem:[%s532 + $0x90] sm:$0xf]
          %v1683 = vld [vmem:[%s532 + $0x94] sm:$0xf]
          %v1684 = vld [vmem:[%s532 + $0x98] sm:$0xf]
          %v1685 = vld [vmem:[%s532 + $0x9c] sm:$0xf]
          %v1686 = vld [vmem:[%s532 + $0xa0] sm:$0xf]
          %v1687 = vld [vmem:[%s532 + $0xa4] sm:$0xf]
          %v1688 = vld [vmem:[%s532 + $0xa8] sm:$0xf]
          %v1689 = vld [vmem:[%s532 + $0xac] sm:$0xf]
          %v1690 = vld [vmem:[%s532 + $0xb0] sm:$0xf]
          %v1691 = vld [vmem:[%s532 + $0xb4] sm:$0xf]
          %v1692 = vld [vmem:[%s532 + $0xb8] sm:$0xf]
          %v1693 = vld [vmem:[%s532 + $0xbc] sm:$0xf]
          %v1694 = vld [vmem:[%s532 + $0xc0] sm:$0xf]
          %v1695 = vld [vmem:[%s532 + $0xc4] sm:$0xf]
          %v1696 = vld [vmem:[%s532 + $0xc8] sm:$0xf]
          %v1697 = vld [vmem:[%s532 + $0xcc] sm:$0xf]
          %v1698 = vld [vmem:[%s532 + $0xd0] sm:$0xf]
          %v1699 = vld [vmem:[%s532 + $0xd4] sm:$0xf]
          %v1700 = vld [vmem:[%s532 + $0xd8] sm:$0xf]
          %v1701 = vld [vmem:[%s532 + $0xdc] sm:$0xf]
          %v1702 = vld [vmem:[%s532 + $0xe0] sm:$0xf]
          %v1703 = vld [vmem:[%s532 + $0xe4] sm:$0xf]
          %v1704 = vld [vmem:[%s532 + $0xe8] sm:$0xf]
          %v1705 = vld [vmem:[%s532 + $0xec] sm:$0xf]
          %v1706 = vld [vmem:[%s532 + $0xf0] sm:$0xf]
          %v1707 = vld [vmem:[%s532 + $0xf4] sm:$0xf]
          %v1708 = vld [vmem:[%s532 + $0xf8] sm:$0xf]
          %v1709 = vld [vmem:[%s532 + $0xfc] sm:$0xf]
          %v1710 = vld [vmem:[%s532 + $0x100] sm:$0xf]
          %v1711 = vld [vmem:[%s532 + $0x104] sm:$0xf]
          %v1712 = vld [vmem:[%s532 + $0x108] sm:$0xf]
          %v1713 = vld [vmem:[%s532 + $0x10c] sm:$0xf]
          %v1714 = vld [vmem:[%s532 + $0x110] sm:$0xf]
          %v1715 = vld [vmem:[%s532 + $0x114] sm:$0xf]
          %v1716 = vld [vmem:[%s532 + $0x118] sm:$0xf]
          %v1717 = vld [vmem:[%s532 + $0x11c] sm:$0xf]
          %v1718 = vld [vmem:[%s532 + $0x120] sm:$0xf]
          %v1719 = vld [vmem:[%s532 + $0x124] sm:$0xf]
          %v1720 = vld [vmem:[%s532 + $0x128] sm:$0xf]
          %v1721 = vld [vmem:[%s532 + $0x12c] sm:$0xf]
          %v1722 = vld [vmem:[%s532 + $0x130] sm:$0xf]
          %v1723 = vld [vmem:[%s532 + $0x134] sm:$0xf]
          %v1724 = vld [vmem:[%s532 + $0x138] sm:$0xf]
          %v1725 = vld [vmem:[%s532 + $0x13c] sm:$0xf]
          %v1726 = vld [vmem:[%s532 + $0x140] sm:$0xf]
          %v1727 = vld [vmem:[%s532 + $0x144] sm:$0xf]
          %v1728 = vld [vmem:[%s532 + $0x148] sm:$0xf]
          %v1729 = vld [vmem:[%s532 + $0x14c] sm:$0xf]
          %v1730 = vld [vmem:[%s532 + $0x150] sm:$0xf]
          %v1731 = vld [vmem:[%s532 + $0x154] sm:$0xf]
          %v1732 = vld [vmem:[%s532 + $0x158] sm:$0xf]
          %v1733 = vld [vmem:[%s532 + $0x15c] sm:$0xf]
          %v1734 = vld [vmem:[%s532 + $0x160] sm:$0xf]
          %v1735 = vld [vmem:[%s532 + $0x164] sm:$0xf]
          %v1736 = vld [vmem:[%s532 + $0x168] sm:$0xf]
          %v1737 = vld [vmem:[%s532 + $0x16c] sm:$0xf]
          %v1738 = vld [vmem:[%s532 + $0x170] sm:$0xf]
          %v1739 = vld [vmem:[%s532 + $0x174] sm:$0xf]
          %v1740 = vld [vmem:[%s532 + $0x178] sm:$0xf]
          %v1741 = vld [vmem:[%s532 + $0x17c] sm:$0xf]
          %v1742 = vld [vmem:[%s532 + $0x180] sm:$0xf]
          %v1743 = vld [vmem:[%s532 + $0x184] sm:$0xf]
          %v1744 = vld [vmem:[%s532 + $0x188] sm:$0xf]
          %v1745 = vld [vmem:[%s532 + $0x18c] sm:$0xf]
          %v1746 = vld [vmem:[%s532 + $0x190] sm:$0xf]
          %v1747 = vld [vmem:[%s532 + $0x194] sm:$0xf]
          %v1748 = vld [vmem:[%s532 + $0x198] sm:$0xf]
          %v1749 = vld [vmem:[%s532 + $0x19c] sm:$0xf]
          %v1750 = vld [vmem:[%s532 + $0x1a0] sm:$0xf]
          %v1751 = vld [vmem:[%s532 + $0x1a4] sm:$0xf]
          %v1752 = vld [vmem:[%s532 + $0x1a8] sm:$0xf]
          %v1753 = vld [vmem:[%s532 + $0x1ac] sm:$0xf]
          %v1754 = vld [vmem:[%s532 + $0x1b0] sm:$0xf]
          %v1755 = vld [vmem:[%s532 + $0x1b4] sm:$0xf]
          %v1756 = vld [vmem:[%s532 + $0x1b8] sm:$0xf]
          %v1757 = vld [vmem:[%s532 + $0x1bc] sm:$0xf]
          %v1758 = vld [vmem:[%s532 + $0x1c0] sm:$0xf]
          %v1759 = vld [vmem:[%s532 + $0x1c4] sm:$0xf]
          %v1760 = vld [vmem:[%s532 + $0x1c8] sm:$0xf]
          %v1761 = vld [vmem:[%s532 + $0x1cc] sm:$0xf]
          %v1762 = vld [vmem:[%s532 + $0x1d0] sm:$0xf]
          %v1763 = vld [vmem:[%s532 + $0x1d4] sm:$0xf]
          %v1764 = vld [vmem:[%s532 + $0x1d8] sm:$0xf]
          %v1765 = vld [vmem:[%s532 + $0x1dc] sm:$0xf]
          %v1766 = vld [vmem:[%s532 + $0x1e0] sm:$0xf]
          %v1767 = vld [vmem:[%s532 + $0x1e4] sm:$0xf]
          %v1768 = vld [vmem:[%s532 + $0x1e8] sm:$0xf]
          %v1769 = vld [vmem:[%s532 + $0x1ec] sm:$0xf]
          %v1770 = vld [vmem:[%s532 + $0x1f0] sm:$0xf]
          %v1771 = vld [vmem:[%s532 + $0x1f4] sm:$0xf]
          %v1772 = vld [vmem:[%s532 + $0x1f8] sm:$0xf]
          %v1773 = vld [vmem:[%s532 + $0x1fc] sm:$0xf]
          %v1902 = vunpack.c.l.b16 %v1646
          %v1903 = vunpack.c.l.b16 %v1647
          %v1904 = vunpack.c.l.b16 %v1648
          %v1905 = vunpack.c.l.b16 %v1649
          %v1906 = vunpack.c.l.b16 %v1650
          %v1907 = vunpack.c.l.b16 %v1651
          %v1908 = vunpack.c.l.b16 %v1652
          %v1909 = vunpack.c.l.b16 %v1653
          %v1910 = vunpack.c.l.b16 %v1654
          %v1911 = vunpack.c.l.b16 %v1655
          %v1912 = vunpack.c.l.b16 %v1656
          %v1913 = vunpack.c.l.b16 %v1657
          %v1914 = vunpack.c.l.b16 %v1658
          %v1915 = vunpack.c.l.b16 %v1659
          %v1916 = vunpack.c.l.b16 %v1660
          %v1917 = vunpack.c.l.b16 %v1661
          %v1918 = vunpack.c.l.b16 %v1662
          %v1919 = vunpack.c.l.b16 %v1663
          %v1920 = vunpack.c.l.b16 %v1664
          %v1921 = vunpack.c.l.b16 %v1665
          %v1922 = vunpack.c.l.b16 %v1666
          %v1923 = vunpack.c.l.b16 %v1667
          %v1924 = vunpack.c.l.b16 %v1668
          %v1925 = vunpack.c.l.b16 %v1669
          %v1926 = vunpack.c.l.b16 %v1670
          %v1927 = vunpack.c.l.b16 %v1671
          %v1928 = vunpack.c.l.b16 %v1672
          %v1929 = vunpack.c.l.b16 %v1673
          %v1930 = vunpack.c.l.b16 %v1674
          %v1931 = vunpack.c.l.b16 %v1675
          %v1932 = vunpack.c.l.b16 %v1676
          %v1933 = vunpack.c.l.b16 %v1677
          %v1934 = vunpack.c.l.b16 %v1678
          %v1935 = vunpack.c.l.b16 %v1679
          %v1936 = vunpack.c.l.b16 %v1680
          %v1937 = vunpack.c.l.b16 %v1681
          %v1938 = vunpack.c.l.b16 %v1682
          %v1939 = vunpack.c.l.b16 %v1683
          %v1940 = vunpack.c.l.b16 %v1684
          %v1941 = vunpack.c.l.b16 %v1685
          %v1942 = vunpack.c.l.b16 %v1686
          %v1943 = vunpack.c.l.b16 %v1687
          %v1944 = vunpack.c.l.b16 %v1688
          %v1945 = vunpack.c.l.b16 %v1689
          %v1946 = vunpack.c.l.b16 %v1690
          %v1947 = vunpack.c.l.b16 %v1691
          %v1948 = vunpack.c.l.b16 %v1692
          %v1949 = vunpack.c.l.b16 %v1693
          %v1950 = vunpack.c.l.b16 %v1694
          %v1951 = vunpack.c.l.b16 %v1695
          %v1952 = vunpack.c.l.b16 %v1696
          %v1953 = vunpack.c.l.b16 %v1697
          %v1954 = vunpack.c.l.b16 %v1698
          %v1955 = vunpack.c.l.b16 %v1699
          %v1956 = vunpack.c.l.b16 %v1700
          %v1957 = vunpack.c.l.b16 %v1701
          %v1958 = vunpack.c.l.b16 %v1702
          %v1959 = vunpack.c.l.b16 %v1703
          %v1960 = vunpack.c.l.b16 %v1704
          %v1961 = vunpack.c.l.b16 %v1705
          %v1962 = vunpack.c.l.b16 %v1706
          %v1963 = vunpack.c.l.b16 %v1707
          %v1964 = vunpack.c.l.b16 %v1708
          %v1965 = vunpack.c.l.b16 %v1709
          %v1966 = vunpack.c.l.b16 %v1710
          %v1967 = vunpack.c.l.b16 %v1711
          %v1968 = vunpack.c.l.b16 %v1712
          %v1969 = vunpack.c.l.b16 %v1713
          %v1970 = vunpack.c.l.b16 %v1714
          %v1971 = vunpack.c.l.b16 %v1715
          %v1972 = vunpack.c.l.b16 %v1716
          %v1973 = vunpack.c.l.b16 %v1717
          %v1974 = vunpack.c.l.b16 %v1718
          %v1975 = vunpack.c.l.b16 %v1719
          %v1976 = vunpack.c.l.b16 %v1720
          %v1977 = vunpack.c.l.b16 %v1721
          %v1978 = vunpack.c.l.b16 %v1722
          %v1979 = vunpack.c.l.b16 %v1723
          %v1980 = vunpack.c.l.b16 %v1724
          %v1981 = vunpack.c.l.b16 %v1725
          %v1982 = vunpack.c.l.b16 %v1726
          %v1983 = vunpack.c.l.b16 %v1727
          %v1984 = vunpack.c.l.b16 %v1728
          %v1985 = vunpack.c.l.b16 %v1729
          %v1986 = vunpack.c.l.b16 %v1730
          %v1987 = vunpack.c.l.b16 %v1731
          %v1988 = vunpack.c.l.b16 %v1732
          %v1989 = vunpack.c.l.b16 %v1733
          %v1990 = vunpack.c.l.b16 %v1734
          %v1991 = vunpack.c.l.b16 %v1735
          %v1992 = vunpack.c.l.b16 %v1736
          %v1993 = vunpack.c.l.b16 %v1737
          %v1994 = vunpack.c.l.b16 %v1738
          %v1995 = vunpack.c.l.b16 %v1739
          %v1996 = vunpack.c.l.b16 %v1740
          %v1997 = vunpack.c.l.b16 %v1741
          %v1998 = vunpack.c.l.b16 %v1742
          %v1999 = vunpack.c.l.b16 %v1743
          %v2000 = vunpack.c.l.b16 %v1744
          %v2001 = vunpack.c.l.b16 %v1745
          %v2002 = vunpack.c.l.b16 %v1746
          %v2003 = vunpack.c.l.b16 %v1747
          %v2004 = vunpack.c.l.b16 %v1748
          %v2005 = vunpack.c.l.b16 %v1749
          %v2006 = vunpack.c.l.b16 %v1750
          %v2007 = vunpack.c.l.b16 %v1751
          %v2008 = vunpack.c.l.b16 %v1752
          %v2009 = vunpack.c.l.b16 %v1753
          %v2010 = vunpack.c.l.b16 %v1754
          %v2011 = vunpack.c.l.b16 %v1755
          %v2012 = vunpack.c.l.b16 %v1756
          %v2013 = vunpack.c.l.b16 %v1757
          %v2014 = vunpack.c.l.b16 %v1758
          %v2015 = vunpack.c.l.b16 %v1759
          %v2016 = vunpack.c.l.b16 %v1760
          %v2017 = vunpack.c.l.b16 %v1761
          %v2018 = vunpack.c.l.b16 %v1762
          %v2019 = vunpack.c.l.b16 %v1763
          %v2020 = vunpack.c.l.b16 %v1764
          %v2021 = vunpack.c.l.b16 %v1765
          %v2022 = vunpack.c.l.b16 %v1766
          %v2023 = vunpack.c.l.b16 %v1767
          %v2024 = vunpack.c.l.b16 %v1768
          %v2025 = vunpack.c.l.b16 %v1769
          %v2026 = vunpack.c.l.b16 %v1770
          %v2027 = vunpack.c.l.b16 %v1771
          %v2028 = vunpack.c.l.b16 %v1772
          %v2029 = vunpack.c.l.b16 %v1773
          %v2030 = vpack.c.b16 %v1903, %v1902
          %v2031 = vpack.c.b16 %v1905, %v1904
          %v2032 = vpack.c.b16 %v1907, %v1906
          %v2033 = vpack.c.b16 %v1909, %v1908
          %v2034 = vpack.c.b16 %v1911, %v1910
          %v2035 = vpack.c.b16 %v1913, %v1912
          %v2036 = vpack.c.b16 %v1915, %v1914
          %v2037 = vpack.c.b16 %v1917, %v1916
          %v2038 = vpack.c.b16 %v1919, %v1918
          %v2039 = vpack.c.b16 %v1921, %v1920
          %v2040 = vpack.c.b16 %v1923, %v1922
          %v2041 = vpack.c.b16 %v1925, %v1924
          %v2042 = vpack.c.b16 %v1927, %v1926
          %v2043 = vpack.c.b16 %v1929, %v1928
          %v2044 = vpack.c.b16 %v1931, %v1930
          %v2045 = vpack.c.b16 %v1933, %v1932
          %v2046 = vpack.c.b16 %v1935, %v1934
          %v2047 = vpack.c.b16 %v1937, %v1936
          %v2048 = vpack.c.b16 %v1939, %v1938
          %v2049 = vpack.c.b16 %v1941, %v1940
          %v2050 = vpack.c.b16 %v1943, %v1942
          %v2051 = vpack.c.b16 %v1945, %v1944
          %v2052 = vpack.c.b16 %v1947, %v1946
          %v2053 = vpack.c.b16 %v1949, %v1948
          %v2054 = vpack.c.b16 %v1951, %v1950
          %v2055 = vpack.c.b16 %v1953, %v1952
          %v2056 = vpack.c.b16 %v1955, %v1954
          %v2057 = vpack.c.b16 %v1957, %v1956
          %v2058 = vpack.c.b16 %v1959, %v1958
          %v2059 = vpack.c.b16 %v1961, %v1960
          %v2060 = vpack.c.b16 %v1963, %v1962
          %v2061 = vpack.c.b16 %v1965, %v1964
          %v2062 = vpack.c.b16 %v1967, %v1966
          %v2063 = vpack.c.b16 %v1969, %v1968
          %v2064 = vpack.c.b16 %v1971, %v1970
          %v2065 = vpack.c.b16 %v1973, %v1972
          %v2066 = vpack.c.b16 %v1975, %v1974
          %v2067 = vpack.c.b16 %v1977, %v1976
          %v2068 = vpack.c.b16 %v1979, %v1978
          %v2069 = vpack.c.b16 %v1981, %v1980
          %v2070 = vpack.c.b16 %v1983, %v1982
          %v2071 = vpack.c.b16 %v1985, %v1984
          %v2072 = vpack.c.b16 %v1987, %v1986
          %v2073 = vpack.c.b16 %v1989, %v1988
          %v2074 = vpack.c.b16 %v1991, %v1990
          %v2075 = vpack.c.b16 %v1993, %v1992
          %v2076 = vpack.c.b16 %v1995, %v1994
          %v2077 = vpack.c.b16 %v1997, %v1996
          %v2078 = vpack.c.b16 %v1999, %v1998
          %v2079 = vpack.c.b16 %v2001, %v2000
          %v2080 = vpack.c.b16 %v2003, %v2002
          %v2081 = vpack.c.b16 %v2005, %v2004
          %v2082 = vpack.c.b16 %v2007, %v2006
          %v2083 = vpack.c.b16 %v2009, %v2008
          %v2084 = vpack.c.b16 %v2011, %v2010
          %v2085 = vpack.c.b16 %v2013, %v2012
          %v2086 = vpack.c.b16 %v2015, %v2014
          %v2087 = vpack.c.b16 %v2017, %v2016
          %v2088 = vpack.c.b16 %v2019, %v2018
          %v2089 = vpack.c.b16 %v2021, %v2020
          %v2090 = vpack.c.b16 %v2023, %v2022
          %v2091 = vpack.c.b16 %v2025, %v2024
          %v2092 = vpack.c.b16 %v2027, %v2026
          %v2093 = vpack.c.b16 %v2029, %v2028
          %2158 = vmatprep.subr.bf16.mxu0 0
          %2159 = vmatpush1.bf16.msra.mxu0 %v2037
          %2160 = vmatprep.subr.bf16.mxu0 0
          %2161 = vmatpush1.bf16.msra.mxu0 %v2036
          %2162 = vmatprep.subr.bf16.mxu0 0
          %2163 = vmatpush1.bf16.msra.mxu0 %v2035
          %2164 = vmatprep.subr.bf16.mxu0 0
          %2165 = vmatpush1.bf16.msra.mxu0 %v2034
          %2166 = vmatprep.subr.bf16.mxu0 0
          %2167 = vmatpush1.bf16.msra.mxu0 %v2033
          %2168 = vmatprep.subr.bf16.mxu0 0
          %2169 = vmatpush1.bf16.msra.mxu0 %v2032
          %2170 = vmatprep.subr.bf16.mxu0 0
          %2171 = vmatpush1.bf16.msra.mxu0 %v2031
          %2172 = vmatprep.subr.bf16.mxu0 0
          %2173 = vmatpush1.bf16.msra.mxu0 %v2030
          %2174 = vmatprep.subr.bf16.mxu0 0
          %2175 = vmatpush2.bf16.msra.mxu0 %v2045
          %2176 = vmatprep.subr.bf16.mxu0 0
          %2177 = vmatpush2.bf16.msra.mxu0 %v2044
          %2178 = vmatprep.subr.bf16.mxu0 0
          %2179 = vmatpush2.bf16.msra.mxu0 %v2043
          %2180 = vmatprep.subr.bf16.mxu0 0
          %2181 = vmatpush2.bf16.msra.mxu0 %v2042
          %2182 = vmatprep.subr.bf16.mxu0 0
          %2183 = vmatpush2.bf16.msra.mxu0 %v2041
          %2184 = vmatprep.subr.bf16.mxu0 0
          %2185 = vmatpush2.bf16.msra.mxu0 %v2040
          %2186 = vmatprep.subr.bf16.mxu0 0
          %2187 = vmatpush2.bf16.msra.mxu0 %v2039
          %2188 = vmatprep.subr.bf16.mxu0 0
          %2189 = vmatpush2.bf16.msra.mxu0 %v2038
          %2190 = vmatprep.mubr.bf16.mxu0 %v1487
          %2191 = vmatmul.mubr.bf16.gmra.mxu0 %v1486
          %v2192 = vpop.f32.mrf.mxu0
          %v2193 = vadd.f32 0.0, %v2192
          %v2194 = vpop.f32.mrf.mxu0
          %v2195 = vpop.f32.mrf.mxu0
          %v2196 = vadd.f32 0.0, %v2195
          %v2197 = vpop.f32.mrf.mxu0
          %2198 = vmatprep.mubr.bf16.mxu0 %v1495
          %2199 = vmatmul.mubr.bf16.gmra.mxu0 %v1494
          %v2200 = vpop.f32.mrf.mxu0
          %v2201 = vadd.f32 0.0, %v2200
          %v2202 = vpop.f32.mrf.mxu0
          %v2203 = vpop.f32.mrf.mxu0
          %v2204 = vadd.f32 0.0, %v2203
          %v2205 = vpop.f32.mrf.mxu0
          %2206 = vmatprep.mubr.bf16.mxu0 %v1503
          %2207 = vmatmul.mubr.bf16.gmra.mxu0 %v1502
          %v2208 = vpop.f32.mrf.mxu0
          %v2209 = vadd.f32 0.0, %v2208
          %v2210 = vpop.f32.mrf.mxu0
          %v2211 = vpop.f32.mrf.mxu0
          %v2212 = vadd.f32 0.0, %v2211
          %v2213 = vpop.f32.mrf.mxu0
          %2214 = vmatprep.mubr.bf16.mxu0 %v1511
          %2215 = vmatmul.mubr.bf16.gmra.mxu0 %v1510
          %v2216 = vpop.f32.mrf.mxu0
          %v2217 = vadd.f32 0.0, %v2216
          %v2218 = vpop.f32.mrf.mxu0
          %v2219 = vpop.f32.mrf.mxu0
          %v2220 = vadd.f32 0.0, %v2219
          %v2221 = vpop.f32.mrf.mxu0
          %2222 = vmatprep.mubr.bf16.mxu0 %v1519
          %2223 = vmatmul.mubr.bf16.gmra.mxu0 %v1518
          %v2224 = vpop.f32.mrf.mxu0
          %v2225 = vadd.f32 0.0, %v2224
          %v2226 = vpop.f32.mrf.mxu0
          %v2227 = vpop.f32.mrf.mxu0
          %v2228 = vadd.f32 0.0, %v2227
          %v2229 = vpop.f32.mrf.mxu0
          %2230 = vmatprep.mubr.bf16.mxu0 %v1527
          %2231 = vmatmul.mubr.bf16.gmra.mxu0 %v1526
          %v2232 = vpop.f32.mrf.mxu0
          %v2233 = vadd.f32 0.0, %v2232
          %v2234 = vpop.f32.mrf.mxu0
          %v2235 = vpop.f32.mrf.mxu0
          %v2236 = vadd.f32 0.0, %v2235
          %v2237 = vpop.f32.mrf.mxu0
          %2238 = vmatprep.mubr.bf16.mxu0 %v1535
          %2239 = vmatmul.mubr.bf16.gmra.mxu0 %v1534
          %v2240 = vpop.f32.mrf.mxu0
          %v2241 = vadd.f32 0.0, %v2240
          %v2242 = vpop.f32.mrf.mxu0
          %v2243 = vpop.f32.mrf.mxu0
          %v2244 = vadd.f32 0.0, %v2243
          %v2245 = vpop.f32.mrf.mxu0
          %2246 = vmatprep.mubr.bf16.mxu0 %v1543
          %2247 = vmatmul.mubr.bf16.gmra.mxu0 %v1542
          %v2248 = vpop.f32.mrf.mxu0
          %v2249 = vadd.f32 0.0, %v2248
          %v2250 = vpop.f32.mrf.mxu0
          %v2251 = vpop.f32.mrf.mxu0
          %v2252 = vadd.f32 0.0, %v2251
          %v2253 = vpop.f32.mrf.mxu0
          %2254 = vmatprep.mubr.bf16.mxu0 %v1551
          %2255 = vmatmul.mubr.bf16.gmra.mxu0 %v1550
          %v2256 = vpop.f32.mrf.mxu0
          %v2257 = vadd.f32 0.0, %v2256
          %v2258 = vpop.f32.mrf.mxu0
          %v2259 = vpop.f32.mrf.mxu0
          %v2260 = vadd.f32 0.0, %v2259
          %v2261 = vpop.f32.mrf.mxu0
          %2262 = vmatprep.mubr.bf16.mxu0 %v1559
          %2263 = vmatmul.mubr.bf16.gmra.mxu0 %v1558
          %v2264 = vpop.f32.mrf.mxu0
          %v2265 = vadd.f32 0.0, %v2264
          %v2266 = vpop.f32.mrf.mxu0
          %v2267 = vpop.f32.mrf.mxu0
          %v2268 = vadd.f32 0.0, %v2267
          %v2269 = vpop.f32.mrf.mxu0
          %2270 = vmatprep.mubr.bf16.mxu0 %v1567
          %2271 = vmatmul.mubr.bf16.gmra.mxu0 %v1566
          %v2272 = vpop.f32.mrf.mxu0
          %v2273 = vadd.f32 0.0, %v2272
          %v2274 = vpop.f32.mrf.mxu0
          %v2275 = vpop.f32.mrf.mxu0
          %v2276 = vadd.f32 0.0, %v2275
          %v2277 = vpop.f32.mrf.mxu0
          %2278 = vmatprep.mubr.bf16.mxu0 %v1575
          %2279 = vmatmul.mubr.bf16.gmra.mxu0 %v1574
          %v2280 = vpop.f32.mrf.mxu0
          %v2281 = vadd.f32 0.0, %v2280
          %v2282 = vpop.f32.mrf.mxu0
          %v2283 = vpop.f32.mrf.mxu0
          %v2284 = vadd.f32 0.0, %v2283
          %v2285 = vpop.f32.mrf.mxu0
          %2286 = vmatprep.mubr.bf16.mxu0 %v1583
          %2287 = vmatmul.mubr.bf16.gmra.mxu0 %v1582
          %v2288 = vpop.f32.mrf.mxu0
          %v2289 = vadd.f32 0.0, %v2288
          %v2290 = vpop.f32.mrf.mxu0
          %v2291 = vpop.f32.mrf.mxu0
          %v2292 = vadd.f32 0.0, %v2291
          %v2293 = vpop.f32.mrf.mxu0
          %2294 = vmatprep.mubr.bf16.mxu0 %v1591
          %2295 = vmatmul.mubr.bf16.gmra.mxu0 %v1590
          %v2296 = vpop.f32.mrf.mxu0
          %v2297 = vadd.f32 0.0, %v2296
          %v2298 = vpop.f32.mrf.mxu0
          %v2299 = vpop.f32.mrf.mxu0
          %v2300 = vadd.f32 0.0, %v2299
          %v2301 = vpop.f32.mrf.mxu0
          %2302 = vmatprep.mubr.bf16.mxu0 %v1599
          %2303 = vmatmul.mubr.bf16.gmra.mxu0 %v1598
          %v2304 = vpop.f32.mrf.mxu0
          %v2305 = vadd.f32 0.0, %v2304
          %v2306 = vpop.f32.mrf.mxu0
          %v2307 = vpop.f32.mrf.mxu0
          %v2308 = vadd.f32 0.0, %v2307
          %v2309 = vpop.f32.mrf.mxu0
          %2310 = vmatprep.mubr.bf16.mxu0 %v1607
          %2311 = vmatmul.mubr.bf16.gmra.mxu0 %v1606
          %v2312 = vpop.f32.mrf.mxu0
          %v2313 = vadd.f32 0.0, %v2312
          %v2314 = vpop.f32.mrf.mxu0
          %v2315 = vpop.f32.mrf.mxu0
          %v2316 = vadd.f32 0.0, %v2315
          %v2317 = vpop.f32.mrf.mxu0
          %2318 = vdwg.mxu0
          %2319 = vmatprep.subr.bf16.mxu0 0
          %2320 = vmatpush1.bf16.msra.mxu0 %v2053
          %2321 = vmatprep.subr.bf16.mxu0 0
          %2322 = vmatpush1.bf16.msra.mxu0 %v2052
          %2323 = vmatprep.subr.bf16.mxu0 0
          %2324 = vmatpush1.bf16.msra.mxu0 %v2051
          %2325 = vmatprep.subr.bf16.mxu0 0
          %2326 = vmatpush1.bf16.msra.mxu0 %v2050
          %2327 = vmatprep.subr.bf16.mxu0 0
          %2328 = vmatpush1.bf16.msra.mxu0 %v2049
          %2329 = vmatprep.subr.bf16.mxu0 0
          %2330 = vmatpush1.bf16.msra.mxu0 %v2048
          %2331 = vmatprep.subr.bf16.mxu0 0
          %2332 = vmatpush1.bf16.msra.mxu0 %v2047
          %2333 = vmatprep.subr.bf16.mxu0 0
          %2334 = vmatpush1.bf16.msra.mxu0 %v2046
          %2335 = vmatprep.subr.bf16.mxu0 0
          %2336 = vmatpush2.bf16.msra.mxu0 %v2061
          %2337 = vmatprep.subr.bf16.mxu0 0
          %2338 = vmatpush2.bf16.msra.mxu0 %v2060
          %2339 = vmatprep.subr.bf16.mxu0 0
          %2340 = vmatpush2.bf16.msra.mxu0 %v2059
          %2341 = vmatprep.subr.bf16.mxu0 0
          %2342 = vmatpush2.bf16.msra.mxu0 %v2058
          %2343 = vmatprep.subr.bf16.mxu0 0
          %2344 = vmatpush2.bf16.msra.mxu0 %v2057
          %2345 = vmatprep.subr.bf16.mxu0 0
          %2346 = vmatpush2.bf16.msra.mxu0 %v2056
          %2347 = vmatprep.subr.bf16.mxu0 0
          %2348 = vmatpush2.bf16.msra.mxu0 %v2055
          %2349 = vmatprep.subr.bf16.mxu0 0
          %2350 = vmatpush2.bf16.msra.mxu0 %v2054
          %2351 = vmatprep.mubr.bf16.mxu0 %v1489
          %2352 = vmatmul.mubr.bf16.gmra.mxu0 %v1488
          %v2353 = vpop.f32.mrf.mxu0
          %v2354 = vadd.f32 %v2193, %v2353
          %v2355 = vpop.f32.mrf.mxu0
          %v2356 = vpop.f32.mrf.mxu0
          %v2357 = vadd.f32 %v2196, %v2356
          %v2358 = vpop.f32.mrf.mxu0
          %2359 = vmatprep.mubr.bf16.mxu0 %v1497
          %2360 = vmatmul.mubr.bf16.gmra.mxu0 %v1496
          %v2361 = vpop.f32.mrf.mxu0
          %v2362 = vadd.f32 %v2201, %v2361
          %v2363 = vpop.f32.mrf.mxu0
          %v2364 = vpop.f32.mrf.mxu0
          %v2365 = vadd.f32 %v2204, %v2364
          %v2366 = vpop.f32.mrf.mxu0
          %2367 = vmatprep.mubr.bf16.mxu0 %v1505
          %2368 = vmatmul.mubr.bf16.gmra.mxu0 %v1504
          %v2369 = vpop.f32.mrf.mxu0
          %v2370 = vadd.f32 %v2209, %v2369
          %v2371 = vpop.f32.mrf.mxu0
          %v2372 = vpop.f32.mrf.mxu0
          %v2373 = vadd.f32 %v2212, %v2372
          %v2374 = vpop.f32.mrf.mxu0
          %2375 = vmatprep.mubr.bf16.mxu0 %v1513
          %2376 = vmatmul.mubr.bf16.gmra.mxu0 %v1512
          %v2377 = vpop.f32.mrf.mxu0
          %v2378 = vadd.f32 %v2217, %v2377
          %v2379 = vpop.f32.mrf.mxu0
          %v2380 = vpop.f32.mrf.mxu0
          %v2381 = vadd.f32 %v2220, %v2380
          %v2382 = vpop.f32.mrf.mxu0
          %2383 = vmatprep.mubr.bf16.mxu0 %v1521
          %2384 = vmatmul.mubr.bf16.gmra.mxu0 %v1520
          %v2385 = vpop.f32.mrf.mxu0
          %v2386 = vadd.f32 %v2225, %v2385
          %v2387 = vpop.f32.mrf.mxu0
          %v2388 = vpop.f32.mrf.mxu0
          %v2389 = vadd.f32 %v2228, %v2388
          %v2390 = vpop.f32.mrf.mxu0
          %2391 = vmatprep.mubr.bf16.mxu0 %v1529
          %2392 = vmatmul.mubr.bf16.gmra.mxu0 %v1528
          %v2393 = vpop.f32.mrf.mxu0
          %v2394 = vadd.f32 %v2233, %v2393
          %v2395 = vpop.f32.mrf.mxu0
          %v2396 = vpop.f32.mrf.mxu0
          %v2397 = vadd.f32 %v2236, %v2396
          %v2398 = vpop.f32.mrf.mxu0
          %2399 = vmatprep.mubr.bf16.mxu0 %v1537
          %2400 = vmatmul.mubr.bf16.gmra.mxu0 %v1536
          %v2401 = vpop.f32.mrf.mxu0
          %v2402 = vadd.f32 %v2241, %v2401
          %v2403 = vpop.f32.mrf.mxu0
          %v2404 = vpop.f32.mrf.mxu0
          %v2405 = vadd.f32 %v2244, %v2404
          %v2406 = vpop.f32.mrf.mxu0
          %2407 = vmatprep.mubr.bf16.mxu0 %v1545
          %2408 = vmatmul.mubr.bf16.gmra.mxu0 %v1544
          %v2409 = vpop.f32.mrf.mxu0
          %v2410 = vadd.f32 %v2249, %v2409
          %v2411 = vpop.f32.mrf.mxu0
          %v2412 = vpop.f32.mrf.mxu0
          %v2413 = vadd.f32 %v2252, %v2412
          %v2414 = vpop.f32.mrf.mxu0
          %2415 = vmatprep.mubr.bf16.mxu0 %v1553
          %2416 = vmatmul.mubr.bf16.gmra.mxu0 %v1552
          %v2417 = vpop.f32.mrf.mxu0
          %v2418 = vadd.f32 %v2257, %v2417
          %v2419 = vpop.f32.mrf.mxu0
          %v2420 = vpop.f32.mrf.mxu0
          %v2421 = vadd.f32 %v2260, %v2420
          %v2422 = vpop.f32.mrf.mxu0
          %2423 = vmatprep.mubr.bf16.mxu0 %v1561
          %2424 = vmatmul.mubr.bf16.gmra.mxu0 %v1560
          %v2425 = vpop.f32.mrf.mxu0
          %v2426 = vadd.f32 %v2265, %v2425
          %v2427 = vpop.f32.mrf.mxu0
          %v2428 = vpop.f32.mrf.mxu0
          %v2429 = vadd.f32 %v2268, %v2428
          %v2430 = vpop.f32.mrf.mxu0
          %2431 = vmatprep.mubr.bf16.mxu0 %v1569
          %2432 = vmatmul.mubr.bf16.gmra.mxu0 %v1568
          %v2433 = vpop.f32.mrf.mxu0
          %v2434 = vadd.f32 %v2273, %v2433
          %v2435 = vpop.f32.mrf.mxu0
          %v2436 = vpop.f32.mrf.mxu0
          %v2437 = vadd.f32 %v2276, %v2436
          %v2438 = vpop.f32.mrf.mxu0
          %2439 = vmatprep.mubr.bf16.mxu0 %v1577
          %2440 = vmatmul.mubr.bf16.gmra.mxu0 %v1576
          %v2441 = vpop.f32.mrf.mxu0
          %v2442 = vadd.f32 %v2281, %v2441
          %v2443 = vpop.f32.mrf.mxu0
          %v2444 = vpop.f32.mrf.mxu0
          %v2445 = vadd.f32 %v2284, %v2444
          %v2446 = vpop.f32.mrf.mxu0
          %2447 = vmatprep.mubr.bf16.mxu0 %v1585
          %2448 = vmatmul.mubr.bf16.gmra.mxu0 %v1584
          %v2449 = vpop.f32.mrf.mxu0
          %v2450 = vadd.f32 %v2289, %v2449
          %v2451 = vpop.f32.mrf.mxu0
          %v2452 = vpop.f32.mrf.mxu0
          %v2453 = vadd.f32 %v2292, %v2452
          %v2454 = vpop.f32.mrf.mxu0
          %2455 = vmatprep.mubr.bf16.mxu0 %v1593
          %2456 = vmatmul.mubr.bf16.gmra.mxu0 %v1592
          %v2457 = vpop.f32.mrf.mxu0
          %v2458 = vadd.f32 %v2297, %v2457
          %v2459 = vpop.f32.mrf.mxu0
          %v2460 = vpop.f32.mrf.mxu0
          %v2461 = vadd.f32 %v2300, %v2460
          %v2462 = vpop.f32.mrf.mxu0
          %2463 = vmatprep.mubr.bf16.mxu0 %v1601
          %2464 = vmatmul.mubr.bf16.gmra.mxu0 %v1600
          %v2465 = vpop.f32.mrf.mxu0
          %v2466 = vadd.f32 %v2305, %v2465
          %v2467 = vpop.f32.mrf.mxu0
          %v2468 = vpop.f32.mrf.mxu0
          %v2469 = vadd.f32 %v2308, %v2468
          %v2470 = vpop.f32.mrf.mxu0
          %2471 = vmatprep.mubr.bf16.mxu0 %v1609
          %2472 = vmatmul.mubr.bf16.gmra.mxu0 %v1608
          %v2473 = vpop.f32.mrf.mxu0
          %v2474 = vadd.f32 %v2313, %v2473
          %v2475 = vpop.f32.mrf.mxu0
          %v2476 = vpop.f32.mrf.mxu0
          %v2477 = vadd.f32 %v2316, %v2476
          %v2478 = vpop.f32.mrf.mxu0
          %2479 = vdwg.mxu0
          %2480 = vmatprep.subr.bf16.mxu0 0
          %2481 = vmatpush1.bf16.msra.mxu0 %v2069
          %2482 = vmatprep.subr.bf16.mxu0 0
          %2483 = vmatpush1.bf16.msra.mxu0 %v2068
          %2484 = vmatprep.subr.bf16.mxu0 0
          %2485 = vmatpush1.bf16.msra.mxu0 %v2067
          %2486 = vmatprep.subr.bf16.mxu0 0
          %2487 = vmatpush1.bf16.msra.mxu0 %v2066
          %2488 = vmatprep.subr.bf16.mxu0 0
          %2489 = vmatpush1.bf16.msra.mxu0 %v2065
          %2490 = vmatprep.subr.bf16.mxu0 0
          %2491 = vmatpush1.bf16.msra.mxu0 %v2064
          %2492 = vmatprep.subr.bf16.mxu0 0
          %2493 = vmatpush1.bf16.msra.mxu0 %v2063
          %2494 = vmatprep.subr.bf16.mxu0 0
          %2495 = vmatpush1.bf16.msra.mxu0 %v2062
          %2496 = vmatprep.subr.bf16.mxu0 0
          %2497 = vmatpush2.bf16.msra.mxu0 %v2077
          %2498 = vmatprep.subr.bf16.mxu0 0
          %2499 = vmatpush2.bf16.msra.mxu0 %v2076
          %2500 = vmatprep.subr.bf16.mxu0 0
          %2501 = vmatpush2.bf16.msra.mxu0 %v2075
          %2502 = vmatprep.subr.bf16.mxu0 0
          %2503 = vmatpush2.bf16.msra.mxu0 %v2074
          %2504 = vmatprep.subr.bf16.mxu0 0
          %2505 = vmatpush2.bf16.msra.mxu0 %v2073
          %2506 = vmatprep.subr.bf16.mxu0 0
          %2507 = vmatpush2.bf16.msra.mxu0 %v2072
          %2508 = vmatprep.subr.bf16.mxu0 0
          %2509 = vmatpush2.bf16.msra.mxu0 %v2071
          %2510 = vmatprep.subr.bf16.mxu0 0
          %2511 = vmatpush2.bf16.msra.mxu0 %v2070
          %2512 = vmatprep.mubr.bf16.mxu0 %v1491
          %2513 = vmatmul.mubr.bf16.gmra.mxu0 %v1490
          %v2514 = vpop.f32.mrf.mxu0
          %v2515 = vadd.f32 %v2354, %v2514
          %v2516 = vpop.f32.mrf.mxu0
          %v2517 = vpop.f32.mrf.mxu0
          %v2518 = vadd.f32 %v2357, %v2517
          %v2519 = vpop.f32.mrf.mxu0
          %2520 = vmatprep.mubr.bf16.mxu0 %v1499
          %2521 = vmatmul.mubr.bf16.gmra.mxu0 %v1498
          %v2522 = vpop.f32.mrf.mxu0
          %v2523 = vadd.f32 %v2362, %v2522
          %v2524 = vpop.f32.mrf.mxu0
          %v2525 = vpop.f32.mrf.mxu0
          %v2526 = vadd.f32 %v2365, %v2525
          %v2527 = vpop.f32.mrf.mxu0
          %2528 = vmatprep.mubr.bf16.mxu0 %v1507
          %2529 = vmatmul.mubr.bf16.gmra.mxu0 %v1506
          %v2530 = vpop.f32.mrf.mxu0
          %v2531 = vadd.f32 %v2370, %v2530
          %v2532 = vpop.f32.mrf.mxu0
          %v2533 = vpop.f32.mrf.mxu0
          %v2534 = vadd.f32 %v2373, %v2533
          %v2535 = vpop.f32.mrf.mxu0
          %2536 = vmatprep.mubr.bf16.mxu0 %v1515
          %2537 = vmatmul.mubr.bf16.gmra.mxu0 %v1514
          %v2538 = vpop.f32.mrf.mxu0
          %v2539 = vadd.f32 %v2378, %v2538
          %v2540 = vpop.f32.mrf.mxu0
          %v2541 = vpop.f32.mrf.mxu0
          %v2542 = vadd.f32 %v2381, %v2541
          %v2543 = vpop.f32.mrf.mxu0
          %2544 = vmatprep.mubr.bf16.mxu0 %v1523
          %2545 = vmatmul.mubr.bf16.gmra.mxu0 %v1522
          %v2546 = vpop.f32.mrf.mxu0
          %v2547 = vadd.f32 %v2386, %v2546
          %v2548 = vpop.f32.mrf.mxu0
          %v2549 = vpop.f32.mrf.mxu0
          %v2550 = vadd.f32 %v2389, %v2549
          %v2551 = vpop.f32.mrf.mxu0
          %2552 = vmatprep.mubr.bf16.mxu0 %v1531
          %2553 = vmatmul.mubr.bf16.gmra.mxu0 %v1530
          %v2554 = vpop.f32.mrf.mxu0
          %v2555 = vadd.f32 %v2394, %v2554
          %v2556 = vpop.f32.mrf.mxu0
          %v2557 = vpop.f32.mrf.mxu0
          %v2558 = vadd.f32 %v2397, %v2557
          %v2559 = vpop.f32.mrf.mxu0
          %2560 = vmatprep.mubr.bf16.mxu0 %v1539
          %2561 = vmatmul.mubr.bf16.gmra.mxu0 %v1538
          %v2562 = vpop.f32.mrf.mxu0
          %v2563 = vadd.f32 %v2402, %v2562
          %v2564 = vpop.f32.mrf.mxu0
          %v2565 = vpop.f32.mrf.mxu0
          %v2566 = vadd.f32 %v2405, %v2565
          %v2567 = vpop.f32.mrf.mxu0
          %2568 = vmatprep.mubr.bf16.mxu0 %v1547
          %2569 = vmatmul.mubr.bf16.gmra.mxu0 %v1546
          %v2570 = vpop.f32.mrf.mxu0
          %v2571 = vadd.f32 %v2410, %v2570
          %v2572 = vpop.f32.mrf.mxu0
          %v2573 = vpop.f32.mrf.mxu0
          %v2574 = vadd.f32 %v2413, %v2573
          %v2575 = vpop.f32.mrf.mxu0
          %2576 = vmatprep.mubr.bf16.mxu0 %v1555
          %2577 = vmatmul.mubr.bf16.gmra.mxu0 %v1554
          %v2578 = vpop.f32.mrf.mxu0
          %v2579 = vadd.f32 %v2418, %v2578
          %v2580 = vpop.f32.mrf.mxu0
          %v2581 = vpop.f32.mrf.mxu0
          %v2582 = vadd.f32 %v2421, %v2581
          %v2583 = vpop.f32.mrf.mxu0
          %2584 = vmatprep.mubr.bf16.mxu0 %v1563
          %2585 = vmatmul.mubr.bf16.gmra.mxu0 %v1562
          %v2586 = vpop.f32.mrf.mxu0
          %v2587 = vadd.f32 %v2426, %v2586
          %v2588 = vpop.f32.mrf.mxu0
          %v2589 = vpop.f32.mrf.mxu0
          %v2590 = vadd.f32 %v2429, %v2589
          %v2591 = vpop.f32.mrf.mxu0
          %2592 = vmatprep.mubr.bf16.mxu0 %v1571
          %2593 = vmatmul.mubr.bf16.gmra.mxu0 %v1570
          %v2594 = vpop.f32.mrf.mxu0
          %v2595 = vadd.f32 %v2434, %v2594
          %v2596 = vpop.f32.mrf.mxu0
          %v2597 = vpop.f32.mrf.mxu0
          %v2598 = vadd.f32 %v2437, %v2597
          %v2599 = vpop.f32.mrf.mxu0
          %2600 = vmatprep.mubr.bf16.mxu0 %v1579
          %2601 = vmatmul.mubr.bf16.gmra.mxu0 %v1578
          %v2602 = vpop.f32.mrf.mxu0
          %v2603 = vadd.f32 %v2442, %v2602
          %v2604 = vpop.f32.mrf.mxu0
          %v2605 = vpop.f32.mrf.mxu0
          %v2606 = vadd.f32 %v2445, %v2605
          %v2607 = vpop.f32.mrf.mxu0
          %2608 = vmatprep.mubr.bf16.mxu0 %v1587
          %2609 = vmatmul.mubr.bf16.gmra.mxu0 %v1586
          %v2610 = vpop.f32.mrf.mxu0
          %v2611 = vadd.f32 %v2450, %v2610
          %v2612 = vpop.f32.mrf.mxu0
          %v2613 = vpop.f32.mrf.mxu0
          %v2614 = vadd.f32 %v2453, %v2613
          %v2615 = vpop.f32.mrf.mxu0
          %2616 = vmatprep.mubr.bf16.mxu0 %v1595
          %2617 = vmatmul.mubr.bf16.gmra.mxu0 %v1594
          %v2618 = vpop.f32.mrf.mxu0
          %v2619 = vadd.f32 %v2458, %v2618
          %v2620 = vpop.f32.mrf.mxu0
          %v2621 = vpop.f32.mrf.mxu0
          %v2622 = vadd.f32 %v2461, %v2621
          %v2623 = vpop.f32.mrf.mxu0
          %2624 = vmatprep.mubr.bf16.mxu0 %v1603
          %2625 = vmatmul.mubr.bf16.gmra.mxu0 %v1602
          %v2626 = vpop.f32.mrf.mxu0
          %v2627 = vadd.f32 %v2466, %v2626
          %v2628 = vpop.f32.mrf.mxu0
          %v2629 = vpop.f32.mrf.mxu0
          %v2630 = vadd.f32 %v2469, %v2629
          %v2631 = vpop.f32.mrf.mxu0
          %2632 = vmatprep.mubr.bf16.mxu0 %v1611
          %2633 = vmatmul.mubr.bf16.gmra.mxu0 %v1610
          %v2634 = vpop.f32.mrf.mxu0
          %v2635 = vadd.f32 %v2474, %v2634
          %v2636 = vpop.f32.mrf.mxu0
          %v2637 = vpop.f32.mrf.mxu0
          %v2638 = vadd.f32 %v2477, %v2637
          %v2639 = vpop.f32.mrf.mxu0
          %2640 = vdwg.mxu0
          %2641 = vmatprep.subr.bf16.mxu0 0
          %2642 = vmatpush1.bf16.msra.mxu0 %v2085
          %2643 = vmatprep.subr.bf16.mxu0 0
          %2644 = vmatpush1.bf16.msra.mxu0 %v2084
          %2645 = vmatprep.subr.bf16.mxu0 0
          %2646 = vmatpush1.bf16.msra.mxu0 %v2083
          %2647 = vmatprep.subr.bf16.mxu0 0
          %2648 = vmatpush1.bf16.msra.mxu0 %v2082
          %2649 = vmatprep.subr.bf16.mxu0 0
          %2650 = vmatpush1.bf16.msra.mxu0 %v2081
          %2651 = vmatprep.subr.bf16.mxu0 0
          %2652 = vmatpush1.bf16.msra.mxu0 %v2080
          %2653 = vmatprep.subr.bf16.mxu0 0
          %2654 = vmatpush1.bf16.msra.mxu0 %v2079
          %2655 = vmatprep.subr.bf16.mxu0 0
          %2656 = vmatpush1.bf16.msra.mxu0 %v2078
          %2657 = vmatprep.subr.bf16.mxu0 0
          %2658 = vmatpush2.bf16.msra.mxu0 %v2093
          %2659 = vmatprep.subr.bf16.mxu0 0
          %2660 = vmatpush2.bf16.msra.mxu0 %v2092
          %2661 = vmatprep.subr.bf16.mxu0 0
          %2662 = vmatpush2.bf16.msra.mxu0 %v2091
          %2663 = vmatprep.subr.bf16.mxu0 0
          %2664 = vmatpush2.bf16.msra.mxu0 %v2090
          %2665 = vmatprep.subr.bf16.mxu0 0
          %2666 = vmatpush2.bf16.msra.mxu0 %v2089
          %2667 = vmatprep.subr.bf16.mxu0 0
          %2668 = vmatpush2.bf16.msra.mxu0 %v2088
          %2669 = vmatprep.subr.bf16.mxu0 0
          %2670 = vmatpush2.bf16.msra.mxu0 %v2087
          %2671 = vmatprep.subr.bf16.mxu0 0
          %2672 = vmatpush2.bf16.msra.mxu0 %v2086
          %2673 = vmatprep.mubr.bf16.mxu0 %v1493
          %2674 = vmatmul.mubr.bf16.gmra.mxu0 %v1492
          %v2675 = vpop.f32.mrf.mxu0
          %v2676 = vadd.f32 %v2515, %v2675
          %v2677 = vpop.f32.mrf.mxu0
          %v2678 = vpop.f32.mrf.mxu0
          %v2679 = vadd.f32 %v2518, %v2678
          %v2680 = vpop.f32.mrf.mxu0
          %2681 = vmatprep.mubr.bf16.mxu0 %v1501
          %2682 = vmatmul.mubr.bf16.gmra.mxu0 %v1500
          %v2683 = vpop.f32.mrf.mxu0
          %v2684 = vadd.f32 %v2523, %v2683
          %v2685 = vpop.f32.mrf.mxu0
          %v2686 = vpop.f32.mrf.mxu0
          %v2687 = vadd.f32 %v2526, %v2686
          %v2688 = vpop.f32.mrf.mxu0
          %2689 = vmatprep.mubr.bf16.mxu0 %v1509
          %2690 = vmatmul.mubr.bf16.gmra.mxu0 %v1508
          %v2691 = vpop.f32.mrf.mxu0
          %v2692 = vadd.f32 %v2531, %v2691
          %v2693 = vpop.f32.mrf.mxu0
          %v2694 = vpop.f32.mrf.mxu0
          %v2695 = vadd.f32 %v2534, %v2694
          %v2696 = vpop.f32.mrf.mxu0
          %2697 = vmatprep.mubr.bf16.mxu0 %v1517
          %2698 = vmatmul.mubr.bf16.gmra.mxu0 %v1516
          %v2699 = vpop.f32.mrf.mxu0
          %v2700 = vadd.f32 %v2539, %v2699
          %v2701 = vpop.f32.mrf.mxu0
          %v2702 = vpop.f32.mrf.mxu0
          %v2703 = vadd.f32 %v2542, %v2702
          %v2704 = vpop.f32.mrf.mxu0
          %2705 = vmatprep.mubr.bf16.mxu0 %v1525
          %2706 = vmatmul.mubr.bf16.gmra.mxu0 %v1524
          %v2707 = vpop.f32.mrf.mxu0
          %v2708 = vadd.f32 %v2547, %v2707
          %v2709 = vpop.f32.mrf.mxu0
          %v2710 = vpop.f32.mrf.mxu0
          %v2711 = vadd.f32 %v2550, %v2710
          %v2712 = vpop.f32.mrf.mxu0
          %2713 = vmatprep.mubr.bf16.mxu0 %v1533
          %2714 = vmatmul.mubr.bf16.gmra.mxu0 %v1532
          %v2715 = vpop.f32.mrf.mxu0
          %v2716 = vadd.f32 %v2555, %v2715
          %v2717 = vpop.f32.mrf.mxu0
          %v2718 = vpop.f32.mrf.mxu0
          %v2719 = vadd.f32 %v2558, %v2718
          %v2720 = vpop.f32.mrf.mxu0
          %2721 = vmatprep.mubr.bf16.mxu0 %v1541
          %2722 = vmatmul.mubr.bf16.gmra.mxu0 %v1540
          %v2723 = vpop.f32.mrf.mxu0
          %v2724 = vadd.f32 %v2563, %v2723
          %v2725 = vpop.f32.mrf.mxu0
          %v2726 = vpop.f32.mrf.mxu0
          %v2727 = vadd.f32 %v2566, %v2726
          %v2728 = vpop.f32.mrf.mxu0
          %2729 = vmatprep.mubr.bf16.mxu0 %v1549
          %2730 = vmatmul.mubr.bf16.gmra.mxu0 %v1548
          %v2731 = vpop.f32.mrf.mxu0
          %v2732 = vadd.f32 %v2571, %v2731
          %v2733 = vpop.f32.mrf.mxu0
          %v2734 = vpop.f32.mrf.mxu0
          %v2735 = vadd.f32 %v2574, %v2734
          %v2736 = vpop.f32.mrf.mxu0
          %2737 = vmatprep.mubr.bf16.mxu0 %v1557
          %2738 = vmatmul.mubr.bf16.gmra.mxu0 %v1556
          %v2739 = vpop.f32.mrf.mxu0
          %v2740 = vadd.f32 %v2579, %v2739
          %v2741 = vpop.f32.mrf.mxu0
          %v2742 = vpop.f32.mrf.mxu0
          %v2743 = vadd.f32 %v2582, %v2742
          %v2744 = vpop.f32.mrf.mxu0
          %2745 = vmatprep.mubr.bf16.mxu0 %v1565
          %2746 = vmatmul.mubr.bf16.gmra.mxu0 %v1564
          %v2747 = vpop.f32.mrf.mxu0
          %v2748 = vadd.f32 %v2587, %v2747
          %v2749 = vpop.f32.mrf.mxu0
          %v2750 = vpop.f32.mrf.mxu0
          %v2751 = vadd.f32 %v2590, %v2750
          %v2752 = vpop.f32.mrf.mxu0
          %2753 = vmatprep.mubr.bf16.mxu0 %v1573
          %2754 = vmatmul.mubr.bf16.gmra.mxu0 %v1572
          %v2755 = vpop.f32.mrf.mxu0
          %v2756 = vadd.f32 %v2595, %v2755
          %v2757 = vpop.f32.mrf.mxu0
          %v2758 = vpop.f32.mrf.mxu0
          %v2759 = vadd.f32 %v2598, %v2758
          %v2760 = vpop.f32.mrf.mxu0
          %2761 = vmatprep.mubr.bf16.mxu0 %v1581
          %2762 = vmatmul.mubr.bf16.gmra.mxu0 %v1580
          %v2763 = vpop.f32.mrf.mxu0
          %v2764 = vadd.f32 %v2603, %v2763
          %v2765 = vpop.f32.mrf.mxu0
          %v2766 = vpop.f32.mrf.mxu0
          %v2767 = vadd.f32 %v2606, %v2766
          %v2768 = vpop.f32.mrf.mxu0
          %2769 = vmatprep.mubr.bf16.mxu0 %v1589
          %2770 = vmatmul.mubr.bf16.gmra.mxu0 %v1588
          %v2771 = vpop.f32.mrf.mxu0
          %v2772 = vadd.f32 %v2611, %v2771
          %v2773 = vpop.f32.mrf.mxu0
          %v2774 = vpop.f32.mrf.mxu0
          %v2775 = vadd.f32 %v2614, %v2774
          %v2776 = vpop.f32.mrf.mxu0
          %2777 = vmatprep.mubr.bf16.mxu0 %v1597
          %2778 = vmatmul.mubr.bf16.gmra.mxu0 %v1596
          %v2779 = vpop.f32.mrf.mxu0
          %v2780 = vadd.f32 %v2619, %v2779
          %v2781 = vpop.f32.mrf.mxu0
          %v2782 = vpop.f32.mrf.mxu0
          %v2783 = vadd.f32 %v2622, %v2782
          %v2784 = vpop.f32.mrf.mxu0
          %2785 = vmatprep.mubr.bf16.mxu0 %v1605
          %2786 = vmatmul.mubr.bf16.gmra.mxu0 %v1604
          %v2787 = vpop.f32.mrf.mxu0
          %v2788 = vadd.f32 %v2627, %v2787
          %v2789 = vpop.f32.mrf.mxu0
          %v2790 = vpop.f32.mrf.mxu0
          %v2791 = vadd.f32 %v2630, %v2790
          %v2792 = vpop.f32.mrf.mxu0
          %2793 = vmatprep.mubr.bf16.mxu0 %v1613
          %2794 = vmatmul.mubr.bf16.gmra.mxu0 %v1612
          %v2795 = vpop.f32.mrf.mxu0
          %v2796 = vadd.f32 %v2635, %v2795
          %v2797 = vpop.f32.mrf.mxu0
          %v2798 = vpop.f32.mrf.mxu0
          %v2799 = vadd.f32 %v2638, %v2798
          %v2800 = vpop.f32.mrf.mxu0
          %2801 = vdwg.mxu0
          %v2802 = vadd.f32 %v1614, %v2676
          %v2803 = vadd.f32 %v1615, %v2679
          %v2804 = vadd.f32 %v1616, %v2684
          %v2805 = vadd.f32 %v1617, %v2687
          %v2806 = vadd.f32 %v1618, %v2692
          %v2807 = vadd.f32 %v1619, %v2695
          %v2808 = vadd.f32 %v1620, %v2700
          %v2809 = vadd.f32 %v1621, %v2703
          %v2810 = vadd.f32 %v1622, %v2708
          %v2811 = vadd.f32 %v1623, %v2711
          %v2812 = vadd.f32 %v1624, %v2716
          %v2813 = vadd.f32 %v1625, %v2719
          %v2814 = vadd.f32 %v1626, %v2724
          %v2815 = vadd.f32 %v1627, %v2727
          %v2816 = vadd.f32 %v1628, %v2732
          %v2817 = vadd.f32 %v1629, %v2735
          %v2818 = vadd.f32 %v1630, %v2740
          %v2819 = vadd.f32 %v1631, %v2743
          %v2820 = vadd.f32 %v1632, %v2748
          %v2821 = vadd.f32 %v1633, %v2751
          %v2822 = vadd.f32 %v1634, %v2756
          %v2823 = vadd.f32 %v1635, %v2759
          %v2824 = vadd.f32 %v1636, %v2764
          %v2825 = vadd.f32 %v1637, %v2767
          %v2826 = vadd.f32 %v1638, %v2772
          %v2827 = vadd.f32 %v1639, %v2775
          %v2828 = vadd.f32 %v1640, %v2780
          %v2829 = vadd.f32 %v1641, %v2783
          %v2830 = vadd.f32 %v1642, %v2788
          %v2831 = vadd.f32 %v1643, %v2791
          %v2832 = vadd.f32 %v1644, %v2796
          %v2833 = vadd.f32 %v1645, %v2799
          %2834 = vst [vmem:[#allocation2] sm:$0xff] %v2802
          %2835 = vst [vmem:[#allocation2 + $0x8] sm:$0xff] %v2803
          %2836 = vst [vmem:[#allocation2 + $0x10] sm:$0xff] %v2804
          %2837 = vst [vmem:[#allocation2 + $0x18] sm:$0xff] %v2805
          %2838 = vst [vmem:[#allocation2 + $0x20] sm:$0xff] %v2806
          %2839 = vst [vmem:[#allocation2 + $0x28] sm:$0xff] %v2807
          %2840 = vst [vmem:[#allocation2 + $0x30] sm:$0xff] %v2808
          %2841 = vst [vmem:[#allocation2 + $0x38] sm:$0xff] %v2809
          %2842 = vst [vmem:[#allocation2 + $0x40] sm:$0xff] %v2810
          %2843 = vst [vmem:[#allocation2 + $0x48] sm:$0xff] %v2811
          %2844 = vst [vmem:[#allocation2 + $0x50] sm:$0xff] %v2812
          %2845 = vst [vmem:[#allocation2 + $0x58] sm:$0xff] %v2813
          %2846 = vst [vmem:[#allocation2 + $0x60] sm:$0xff] %v2814
          %2847 = vst [vmem:[#allocation2 + $0x68] sm:$0xff] %v2815
          %2848 = vst [vmem:[#allocation2 + $0x70] sm:$0xff] %v2816
          %2849 = vst [vmem:[#allocation2 + $0x78] sm:$0xff] %v2817
          %2850 = vst [vmem:[#allocation2 + $0x80] sm:$0xff] %v2818
          %2851 = vst [vmem:[#allocation2 + $0x88] sm:$0xff] %v2819
          %2852 = vst [vmem:[#allocation2 + $0x90] sm:$0xff] %v2820
          %2853 = vst [vmem:[#allocation2 + $0x98] sm:$0xff] %v2821
          %2854 = vst [vmem:[#allocation2 + $0xa0] sm:$0xff] %v2822
          %2855 = vst [vmem:[#allocation2 + $0xa8] sm:$0xff] %v2823
          %2856 = vst [vmem:[#allocation2 + $0xb0] sm:$0xff] %v2824
          %2857 = vst [vmem:[#allocation2 + $0xb8] sm:$0xff] %v2825
          %2858 = vst [vmem:[#allocation2 + $0xc0] sm:$0xff] %v2826
          %2859 = vst [vmem:[#allocation2 + $0xc8] sm:$0xff] %v2827
          %2860 = vst [vmem:[#allocation2 + $0xd0] sm:$0xff] %v2828
          %2861 = vst [vmem:[#allocation2 + $0xd8] sm:$0xff] %v2829
          %2862 = vst [vmem:[#allocation2 + $0xe0] sm:$0xff] %v2830
          %2863 = vst [vmem:[#allocation2 + $0xe8] sm:$0xff] %v2831
          %2864 = vst [vmem:[#allocation2 + $0xf0] sm:$0xff] %v2832
          %2865 = vst [vmem:[#allocation2 + $0xf8] sm:$0xff] %v2833
        $region104: #{tpu_custom_call.1} parent=67 // pred_fallthru
          _
        // Predicated region
        $region105: #{tpu_custom_call.1} parent=67 // pred_check
          %p2866 = pneg %p608
        $region106: #{tpu_custom_call.1} parent=67 // pred_check_branch
          %2868 = sbr.rel (%p2866) target = $region108
        $region107: #{tpu_custom_call.1} parent=67 // pred_region
          %v2869 = vld [vmem:[%s523] sm:$0xff]
          %v2870 = vld [vmem:[%s523 + $0x8] sm:$0xff]
          %v2871 = vld [vmem:[%s523 + $0x10] sm:$0xff]
          %v2872 = vld [vmem:[%s523 + $0x18] sm:$0xff]
          %v2873 = vld [vmem:[%s523 + $0x20] sm:$0xff]
          %v2874 = vld [vmem:[%s523 + $0x28] sm:$0xff]
          %v2875 = vld [vmem:[%s523 + $0x30] sm:$0xff]
          %v2876 = vld [vmem:[%s523 + $0x38] sm:$0xff]
          %v2877 = vld [vmem:[%s523 + $0x40] sm:$0xff]
          %v2878 = vld [vmem:[%s523 + $0x48] sm:$0xff]
          %v2879 = vld [vmem:[%s523 + $0x50] sm:$0xff]
          %v2880 = vld [vmem:[%s523 + $0x58] sm:$0xff]
          %v2881 = vld [vmem:[%s523 + $0x60] sm:$0xff]
          %v2882 = vld [vmem:[%s523 + $0x68] sm:$0xff]
          %v2883 = vld [vmem:[%s523 + $0x70] sm:$0xff]
          %v2884 = vld [vmem:[%s523 + $0x78] sm:$0xff]
          %v2885 = vld [vmem:[%s523 + $0x80] sm:$0xff]
          %v2886 = vld [vmem:[%s523 + $0x88] sm:$0xff]
          %v2887 = vld [vmem:[%s523 + $0x90] sm:$0xff]
          %v2888 = vld [vmem:[%s523 + $0x98] sm:$0xff]
          %v2889 = vld [vmem:[%s523 + $0xa0] sm:$0xff]
          %v2890 = vld [vmem:[%s523 + $0xa8] sm:$0xff]
          %v2891 = vld [vmem:[%s523 + $0xb0] sm:$0xff]
          %v2892 = vld [vmem:[%s523 + $0xb8] sm:$0xff]
          %v2893 = vld [vmem:[%s523 + $0xc0] sm:$0xff]
          %v2894 = vld [vmem:[%s523 + $0xc8] sm:$0xff]
          %v2895 = vld [vmem:[%s523 + $0xd0] sm:$0xff]
          %v2896 = vld [vmem:[%s523 + $0xd8] sm:$0xff]
          %v2897 = vld [vmem:[%s523 + $0xe0] sm:$0xff]
          %v2898 = vld [vmem:[%s523 + $0xe8] sm:$0xff]
          %v2899 = vld [vmem:[%s523 + $0xf0] sm:$0xff]
          %v2900 = vld [vmem:[%s523 + $0xf8] sm:$0xff]
          %v2901 = vld [vmem:[#allocation2] sm:$0xff]
          %v2902 = vld [vmem:[#allocation2 + $0x8] sm:$0xff]
          %v2903 = vld [vmem:[#allocation2 + $0x10] sm:$0xff]
          %v2904 = vld [vmem:[#allocation2 + $0x18] sm:$0xff]
          %v2905 = vld [vmem:[#allocation2 + $0x20] sm:$0xff]
          %v2906 = vld [vmem:[#allocation2 + $0x28] sm:$0xff]
          %v2907 = vld [vmem:[#allocation2 + $0x30] sm:$0xff]
          %v2908 = vld [vmem:[#allocation2 + $0x38] sm:$0xff]
          %v2909 = vld [vmem:[#allocation2 + $0x40] sm:$0xff]
          %v2910 = vld [vmem:[#allocation2 + $0x48] sm:$0xff]
          %v2911 = vld [vmem:[#allocation2 + $0x50] sm:$0xff]
          %v2912 = vld [vmem:[#allocation2 + $0x58] sm:$0xff]
          %v2913 = vld [vmem:[#allocation2 + $0x60] sm:$0xff]
          %v2914 = vld [vmem:[#allocation2 + $0x68] sm:$0xff]
          %v2915 = vld [vmem:[#allocation2 + $0x70] sm:$0xff]
          %v2916 = vld [vmem:[#allocation2 + $0x78] sm:$0xff]
          %v2917 = vld [vmem:[#allocation2 + $0x80] sm:$0xff]
          %v2918 = vld [vmem:[#allocation2 + $0x88] sm:$0xff]
          %v2919 = vld [vmem:[#allocation2 + $0x90] sm:$0xff]
          %v2920 = vld [vmem:[#allocation2 + $0x98] sm:$0xff]
          %v2921 = vld [vmem:[#allocation2 + $0xa0] sm:$0xff]
          %v2922 = vld [vmem:[#allocation2 + $0xa8] sm:$0xff]
          %v2923 = vld [vmem:[#allocation2 + $0xb0] sm:$0xff]
          %v2924 = vld [vmem:[#allocation2 + $0xb8] sm:$0xff]
          %v2925 = vld [vmem:[#allocation2 + $0xc0] sm:$0xff]
          %v2926 = vld [vmem:[#allocation2 + $0xc8] sm:$0xff]
          %v2927 = vld [vmem:[#allocation2 + $0xd0] sm:$0xff]
          %v2928 = vld [vmem:[#allocation2 + $0xd8] sm:$0xff]
          %v2929 = vld [vmem:[#allocation2 + $0xe0] sm:$0xff]
          %v2930 = vld [vmem:[#allocation2 + $0xe8] sm:$0xff]
          %v2931 = vld [vmem:[#allocation2 + $0xf0] sm:$0xff]
          %v2932 = vld [vmem:[#allocation2 + $0xf8] sm:$0xff]
          %v2933 = vld [vmem:[#allocation12] sm:$0xff]
          %v2934 = vld [vmem:[#allocation12 + $0x8] sm:$0xff]
          %v2935 = vld [vmem:[#allocation12 + $0x10] sm:$0xff]
          %v2936 = vld [vmem:[#allocation12 + $0x18] sm:$0xff]
          %v2937 = vld [vmem:[#allocation12 + $0x20] sm:$0xff]
          %v2938 = vld [vmem:[#allocation12 + $0x28] sm:$0xff]
          %v2939 = vld [vmem:[#allocation12 + $0x30] sm:$0xff]
          %v2940 = vld [vmem:[#allocation12 + $0x38] sm:$0xff]
          %v2941 = vld [vmem:[#allocation12 + $0x40] sm:$0xff]
          %v2942 = vld [vmem:[#allocation12 + $0x48] sm:$0xff]
          %v2943 = vld [vmem:[#allocation12 + $0x50] sm:$0xff]
          %v2944 = vld [vmem:[#allocation12 + $0x58] sm:$0xff]
          %v2945 = vld [vmem:[#allocation12 + $0x60] sm:$0xff]
          %v2946 = vld [vmem:[#allocation12 + $0x68] sm:$0xff]
          %v2947 = vld [vmem:[#allocation12 + $0x70] sm:$0xff]
          %v2948 = vld [vmem:[#allocation12 + $0x78] sm:$0xff]
          %v2949 = vld [vmem:[#allocation14] sm:$0xff]
          %v2950 = vld [vmem:[#allocation14 + $0x8] sm:$0xff]
          %v2951 = vld [vmem:[#allocation14 + $0x10] sm:$0xff]
          %v2952 = vld [vmem:[#allocation14 + $0x18] sm:$0xff]
          %v2953 = vld [vmem:[#allocation14 + $0x20] sm:$0xff]
          %v2954 = vld [vmem:[#allocation14 + $0x28] sm:$0xff]
          %v2955 = vld [vmem:[#allocation14 + $0x30] sm:$0xff]
          %v2956 = vld [vmem:[#allocation14 + $0x38] sm:$0xff]
          %v2957 = vld [vmem:[#allocation14 + $0x40] sm:$0xff]
          %v2958 = vld [vmem:[#allocation14 + $0x48] sm:$0xff]
          %v2959 = vld [vmem:[#allocation14 + $0x50] sm:$0xff]
          %v2960 = vld [vmem:[#allocation14 + $0x58] sm:$0xff]
          %v2961 = vld [vmem:[#allocation14 + $0x60] sm:$0xff]
          %v2962 = vld [vmem:[#allocation14 + $0x68] sm:$0xff]
          %v2963 = vld [vmem:[#allocation14 + $0x70] sm:$0xff]
          %v2964 = vld [vmem:[#allocation14 + $0x78] sm:$0xff]
          %2965 = vmatprep.subr.mxu0 0.0
          %2966 = vmatpush1.msra.mxu0 %v2964
          %2967 = vmatprep.subr.mxu0 0.0
          %2968 = vmatpush1.msra.mxu0 %v2963
          %2969 = vmatprep.subr.mxu0 0.0
          %2970 = vmatpush1.msra.mxu0 %v2962
          %2971 = vmatprep.subr.mxu0 0.0
          %2972 = vmatpush1.msra.mxu0 %v2961
          %2973 = vmatprep.subr.mxu0 0.0
          %2974 = vmatpush1.msra.mxu0 %v2960
          %2975 = vmatprep.subr.mxu0 0.0
          %2976 = vmatpush1.msra.mxu0 %v2959
          %2977 = vmatprep.subr.mxu0 0.0
          %2978 = vmatpush1.msra.mxu0 %v2958
          %2979 = vmatprep.subr.mxu0 0.0
          %2980 = vmatpush1.msra.mxu0 %v2957
          %2981 = vmatprep.subr.mxu0 0.0
          %2982 = vmatpush1.msra.mxu0 %v2956
          %2983 = vmatprep.subr.mxu0 0.0
          %2984 = vmatpush1.msra.mxu0 %v2955
          %2985 = vmatprep.subr.mxu0 0.0
          %2986 = vmatpush1.msra.mxu0 %v2954
          %2987 = vmatprep.subr.mxu0 0.0
          %2988 = vmatpush1.msra.mxu0 %v2953
          %2989 = vmatprep.subr.mxu0 0.0
          %2990 = vmatpush1.msra.mxu0 %v2952
          %2991 = vmatprep.subr.mxu0 0.0
          %2992 = vmatpush1.msra.mxu0 %v2951
          %2993 = vmatprep.subr.mxu0 0.0
          %2994 = vmatpush1.msra.mxu0 %v2950
          %2995 = vmatprep.subr.mxu0 0.0
          %2996 = vmatpush1.msra.mxu0 %v2949
          %2997 = vmatprep.subr.mxu0 0.0
          %2998 = vmatpush2.msra.mxu0 0.0
          %2999 = vmatprep.subr.mxu0 0.0
          %3000 = vmatpush2.msra.mxu0 0.0
          %3001 = vmatprep.subr.mxu0 0.0
          %3002 = vmatpush2.msra.mxu0 0.0
          %3003 = vmatprep.subr.mxu0 0.0
          %3004 = vmatpush2.msra.mxu0 0.0
          %3005 = vmatprep.subr.mxu0 0.0
          %3006 = vmatpush2.msra.mxu0 0.0
          %3007 = vmatprep.subr.mxu0 0.0
          %3008 = vmatpush2.msra.mxu0 0.0
          %3009 = vmatprep.subr.mxu0 0.0
          %3010 = vmatpush2.msra.mxu0 0.0
          %3011 = vmatprep.subr.mxu0 0.0
          %3012 = vmatpush2.msra.mxu0 0.0
          %3013 = vmatprep.subr.mxu0 0.0
          %3014 = vmatpush2.msra.mxu0 0.0
          %3015 = vmatprep.subr.mxu0 0.0
          %3016 = vmatpush2.msra.mxu0 0.0
          %3017 = vmatprep.subr.mxu0 0.0
          %3018 = vmatpush2.msra.mxu0 0.0
          %3019 = vmatprep.subr.mxu0 0.0
          %3020 = vmatpush2.msra.mxu0 0.0
          %3021 = vmatprep.subr.mxu0 0.0
          %3022 = vmatpush2.msra.mxu0 0.0
          %3023 = vmatprep.subr.mxu0 0.0
          %3024 = vmatpush2.msra.mxu0 0.0
          %3025 = vmatprep.subr.mxu0 0.0
          %3026 = vmatpush2.msra.mxu0 0.0
          %3027 = vmatprep.subr.mxu0 0.0
          %3028 = vmatpush2.msra.mxu0 0.0
          %3029 = vmatprep.mubr.f32.mxu0 0.0
          %3030 = vmatmul.mubr.f32.gmra.mxu0 %v2901
          %v3031 = vpop.f32.mrf.mxu0
          %v3032 = vadd.f32 0.0, %v3031
          %v3033 = vpop.f32.mrf.mxu0
          %3034 = vmatprep.mubr.f32.mxu0 0.0
          %3035 = vmatmul.mubr.f32.gmra.mxu0 %v2902
          %v3036 = vpop.f32.mrf.mxu0
          %v3037 = vadd.f32 0.0, %v3036
          %v3038 = vpop.f32.mrf.mxu0
          %3039 = vmatprep.mubr.f32.mxu0 0.0
          %3040 = vmatmul.mubr.f32.gmra.mxu0 %v2903
          %v3041 = vpop.f32.mrf.mxu0
          %v3042 = vadd.f32 0.0, %v3041
          %v3043 = vpop.f32.mrf.mxu0
          %3044 = vmatprep.mubr.f32.mxu0 0.0
          %3045 = vmatmul.mubr.f32.gmra.mxu0 %v2904
          %v3046 = vpop.f32.mrf.mxu0
          %v3047 = vadd.f32 0.0, %v3046
          %v3048 = vpop.f32.mrf.mxu0
          %3049 = vmatprep.mubr.f32.mxu0 0.0
          %3050 = vmatmul.mubr.f32.gmra.mxu0 %v2905
          %v3051 = vpop.f32.mrf.mxu0
          %v3052 = vadd.f32 0.0, %v3051
          %v3053 = vpop.f32.mrf.mxu0
          %3054 = vmatprep.mubr.f32.mxu0 0.0
          %3055 = vmatmul.mubr.f32.gmra.mxu0 %v2906
          %v3056 = vpop.f32.mrf.mxu0
          %v3057 = vadd.f32 0.0, %v3056
          %v3058 = vpop.f32.mrf.mxu0
          %3059 = vmatprep.mubr.f32.mxu0 0.0
          %3060 = vmatmul.mubr.f32.gmra.mxu0 %v2907
          %v3061 = vpop.f32.mrf.mxu0
          %v3062 = vadd.f32 0.0, %v3061
          %v3063 = vpop.f32.mrf.mxu0
          %3064 = vmatprep.mubr.f32.mxu0 0.0
          %3065 = vmatmul.mubr.f32.gmra.mxu0 %v2908
          %v3066 = vpop.f32.mrf.mxu0
          %v3067 = vadd.f32 0.0, %v3066
          %v3068 = vpop.f32.mrf.mxu0
          %3069 = vmatprep.mubr.f32.mxu0 0.0
          %3070 = vmatmul.mubr.f32.gmra.mxu0 %v2909
          %v3071 = vpop.f32.mrf.mxu0
          %v3072 = vadd.f32 0.0, %v3071
          %v3073 = vpop.f32.mrf.mxu0
          %3074 = vmatprep.mubr.f32.mxu0 0.0
          %3075 = vmatmul.mubr.f32.gmra.mxu0 %v2910
          %v3076 = vpop.f32.mrf.mxu0
          %v3077 = vadd.f32 0.0, %v3076
          %v3078 = vpop.f32.mrf.mxu0
          %3079 = vmatprep.mubr.f32.mxu0 0.0
          %3080 = vmatmul.mubr.f32.gmra.mxu0 %v2911
          %v3081 = vpop.f32.mrf.mxu0
          %v3082 = vadd.f32 0.0, %v3081
          %v3083 = vpop.f32.mrf.mxu0
          %3084 = vmatprep.mubr.f32.mxu0 0.0
          %3085 = vmatmul.mubr.f32.gmra.mxu0 %v2912
          %v3086 = vpop.f32.mrf.mxu0
          %v3087 = vadd.f32 0.0, %v3086
          %v3088 = vpop.f32.mrf.mxu0
          %3089 = vmatprep.mubr.f32.mxu0 0.0
          %3090 = vmatmul.mubr.f32.gmra.mxu0 %v2913
          %v3091 = vpop.f32.mrf.mxu0
          %v3092 = vadd.f32 0.0, %v3091
          %v3093 = vpop.f32.mrf.mxu0
          %3094 = vmatprep.mubr.f32.mxu0 0.0
          %3095 = vmatmul.mubr.f32.gmra.mxu0 %v2914
          %v3096 = vpop.f32.mrf.mxu0
          %v3097 = vadd.f32 0.0, %v3096
          %v3098 = vpop.f32.mrf.mxu0
          %3099 = vmatprep.mubr.f32.mxu0 0.0
          %3100 = vmatmul.mubr.f32.gmra.mxu0 %v2915
          %v3101 = vpop.f32.mrf.mxu0
          %v3102 = vadd.f32 0.0, %v3101
          %v3103 = vpop.f32.mrf.mxu0
          %3104 = vmatprep.mubr.f32.mxu0 0.0
          %3105 = vmatmul.mubr.f32.gmra.mxu0 %v2916
          %v3106 = vpop.f32.mrf.mxu0
          %v3107 = vadd.f32 0.0, %v3106
          %v3108 = vpop.f32.mrf.mxu0
          %3109 = vmatprep.mubr.f32.mxu0 0.0
          %3110 = vmatmul.mubr.f32.gmra.mxu0 %v2917
          %v3111 = vpop.f32.mrf.mxu0
          %v3112 = vadd.f32 0.0, %v3111
          %v3113 = vpop.f32.mrf.mxu0
          %3114 = vmatprep.mubr.f32.mxu0 0.0
          %3115 = vmatmul.mubr.f32.gmra.mxu0 %v2918
          %v3116 = vpop.f32.mrf.mxu0
          %v3117 = vadd.f32 0.0, %v3116
          %v3118 = vpop.f32.mrf.mxu0
          %3119 = vmatprep.mubr.f32.mxu0 0.0
          %3120 = vmatmul.mubr.f32.gmra.mxu0 %v2919
          %v3121 = vpop.f32.mrf.mxu0
          %v3122 = vadd.f32 0.0, %v3121
          %v3123 = vpop.f32.mrf.mxu0
          %3124 = vmatprep.mubr.f32.mxu0 0.0
          %3125 = vmatmul.mubr.f32.gmra.mxu0 %v2920
          %v3126 = vpop.f32.mrf.mxu0
          %v3127 = vadd.f32 0.0, %v3126
          %v3128 = vpop.f32.mrf.mxu0
          %3129 = vmatprep.mubr.f32.mxu0 0.0
          %3130 = vmatmul.mubr.f32.gmra.mxu0 %v2921
          %v3131 = vpop.f32.mrf.mxu0
          %v3132 = vadd.f32 0.0, %v3131
          %v3133 = vpop.f32.mrf.mxu0
          %3134 = vmatprep.mubr.f32.mxu0 0.0
          %3135 = vmatmul.mubr.f32.gmra.mxu0 %v2922
          %v3136 = vpop.f32.mrf.mxu0
          %v3137 = vadd.f32 0.0, %v3136
          %v3138 = vpop.f32.mrf.mxu0
          %3139 = vmatprep.mubr.f32.mxu0 0.0
          %3140 = vmatmul.mubr.f32.gmra.mxu0 %v2923
          %v3141 = vpop.f32.mrf.mxu0
          %v3142 = vadd.f32 0.0, %v3141
          %v3143 = vpop.f32.mrf.mxu0
          %3144 = vmatprep.mubr.f32.mxu0 0.0
          %3145 = vmatmul.mubr.f32.gmra.mxu0 %v2924
          %v3146 = vpop.f32.mrf.mxu0
          %v3147 = vadd.f32 0.0, %v3146
          %v3148 = vpop.f32.mrf.mxu0
          %3149 = vmatprep.mubr.f32.mxu0 0.0
          %3150 = vmatmul.mubr.f32.gmra.mxu0 %v2925
          %v3151 = vpop.f32.mrf.mxu0
          %v3152 = vadd.f32 0.0, %v3151
          %v3153 = vpop.f32.mrf.mxu0
          %3154 = vmatprep.mubr.f32.mxu0 0.0
          %3155 = vmatmul.mubr.f32.gmra.mxu0 %v2926
          %v3156 = vpop.f32.mrf.mxu0
          %v3157 = vadd.f32 0.0, %v3156
          %v3158 = vpop.f32.mrf.mxu0
          %3159 = vmatprep.mubr.f32.mxu0 0.0
          %3160 = vmatmul.mubr.f32.gmra.mxu0 %v2927
          %v3161 = vpop.f32.mrf.mxu0
          %v3162 = vadd.f32 0.0, %v3161
          %v3163 = vpop.f32.mrf.mxu0
          %3164 = vmatprep.mubr.f32.mxu0 0.0
          %3165 = vmatmul.mubr.f32.gmra.mxu0 %v2928
          %v3166 = vpop.f32.mrf.mxu0
          %v3167 = vadd.f32 0.0, %v3166
          %v3168 = vpop.f32.mrf.mxu0
          %3169 = vmatprep.mubr.f32.mxu0 0.0
          %3170 = vmatmul.mubr.f32.gmra.mxu0 %v2929
          %v3171 = vpop.f32.mrf.mxu0
          %v3172 = vadd.f32 0.0, %v3171
          %v3173 = vpop.f32.mrf.mxu0
          %3174 = vmatprep.mubr.f32.mxu0 0.0
          %3175 = vmatmul.mubr.f32.gmra.mxu0 %v2930
          %v3176 = vpop.f32.mrf.mxu0
          %v3177 = vadd.f32 0.0, %v3176
          %v3178 = vpop.f32.mrf.mxu0
          %3179 = vmatprep.mubr.f32.mxu0 0.0
          %3180 = vmatmul.mubr.f32.gmra.mxu0 %v2931
          %v3181 = vpop.f32.mrf.mxu0
          %v3182 = vadd.f32 0.0, %v3181
          %v3183 = vpop.f32.mrf.mxu0
          %3184 = vmatprep.mubr.f32.mxu0 0.0
          %3185 = vmatmul.mubr.f32.gmra.mxu0 %v2932
          %v3186 = vpop.f32.mrf.mxu0
          %v3187 = vadd.f32 0.0, %v3186
          %v3188 = vpop.f32.mrf.mxu0
          %3189 = vdwg.mxu0
          %3190 = vmatprep.subr.mxu0 0.0
          %3191 = vmatpush1.msra.mxu0 %v2948
          %3192 = vmatprep.subr.mxu0 0.0
          %3193 = vmatpush1.msra.mxu0 %v2947
          %3194 = vmatprep.subr.mxu0 0.0
          %3195 = vmatpush1.msra.mxu0 %v2946
          %3196 = vmatprep.subr.mxu0 0.0
          %3197 = vmatpush1.msra.mxu0 %v2945
          %3198 = vmatprep.subr.mxu0 0.0
          %3199 = vmatpush1.msra.mxu0 %v2944
          %3200 = vmatprep.subr.mxu0 0.0
          %3201 = vmatpush1.msra.mxu0 %v2943
          %3202 = vmatprep.subr.mxu0 0.0
          %3203 = vmatpush1.msra.mxu0 %v2942
          %3204 = vmatprep.subr.mxu0 0.0
          %3205 = vmatpush1.msra.mxu0 %v2941
          %3206 = vmatprep.subr.mxu0 0.0
          %3207 = vmatpush1.msra.mxu0 %v2940
          %3208 = vmatprep.subr.mxu0 0.0
          %3209 = vmatpush1.msra.mxu0 %v2939
          %3210 = vmatprep.subr.mxu0 0.0
          %3211 = vmatpush1.msra.mxu0 %v2938
          %3212 = vmatprep.subr.mxu0 0.0
          %3213 = vmatpush1.msra.mxu0 %v2937
          %3214 = vmatprep.subr.mxu0 0.0
          %3215 = vmatpush1.msra.mxu0 %v2936
          %3216 = vmatprep.subr.mxu0 0.0
          %3217 = vmatpush1.msra.mxu0 %v2935
          %3218 = vmatprep.subr.mxu0 0.0
          %3219 = vmatpush1.msra.mxu0 %v2934
          %3220 = vmatprep.subr.mxu0 0.0
          %3221 = vmatpush1.msra.mxu0 %v2933
          %3222 = vmatprep.subr.mxu0 0.0
          %3223 = vmatpush2.msra.mxu0 0.0
          %3224 = vmatprep.subr.mxu0 0.0
          %3225 = vmatpush2.msra.mxu0 0.0
          %3226 = vmatprep.subr.mxu0 0.0
          %3227 = vmatpush2.msra.mxu0 0.0
          %3228 = vmatprep.subr.mxu0 0.0
          %3229 = vmatpush2.msra.mxu0 0.0
          %3230 = vmatprep.subr.mxu0 0.0
          %3231 = vmatpush2.msra.mxu0 0.0
          %3232 = vmatprep.subr.mxu0 0.0
          %3233 = vmatpush2.msra.mxu0 0.0
          %3234 = vmatprep.subr.mxu0 0.0
          %3235 = vmatpush2.msra.mxu0 0.0
          %3236 = vmatprep.subr.mxu0 0.0
          %3237 = vmatpush2.msra.mxu0 0.0
          %3238 = vmatprep.subr.mxu0 0.0
          %3239 = vmatpush2.msra.mxu0 0.0
          %3240 = vmatprep.subr.mxu0 0.0
          %3241 = vmatpush2.msra.mxu0 0.0
          %3242 = vmatprep.subr.mxu0 0.0
          %3243 = vmatpush2.msra.mxu0 0.0
          %3244 = vmatprep.subr.mxu0 0.0
          %3245 = vmatpush2.msra.mxu0 0.0
          %3246 = vmatprep.subr.mxu0 0.0
          %3247 = vmatpush2.msra.mxu0 0.0
          %3248 = vmatprep.subr.mxu0 0.0
          %3249 = vmatpush2.msra.mxu0 0.0
          %3250 = vmatprep.subr.mxu0 0.0
          %3251 = vmatpush2.msra.mxu0 0.0
          %3252 = vmatprep.subr.mxu0 0.0
          %3253 = vmatpush2.msra.mxu0 0.0
          %3254 = vmatprep.mubr.f32.mxu0 0.0
          %3255 = vmatmul.mubr.f32.gmra.mxu0 %v2869
          %v3256 = vpop.f32.mrf.mxu0
          %v3257 = vadd.f32 %v3032, %v3256
          %v3258 = vpop.f32.mrf.mxu0
          %3259 = vmatprep.mubr.f32.mxu0 0.0
          %3260 = vmatmul.mubr.f32.gmra.mxu0 %v2870
          %v3261 = vpop.f32.mrf.mxu0
          %v3262 = vadd.f32 %v3037, %v3261
          %v3263 = vpop.f32.mrf.mxu0
          %3264 = vmatprep.mubr.f32.mxu0 0.0
          %3265 = vmatmul.mubr.f32.gmra.mxu0 %v2871
          %v3266 = vpop.f32.mrf.mxu0
          %v3267 = vadd.f32 %v3042, %v3266
          %v3268 = vpop.f32.mrf.mxu0
          %3269 = vmatprep.mubr.f32.mxu0 0.0
          %3270 = vmatmul.mubr.f32.gmra.mxu0 %v2872
          %v3271 = vpop.f32.mrf.mxu0
          %v3272 = vadd.f32 %v3047, %v3271
          %v3273 = vpop.f32.mrf.mxu0
          %3274 = vmatprep.mubr.f32.mxu0 0.0
          %3275 = vmatmul.mubr.f32.gmra.mxu0 %v2873
          %v3276 = vpop.f32.mrf.mxu0
          %v3277 = vadd.f32 %v3052, %v3276
          %v3278 = vpop.f32.mrf.mxu0
          %3279 = vmatprep.mubr.f32.mxu0 0.0
          %3280 = vmatmul.mubr.f32.gmra.mxu0 %v2874
          %v3281 = vpop.f32.mrf.mxu0
          %v3282 = vadd.f32 %v3057, %v3281
          %v3283 = vpop.f32.mrf.mxu0
          %3284 = vmatprep.mubr.f32.mxu0 0.0
          %3285 = vmatmul.mubr.f32.gmra.mxu0 %v2875
          %v3286 = vpop.f32.mrf.mxu0
          %v3287 = vadd.f32 %v3062, %v3286
          %v3288 = vpop.f32.mrf.mxu0
          %3289 = vmatprep.mubr.f32.mxu0 0.0
          %3290 = vmatmul.mubr.f32.gmra.mxu0 %v2876
          %v3291 = vpop.f32.mrf.mxu0
          %v3292 = vadd.f32 %v3067, %v3291
          %v3293 = vpop.f32.mrf.mxu0
          %3294 = vmatprep.mubr.f32.mxu0 0.0
          %3295 = vmatmul.mubr.f32.gmra.mxu0 %v2877
          %v3296 = vpop.f32.mrf.mxu0
          %v3297 = vadd.f32 %v3072, %v3296
          %v3298 = vpop.f32.mrf.mxu0
          %3299 = vmatprep.mubr.f32.mxu0 0.0
          %3300 = vmatmul.mubr.f32.gmra.mxu0 %v2878
          %v3301 = vpop.f32.mrf.mxu0
          %v3302 = vadd.f32 %v3077, %v3301
          %v3303 = vpop.f32.mrf.mxu0
          %3304 = vmatprep.mubr.f32.mxu0 0.0
          %3305 = vmatmul.mubr.f32.gmra.mxu0 %v2879
          %v3306 = vpop.f32.mrf.mxu0
          %v3307 = vadd.f32 %v3082, %v3306
          %v3308 = vpop.f32.mrf.mxu0
          %3309 = vmatprep.mubr.f32.mxu0 0.0
          %3310 = vmatmul.mubr.f32.gmra.mxu0 %v2880
          %v3311 = vpop.f32.mrf.mxu0
          %v3312 = vadd.f32 %v3087, %v3311
          %v3313 = vpop.f32.mrf.mxu0
          %3314 = vmatprep.mubr.f32.mxu0 0.0
          %3315 = vmatmul.mubr.f32.gmra.mxu0 %v2881
          %v3316 = vpop.f32.mrf.mxu0
          %v3317 = vadd.f32 %v3092, %v3316
          %v3318 = vpop.f32.mrf.mxu0
          %3319 = vmatprep.mubr.f32.mxu0 0.0
          %3320 = vmatmul.mubr.f32.gmra.mxu0 %v2882
          %v3321 = vpop.f32.mrf.mxu0
          %v3322 = vadd.f32 %v3097, %v3321
          %v3323 = vpop.f32.mrf.mxu0
          %3324 = vmatprep.mubr.f32.mxu0 0.0
          %3325 = vmatmul.mubr.f32.gmra.mxu0 %v2883
          %v3326 = vpop.f32.mrf.mxu0
          %v3327 = vadd.f32 %v3102, %v3326
          %v3328 = vpop.f32.mrf.mxu0
          %3329 = vmatprep.mubr.f32.mxu0 0.0
          %3330 = vmatmul.mubr.f32.gmra.mxu0 %v2884
          %v3331 = vpop.f32.mrf.mxu0
          %v3332 = vadd.f32 %v3107, %v3331
          %v3333 = vpop.f32.mrf.mxu0
          %3334 = vmatprep.mubr.f32.mxu0 0.0
          %3335 = vmatmul.mubr.f32.gmra.mxu0 %v2885
          %v3336 = vpop.f32.mrf.mxu0
          %v3337 = vadd.f32 %v3112, %v3336
          %v3338 = vpop.f32.mrf.mxu0
          %3339 = vmatprep.mubr.f32.mxu0 0.0
          %3340 = vmatmul.mubr.f32.gmra.mxu0 %v2886
          %v3341 = vpop.f32.mrf.mxu0
          %v3342 = vadd.f32 %v3117, %v3341
          %v3343 = vpop.f32.mrf.mxu0
          %3344 = vmatprep.mubr.f32.mxu0 0.0
          %3345 = vmatmul.mubr.f32.gmra.mxu0 %v2887
          %v3346 = vpop.f32.mrf.mxu0
          %v3347 = vadd.f32 %v3122, %v3346
          %v3348 = vpop.f32.mrf.mxu0
          %3349 = vmatprep.mubr.f32.mxu0 0.0
          %3350 = vmatmul.mubr.f32.gmra.mxu0 %v2888
          %v3351 = vpop.f32.mrf.mxu0
          %v3352 = vadd.f32 %v3127, %v3351
          %v3353 = vpop.f32.mrf.mxu0
          %3354 = vmatprep.mubr.f32.mxu0 0.0
          %3355 = vmatmul.mubr.f32.gmra.mxu0 %v2889
          %v3356 = vpop.f32.mrf.mxu0
          %v3357 = vadd.f32 %v3132, %v3356
          %v3358 = vpop.f32.mrf.mxu0
          %3359 = vmatprep.mubr.f32.mxu0 0.0
          %3360 = vmatmul.mubr.f32.gmra.mxu0 %v2890
          %v3361 = vpop.f32.mrf.mxu0
          %v3362 = vadd.f32 %v3137, %v3361
          %v3363 = vpop.f32.mrf.mxu0
          %3364 = vmatprep.mubr.f32.mxu0 0.0
          %3365 = vmatmul.mubr.f32.gmra.mxu0 %v2891
          %v3366 = vpop.f32.mrf.mxu0
          %v3367 = vadd.f32 %v3142, %v3366
          %v3368 = vpop.f32.mrf.mxu0
          %3369 = vmatprep.mubr.f32.mxu0 0.0
          %3370 = vmatmul.mubr.f32.gmra.mxu0 %v2892
          %v3371 = vpop.f32.mrf.mxu0
          %v3372 = vadd.f32 %v3147, %v3371
          %v3373 = vpop.f32.mrf.mxu0
          %3374 = vmatprep.mubr.f32.mxu0 0.0
          %3375 = vmatmul.mubr.f32.gmra.mxu0 %v2893
          %v3376 = vpop.f32.mrf.mxu0
          %v3377 = vadd.f32 %v3152, %v3376
          %v3378 = vpop.f32.mrf.mxu0
          %3379 = vmatprep.mubr.f32.mxu0 0.0
          %3380 = vmatmul.mubr.f32.gmra.mxu0 %v2894
          %v3381 = vpop.f32.mrf.mxu0
          %v3382 = vadd.f32 %v3157, %v3381
          %v3383 = vpop.f32.mrf.mxu0
          %3384 = vmatprep.mubr.f32.mxu0 0.0
          %3385 = vmatmul.mubr.f32.gmra.mxu0 %v2895
          %v3386 = vpop.f32.mrf.mxu0
          %v3387 = vadd.f32 %v3162, %v3386
          %v3388 = vpop.f32.mrf.mxu0
          %3389 = vmatprep.mubr.f32.mxu0 0.0
          %3390 = vmatmul.mubr.f32.gmra.mxu0 %v2896
          %v3391 = vpop.f32.mrf.mxu0
          %v3392 = vadd.f32 %v3167, %v3391
          %v3393 = vpop.f32.mrf.mxu0
          %3394 = vmatprep.mubr.f32.mxu0 0.0
          %3395 = vmatmul.mubr.f32.gmra.mxu0 %v2897
          %v3396 = vpop.f32.mrf.mxu0
          %v3397 = vadd.f32 %v3172, %v3396
          %v3398 = vpop.f32.mrf.mxu0
          %3399 = vmatprep.mubr.f32.mxu0 0.0
          %3400 = vmatmul.mubr.f32.gmra.mxu0 %v2898
          %v3401 = vpop.f32.mrf.mxu0
          %v3402 = vadd.f32 %v3177, %v3401
          %v3403 = vpop.f32.mrf.mxu0
          %3404 = vmatprep.mubr.f32.mxu0 0.0
          %3405 = vmatmul.mubr.f32.gmra.mxu0 %v2899
          %v3406 = vpop.f32.mrf.mxu0
          %v3407 = vadd.f32 %v3182, %v3406
          %v3408 = vpop.f32.mrf.mxu0
          %3409 = vmatprep.mubr.f32.mxu0 0.0
          %3410 = vmatmul.mubr.f32.gmra.mxu0 %v2900
          %v3411 = vpop.f32.mrf.mxu0
          %v3412 = vadd.f32 %v3187, %v3411
          %v3413 = vpop.f32.mrf.mxu0
          %3414 = vdwg.mxu0
          %v3415 = vld [vmem:[%s7] sm:$0x1]
          %v3417 = vlaneseq
          %v3418 = vshrl.u32 %v3417, 7
          %v3419 = vsub.s32 0, %v3418
          %v3420 = vrot.slane %v3415, %v3419
          %v3422 = vadd.f32 %v3257, %v3420
          %v3423 = vadd.f32 %v3262, %v3420
          %v3424 = vadd.f32 %v3267, %v3420
          %v3425 = vadd.f32 %v3272, %v3420
          %v3426 = vadd.f32 %v3277, %v3420
          %v3427 = vadd.f32 %v3282, %v3420
          %v3428 = vadd.f32 %v3287, %v3420
          %v3429 = vadd.f32 %v3292, %v3420
          %v3430 = vadd.f32 %v3297, %v3420
          %v3431 = vadd.f32 %v3302, %v3420
          %v3432 = vadd.f32 %v3307, %v3420
          %v3433 = vadd.f32 %v3312, %v3420
          %v3434 = vadd.f32 %v3317, %v3420
          %v3435 = vadd.f32 %v3322, %v3420
          %v3436 = vadd.f32 %v3327, %v3420
          %v3437 = vadd.f32 %v3332, %v3420
          %v3438 = vadd.f32 %v3337, %v3420
          %v3439 = vadd.f32 %v3342, %v3420
          %v3440 = vadd.f32 %v3347, %v3420
          %v3441 = vadd.f32 %v3352, %v3420
          %v3442 = vadd.f32 %v3357, %v3420
          %v3443 = vadd.f32 %v3362, %v3420
          %v3444 = vadd.f32 %v3367, %v3420
          %v3445 = vadd.f32 %v3372, %v3420
          %v3446 = vadd.f32 %v3377, %v3420
          %v3447 = vadd.f32 %v3382, %v3420
          %v3448 = vadd.f32 %v3387, %v3420
          %v3449 = vadd.f32 %v3392, %v3420
          %v3450 = vadd.f32 %v3397, %v3420
          %v3451 = vadd.f32 %v3402, %v3420
          %v3452 = vadd.f32 %v3407, %v3420
          %v3453 = vadd.f32 %v3412, %v3420
          %v3454 = vmax.f32 %v3422, 0.0
          %v3455 = vmax.f32 %v3423, 0.0
          %v3456 = vmax.f32 %v3424, 0.0
          %v3457 = vmax.f32 %v3425, 0.0
          %v3458 = vmax.f32 %v3426, 0.0
          %v3459 = vmax.f32 %v3427, 0.0
          %v3460 = vmax.f32 %v3428, 0.0
          %v3461 = vmax.f32 %v3429, 0.0
          %v3462 = vmax.f32 %v3430, 0.0
          %v3463 = vmax.f32 %v3431, 0.0
          %v3464 = vmax.f32 %v3432, 0.0
          %v3465 = vmax.f32 %v3433, 0.0
          %v3466 = vmax.f32 %v3434, 0.0
          %v3467 = vmax.f32 %v3435, 0.0
          %v3468 = vmax.f32 %v3436, 0.0
          %v3469 = vmax.f32 %v3437, 0.0
          %v3470 = vmax.f32 %v3438, 0.0
          %v3471 = vmax.f32 %v3439, 0.0
          %v3472 = vmax.f32 %v3440, 0.0
          %v3473 = vmax.f32 %v3441, 0.0
          %v3474 = vmax.f32 %v3442, 0.0
          %v3475 = vmax.f32 %v3443, 0.0
          %v3476 = vmax.f32 %v3444, 0.0
          %v3477 = vmax.f32 %v3445, 0.0
          %v3478 = vmax.f32 %v3446, 0.0
          %v3479 = vmax.f32 %v3447, 0.0
          %v3480 = vmax.f32 %v3448, 0.0
          %v3481 = vmax.f32 %v3449, 0.0
          %v3482 = vmax.f32 %v3450, 0.0
          %v3483 = vmax.f32 %v3451, 0.0
          %v3484 = vmax.f32 %v3452, 0.0
          %v3485 = vmax.f32 %v3453, 0.0
          %v3486 = vld [vmem:[#allocation15] sm:$0xff]
          %v3487 = vld [vmem:[#allocation15 + $0x8] sm:$0xff]
          %v3488 = vld [vmem:[#allocation15 + $0x10] sm:$0xff]
          %v3489 = vld [vmem:[#allocation15 + $0x18] sm:$0xff]
          %v3490 = vld [vmem:[#allocation15 + $0x20] sm:$0xff]
          %v3491 = vld [vmem:[#allocation15 + $0x28] sm:$0xff]
          %v3492 = vld [vmem:[#allocation15 + $0x30] sm:$0xff]
          %v3493 = vld [vmem:[#allocation15 + $0x38] sm:$0xff]
          %v3494 = vld [vmem:[#allocation15 + $0x40] sm:$0xff]
          %v3495 = vld [vmem:[#allocation15 + $0x48] sm:$0xff]
          %v3496 = vld [vmem:[#allocation15 + $0x50] sm:$0xff]
          %v3497 = vld [vmem:[#allocation15 + $0x58] sm:$0xff]
          %v3498 = vld [vmem:[#allocation15 + $0x60] sm:$0xff]
          %v3499 = vld [vmem:[#allocation15 + $0x68] sm:$0xff]
          %v3500 = vld [vmem:[#allocation15 + $0x70] sm:$0xff]
          %v3501 = vld [vmem:[#allocation15 + $0x78] sm:$0xff]
          %v3502 = vld [vmem:[%s9] sm:$0x1]
          %v3504 = vlaneseq
          %v3505 = vshrl.u32 %v3504, 7
          %v3506 = vsub.s32 0, %v3505
          %v3507 = vrot.slane %v3502, %v3506
          %3509 = vmatprep.subr.mxu0 0.0
          %3510 = vmatpush1.msra.mxu0 %v3501
          %3511 = vmatprep.subr.mxu0 0.0
          %3512 = vmatpush1.msra.mxu0 %v3500
          %3513 = vmatprep.subr.mxu0 0.0
          %3514 = vmatpush1.msra.mxu0 %v3499
          %3515 = vmatprep.subr.mxu0 0.0
          %3516 = vmatpush1.msra.mxu0 %v3498
          %3517 = vmatprep.subr.mxu0 0.0
          %3518 = vmatpush1.msra.mxu0 %v3497
          %3519 = vmatprep.subr.mxu0 0.0
          %3520 = vmatpush1.msra.mxu0 %v3496
          %3521 = vmatprep.subr.mxu0 0.0
          %3522 = vmatpush1.msra.mxu0 %v3495
          %3523 = vmatprep.subr.mxu0 0.0
          %3524 = vmatpush1.msra.mxu0 %v3494
          %3525 = vmatprep.subr.mxu0 0.0
          %3526 = vmatpush1.msra.mxu0 %v3493
          %3527 = vmatprep.subr.mxu0 0.0
          %3528 = vmatpush1.msra.mxu0 %v3492
          %3529 = vmatprep.subr.mxu0 0.0
          %3530 = vmatpush1.msra.mxu0 %v3491
          %3531 = vmatprep.subr.mxu0 0.0
          %3532 = vmatpush1.msra.mxu0 %v3490
          %3533 = vmatprep.subr.mxu0 0.0
          %3534 = vmatpush1.msra.mxu0 %v3489
          %3535 = vmatprep.subr.mxu0 0.0
          %3536 = vmatpush1.msra.mxu0 %v3488
          %3537 = vmatprep.subr.mxu0 0.0
          %3538 = vmatpush1.msra.mxu0 %v3487
          %3539 = vmatprep.subr.mxu0 0.0
          %3540 = vmatpush1.msra.mxu0 %v3486
          %3541 = vmatprep.subr.mxu0 0.0
          %3542 = vmatpush2.msra.mxu0 0.0
          %3543 = vmatprep.subr.mxu0 0.0
          %3544 = vmatpush2.msra.mxu0 0.0
          %3545 = vmatprep.subr.mxu0 0.0
          %3546 = vmatpush2.msra.mxu0 0.0
          %3547 = vmatprep.subr.mxu0 0.0
          %3548 = vmatpush2.msra.mxu0 0.0
          %3549 = vmatprep.subr.mxu0 0.0
          %3550 = vmatpush2.msra.mxu0 0.0
          %3551 = vmatprep.subr.mxu0 0.0
          %3552 = vmatpush2.msra.mxu0 0.0
          %3553 = vmatprep.subr.mxu0 0.0
          %3554 = vmatpush2.msra.mxu0 0.0
          %3555 = vmatprep.subr.mxu0 0.0
          %3556 = vmatpush2.msra.mxu0 0.0
          %3557 = vmatprep.subr.mxu0 0.0
          %3558 = vmatpush2.msra.mxu0 0.0
          %3559 = vmatprep.subr.mxu0 0.0
          %3560 = vmatpush2.msra.mxu0 0.0
          %3561 = vmatprep.subr.mxu0 0.0
          %3562 = vmatpush2.msra.mxu0 0.0
          %3563 = vmatprep.subr.mxu0 0.0
          %3564 = vmatpush2.msra.mxu0 0.0
          %3565 = vmatprep.subr.mxu0 0.0
          %3566 = vmatpush2.msra.mxu0 0.0
          %3567 = vmatprep.subr.mxu0 0.0
          %3568 = vmatpush2.msra.mxu0 0.0
          %3569 = vmatprep.subr.mxu0 0.0
          %3570 = vmatpush2.msra.mxu0 0.0
          %3571 = vmatprep.subr.mxu0 0.0
          %3572 = vmatpush2.msra.mxu0 0.0
          %3573 = vmatprep.mubr.f32.mxu0 0.0
          %3574 = vmatmul.mubr.f32.gmra.mxu0 %v3454
          %v3575 = vpop.f32.mrf.mxu0
          %v3576 = vadd.f32 %v3507, %v3575
          %v3577 = vpop.f32.mrf.mxu0
          %3578 = vmatprep.mubr.f32.mxu0 0.0
          %3579 = vmatmul.mubr.f32.gmra.mxu0 %v3455
          %v3580 = vpop.f32.mrf.mxu0
          %v3581 = vadd.f32 %v3507, %v3580
          %v3582 = vpop.f32.mrf.mxu0
          %3583 = vmatprep.mubr.f32.mxu0 0.0
          %3584 = vmatmul.mubr.f32.gmra.mxu0 %v3456
          %v3585 = vpop.f32.mrf.mxu0
          %v3586 = vadd.f32 %v3507, %v3585
          %v3587 = vpop.f32.mrf.mxu0
          %3588 = vmatprep.mubr.f32.mxu0 0.0
          %3589 = vmatmul.mubr.f32.gmra.mxu0 %v3457
          %v3590 = vpop.f32.mrf.mxu0
          %v3591 = vadd.f32 %v3507, %v3590
          %v3592 = vpop.f32.mrf.mxu0
          %3593 = vmatprep.mubr.f32.mxu0 0.0
          %3594 = vmatmul.mubr.f32.gmra.mxu0 %v3458
          %v3595 = vpop.f32.mrf.mxu0
          %v3596 = vadd.f32 %v3507, %v3595
          %v3597 = vpop.f32.mrf.mxu0
          %3598 = vmatprep.mubr.f32.mxu0 0.0
          %3599 = vmatmul.mubr.f32.gmra.mxu0 %v3459
          %v3600 = vpop.f32.mrf.mxu0
          %v3601 = vadd.f32 %v3507, %v3600
          %v3602 = vpop.f32.mrf.mxu0
          %3603 = vmatprep.mubr.f32.mxu0 0.0
          %3604 = vmatmul.mubr.f32.gmra.mxu0 %v3460
          %v3605 = vpop.f32.mrf.mxu0
          %v3606 = vadd.f32 %v3507, %v3605
          %v3607 = vpop.f32.mrf.mxu0
          %3608 = vmatprep.mubr.f32.mxu0 0.0
          %3609 = vmatmul.mubr.f32.gmra.mxu0 %v3461
          %v3610 = vpop.f32.mrf.mxu0
          %v3611 = vadd.f32 %v3507, %v3610
          %v3612 = vpop.f32.mrf.mxu0
          %3613 = vmatprep.mubr.f32.mxu0 0.0
          %3614 = vmatmul.mubr.f32.gmra.mxu0 %v3462
          %v3615 = vpop.f32.mrf.mxu0
          %v3616 = vadd.f32 %v3507, %v3615
          %v3617 = vpop.f32.mrf.mxu0
          %3618 = vmatprep.mubr.f32.mxu0 0.0
          %3619 = vmatmul.mubr.f32.gmra.mxu0 %v3463
          %v3620 = vpop.f32.mrf.mxu0
          %v3621 = vadd.f32 %v3507, %v3620
          %v3622 = vpop.f32.mrf.mxu0
          %3623 = vmatprep.mubr.f32.mxu0 0.0
          %3624 = vmatmul.mubr.f32.gmra.mxu0 %v3464
          %v3625 = vpop.f32.mrf.mxu0
          %v3626 = vadd.f32 %v3507, %v3625
          %v3627 = vpop.f32.mrf.mxu0
          %3628 = vmatprep.mubr.f32.mxu0 0.0
          %3629 = vmatmul.mubr.f32.gmra.mxu0 %v3465
          %v3630 = vpop.f32.mrf.mxu0
          %v3631 = vadd.f32 %v3507, %v3630
          %v3632 = vpop.f32.mrf.mxu0
          %3633 = vmatprep.mubr.f32.mxu0 0.0
          %3634 = vmatmul.mubr.f32.gmra.mxu0 %v3466
          %v3635 = vpop.f32.mrf.mxu0
          %v3636 = vadd.f32 %v3507, %v3635
          %v3637 = vpop.f32.mrf.mxu0
          %3638 = vmatprep.mubr.f32.mxu0 0.0
          %3639 = vmatmul.mubr.f32.gmra.mxu0 %v3467
          %v3640 = vpop.f32.mrf.mxu0
          %v3641 = vadd.f32 %v3507, %v3640
          %v3642 = vpop.f32.mrf.mxu0
          %3643 = vmatprep.mubr.f32.mxu0 0.0
          %3644 = vmatmul.mubr.f32.gmra.mxu0 %v3468
          %v3645 = vpop.f32.mrf.mxu0
          %v3646 = vadd.f32 %v3507, %v3645
          %v3647 = vpop.f32.mrf.mxu0
          %3648 = vmatprep.mubr.f32.mxu0 0.0
          %3649 = vmatmul.mubr.f32.gmra.mxu0 %v3469
          %v3650 = vpop.f32.mrf.mxu0
          %v3651 = vadd.f32 %v3507, %v3650
          %v3652 = vpop.f32.mrf.mxu0
          %3653 = vmatprep.mubr.f32.mxu0 0.0
          %3654 = vmatmul.mubr.f32.gmra.mxu0 %v3470
          %v3655 = vpop.f32.mrf.mxu0
          %v3656 = vadd.f32 %v3507, %v3655
          %v3657 = vpop.f32.mrf.mxu0
          %3658 = vmatprep.mubr.f32.mxu0 0.0
          %3659 = vmatmul.mubr.f32.gmra.mxu0 %v3471
          %v3660 = vpop.f32.mrf.mxu0
          %v3661 = vadd.f32 %v3507, %v3660
          %v3662 = vpop.f32.mrf.mxu0
          %3663 = vmatprep.mubr.f32.mxu0 0.0
          %3664 = vmatmul.mubr.f32.gmra.mxu0 %v3472
          %v3665 = vpop.f32.mrf.mxu0
          %v3666 = vadd.f32 %v3507, %v3665
          %v3667 = vpop.f32.mrf.mxu0
          %3668 = vmatprep.mubr.f32.mxu0 0.0
          %3669 = vmatmul.mubr.f32.gmra.mxu0 %v3473
          %v3670 = vpop.f32.mrf.mxu0
          %v3671 = vadd.f32 %v3507, %v3670
          %v3672 = vpop.f32.mrf.mxu0
          %3673 = vmatprep.mubr.f32.mxu0 0.0
          %3674 = vmatmul.mubr.f32.gmra.mxu0 %v3474
          %v3675 = vpop.f32.mrf.mxu0
          %v3676 = vadd.f32 %v3507, %v3675
          %v3677 = vpop.f32.mrf.mxu0
          %3678 = vmatprep.mubr.f32.mxu0 0.0
          %3679 = vmatmul.mubr.f32.gmra.mxu0 %v3475
          %v3680 = vpop.f32.mrf.mxu0
          %v3681 = vadd.f32 %v3507, %v3680
          %v3682 = vpop.f32.mrf.mxu0
          %3683 = vmatprep.mubr.f32.mxu0 0.0
          %3684 = vmatmul.mubr.f32.gmra.mxu0 %v3476
          %v3685 = vpop.f32.mrf.mxu0
          %v3686 = vadd.f32 %v3507, %v3685
          %v3687 = vpop.f32.mrf.mxu0
          %3688 = vmatprep.mubr.f32.mxu0 0.0
          %3689 = vmatmul.mubr.f32.gmra.mxu0 %v3477
          %v3690 = vpop.f32.mrf.mxu0
          %v3691 = vadd.f32 %v3507, %v3690
          %v3692 = vpop.f32.mrf.mxu0
          %3693 = vmatprep.mubr.f32.mxu0 0.0
          %3694 = vmatmul.mubr.f32.gmra.mxu0 %v3478
          %v3695 = vpop.f32.mrf.mxu0
          %v3696 = vadd.f32 %v3507, %v3695
          %v3697 = vpop.f32.mrf.mxu0
          %3698 = vmatprep.mubr.f32.mxu0 0.0
          %3699 = vmatmul.mubr.f32.gmra.mxu0 %v3479
          %v3700 = vpop.f32.mrf.mxu0
          %v3701 = vadd.f32 %v3507, %v3700
          %v3702 = vpop.f32.mrf.mxu0
          %3703 = vmatprep.mubr.f32.mxu0 0.0
          %3704 = vmatmul.mubr.f32.gmra.mxu0 %v3480
          %v3705 = vpop.f32.mrf.mxu0
          %v3706 = vadd.f32 %v3507, %v3705
          %v3707 = vpop.f32.mrf.mxu0
          %3708 = vmatprep.mubr.f32.mxu0 0.0
          %3709 = vmatmul.mubr.f32.gmra.mxu0 %v3481
          %v3710 = vpop.f32.mrf.mxu0
          %v3711 = vadd.f32 %v3507, %v3710
          %v3712 = vpop.f32.mrf.mxu0
          %3713 = vmatprep.mubr.f32.mxu0 0.0
          %3714 = vmatmul.mubr.f32.gmra.mxu0 %v3482
          %v3715 = vpop.f32.mrf.mxu0
          %v3716 = vadd.f32 %v3507, %v3715
          %v3717 = vpop.f32.mrf.mxu0
          %3718 = vmatprep.mubr.f32.mxu0 0.0
          %3719 = vmatmul.mubr.f32.gmra.mxu0 %v3483
          %v3720 = vpop.f32.mrf.mxu0
          %v3721 = vadd.f32 %v3507, %v3720
          %v3722 = vpop.f32.mrf.mxu0
          %3723 = vmatprep.mubr.f32.mxu0 0.0
          %3724 = vmatmul.mubr.f32.gmra.mxu0 %v3484
          %v3725 = vpop.f32.mrf.mxu0
          %v3726 = vadd.f32 %v3507, %v3725
          %v3727 = vpop.f32.mrf.mxu0
          %3728 = vmatprep.mubr.f32.mxu0 0.0
          %3729 = vmatmul.mubr.f32.gmra.mxu0 %v3485
          %v3730 = vpop.f32.mrf.mxu0
          %v3731 = vadd.f32 %v3507, %v3730
          %v3732 = vpop.f32.mrf.mxu0
          %3733 = vdwg.mxu0
          %v3734 = vmax.f32 %v3576, 0.0
          %v3735 = vmax.f32 %v3581, 0.0
          %v3736 = vmax.f32 %v3586, 0.0
          %v3737 = vmax.f32 %v3591, 0.0
          %v3738 = vmax.f32 %v3596, 0.0
          %v3739 = vmax.f32 %v3601, 0.0
          %v3740 = vmax.f32 %v3606, 0.0
          %v3741 = vmax.f32 %v3611, 0.0
          %v3742 = vmax.f32 %v3616, 0.0
          %v3743 = vmax.f32 %v3621, 0.0
          %v3744 = vmax.f32 %v3626, 0.0
          %v3745 = vmax.f32 %v3631, 0.0
          %v3746 = vmax.f32 %v3636, 0.0
          %v3747 = vmax.f32 %v3641, 0.0
          %v3748 = vmax.f32 %v3646, 0.0
          %v3749 = vmax.f32 %v3651, 0.0
          %v3750 = vmax.f32 %v3656, 0.0
          %v3751 = vmax.f32 %v3661, 0.0
          %v3752 = vmax.f32 %v3666, 0.0
          %v3753 = vmax.f32 %v3671, 0.0
          %v3754 = vmax.f32 %v3676, 0.0
          %v3755 = vmax.f32 %v3681, 0.0
          %v3756 = vmax.f32 %v3686, 0.0
          %v3757 = vmax.f32 %v3691, 0.0
          %v3758 = vmax.f32 %v3696, 0.0
          %v3759 = vmax.f32 %v3701, 0.0
          %v3760 = vmax.f32 %v3706, 0.0
          %v3761 = vmax.f32 %v3711, 0.0
          %v3762 = vmax.f32 %v3716, 0.0
          %v3763 = vmax.f32 %v3721, 0.0
          %v3764 = vmax.f32 %v3726, 0.0
          %v3765 = vmax.f32 %v3731, 0.0
          %v3766 = vld [vmem:[#allocation17] sm:$0xff]
          %v3767 = vld [vmem:[#allocation17 + $0x8] sm:$0xff]
          %v3768 = vld [vmem:[#allocation17 + $0x10] sm:$0xff]
          %v3769 = vld [vmem:[#allocation17 + $0x18] sm:$0xff]
          %v3770 = vld [vmem:[#allocation17 + $0x20] sm:$0xff]
          %v3771 = vld [vmem:[#allocation17 + $0x28] sm:$0xff]
          %v3772 = vld [vmem:[#allocation17 + $0x30] sm:$0xff]
          %v3773 = vld [vmem:[#allocation17 + $0x38] sm:$0xff]
          %v3774 = vld [vmem:[#allocation17 + $0x40] sm:$0xff]
          %v3775 = vld [vmem:[#allocation17 + $0x48] sm:$0xff]
          %v3776 = vld [vmem:[#allocation17 + $0x50] sm:$0xff]
          %v3777 = vld [vmem:[#allocation17 + $0x58] sm:$0xff]
          %v3778 = vld [vmem:[#allocation17 + $0x60] sm:$0xff]
          %v3779 = vld [vmem:[#allocation17 + $0x68] sm:$0xff]
          %v3780 = vld [vmem:[#allocation17 + $0x70] sm:$0xff]
          %v3781 = vld [vmem:[#allocation17 + $0x78] sm:$0xff]
          %v3782 = vld [vmem:[%s11] sm:$0x1]
          %v3784 = vlaneseq
          %v3785 = vshrl.u32 %v3784, 7
          %v3786 = vsub.s32 0, %v3785
          %v3787 = vrot.slane %v3782, %v3786
          %3789 = vmatprep.subr.mxu0 0.0
          %3790 = vmatpush1.msra.mxu0 %v3781
          %3791 = vmatprep.subr.mxu0 0.0
          %3792 = vmatpush1.msra.mxu0 %v3780
          %3793 = vmatprep.subr.mxu0 0.0
          %3794 = vmatpush1.msra.mxu0 %v3779
          %3795 = vmatprep.subr.mxu0 0.0
          %3796 = vmatpush1.msra.mxu0 %v3778
          %3797 = vmatprep.subr.mxu0 0.0
          %3798 = vmatpush1.msra.mxu0 %v3777
          %3799 = vmatprep.subr.mxu0 0.0
          %3800 = vmatpush1.msra.mxu0 %v3776
          %3801 = vmatprep.subr.mxu0 0.0
          %3802 = vmatpush1.msra.mxu0 %v3775
          %3803 = vmatprep.subr.mxu0 0.0
          %3804 = vmatpush1.msra.mxu0 %v3774
          %3805 = vmatprep.subr.mxu0 0.0
          %3806 = vmatpush1.msra.mxu0 %v3773
          %3807 = vmatprep.subr.mxu0 0.0
          %3808 = vmatpush1.msra.mxu0 %v3772
          %3809 = vmatprep.subr.mxu0 0.0
          %3810 = vmatpush1.msra.mxu0 %v3771
          %3811 = vmatprep.subr.mxu0 0.0
          %3812 = vmatpush1.msra.mxu0 %v3770
          %3813 = vmatprep.subr.mxu0 0.0
          %3814 = vmatpush1.msra.mxu0 %v3769
          %3815 = vmatprep.subr.mxu0 0.0
          %3816 = vmatpush1.msra.mxu0 %v3768
          %3817 = vmatprep.subr.mxu0 0.0
          %3818 = vmatpush1.msra.mxu0 %v3767
          %3819 = vmatprep.subr.mxu0 0.0
          %3820 = vmatpush1.msra.mxu0 %v3766
          %3821 = vmatprep.subr.mxu0 0.0
          %3822 = vmatpush2.msra.mxu0 0.0
          %3823 = vmatprep.subr.mxu0 0.0
          %3824 = vmatpush2.msra.mxu0 0.0
          %3825 = vmatprep.subr.mxu0 0.0
          %3826 = vmatpush2.msra.mxu0 0.0
          %3827 = vmatprep.subr.mxu0 0.0
          %3828 = vmatpush2.msra.mxu0 0.0
          %3829 = vmatprep.subr.mxu0 0.0
          %3830 = vmatpush2.msra.mxu0 0.0
          %3831 = vmatprep.subr.mxu0 0.0
          %3832 = vmatpush2.msra.mxu0 0.0
          %3833 = vmatprep.subr.mxu0 0.0
          %3834 = vmatpush2.msra.mxu0 0.0
          %3835 = vmatprep.subr.mxu0 0.0
          %3836 = vmatpush2.msra.mxu0 0.0
          %3837 = vmatprep.subr.mxu0 0.0
          %3838 = vmatpush2.msra.mxu0 0.0
          %3839 = vmatprep.subr.mxu0 0.0
          %3840 = vmatpush2.msra.mxu0 0.0
          %3841 = vmatprep.subr.mxu0 0.0
          %3842 = vmatpush2.msra.mxu0 0.0
          %3843 = vmatprep.subr.mxu0 0.0
          %3844 = vmatpush2.msra.mxu0 0.0
          %3845 = vmatprep.subr.mxu0 0.0
          %3846 = vmatpush2.msra.mxu0 0.0
          %3847 = vmatprep.subr.mxu0 0.0
          %3848 = vmatpush2.msra.mxu0 0.0
          %3849 = vmatprep.subr.mxu0 0.0
          %3850 = vmatpush2.msra.mxu0 0.0
          %3851 = vmatprep.subr.mxu0 0.0
          %3852 = vmatpush2.msra.mxu0 0.0
          %3853 = vmatprep.mubr.f32.mxu0 0.0
          %3854 = vmatmul.mubr.f32.gmra.mxu0 %v3734
          %v3855 = vpop.f32.mrf.mxu0
          %v3856 = vadd.f32 %v3787, %v3855
          %v3857 = vpop.f32.mrf.mxu0
          %3858 = vmatprep.mubr.f32.mxu0 0.0
          %3859 = vmatmul.mubr.f32.gmra.mxu0 %v3735
          %v3860 = vpop.f32.mrf.mxu0
          %v3861 = vadd.f32 %v3787, %v3860
          %v3862 = vpop.f32.mrf.mxu0
          %3863 = vmatprep.mubr.f32.mxu0 0.0
          %3864 = vmatmul.mubr.f32.gmra.mxu0 %v3736
          %v3865 = vpop.f32.mrf.mxu0
          %v3866 = vadd.f32 %v3787, %v3865
          %v3867 = vpop.f32.mrf.mxu0
          %3868 = vmatprep.mubr.f32.mxu0 0.0
          %3869 = vmatmul.mubr.f32.gmra.mxu0 %v3737
          %v3870 = vpop.f32.mrf.mxu0
          %v3871 = vadd.f32 %v3787, %v3870
          %v3872 = vpop.f32.mrf.mxu0
          %3873 = vmatprep.mubr.f32.mxu0 0.0
          %3874 = vmatmul.mubr.f32.gmra.mxu0 %v3738
          %v3875 = vpop.f32.mrf.mxu0
          %v3876 = vadd.f32 %v3787, %v3875
          %v3877 = vpop.f32.mrf.mxu0
          %3878 = vmatprep.mubr.f32.mxu0 0.0
          %3879 = vmatmul.mubr.f32.gmra.mxu0 %v3739
          %v3880 = vpop.f32.mrf.mxu0
          %v3881 = vadd.f32 %v3787, %v3880
          %v3882 = vpop.f32.mrf.mxu0
          %3883 = vmatprep.mubr.f32.mxu0 0.0
          %3884 = vmatmul.mubr.f32.gmra.mxu0 %v3740
          %v3885 = vpop.f32.mrf.mxu0
          %v3886 = vadd.f32 %v3787, %v3885
          %v3887 = vpop.f32.mrf.mxu0
          %3888 = vmatprep.mubr.f32.mxu0 0.0
          %3889 = vmatmul.mubr.f32.gmra.mxu0 %v3741
          %v3890 = vpop.f32.mrf.mxu0
          %v3891 = vadd.f32 %v3787, %v3890
          %v3892 = vpop.f32.mrf.mxu0
          %3893 = vmatprep.mubr.f32.mxu0 0.0
          %3894 = vmatmul.mubr.f32.gmra.mxu0 %v3742
          %v3895 = vpop.f32.mrf.mxu0
          %v3896 = vadd.f32 %v3787, %v3895
          %v3897 = vpop.f32.mrf.mxu0
          %3898 = vmatprep.mubr.f32.mxu0 0.0
          %3899 = vmatmul.mubr.f32.gmra.mxu0 %v3743
          %v3900 = vpop.f32.mrf.mxu0
          %v3901 = vadd.f32 %v3787, %v3900
          %v3902 = vpop.f32.mrf.mxu0
          %3903 = vmatprep.mubr.f32.mxu0 0.0
          %3904 = vmatmul.mubr.f32.gmra.mxu0 %v3744
          %v3905 = vpop.f32.mrf.mxu0
          %v3906 = vadd.f32 %v3787, %v3905
          %v3907 = vpop.f32.mrf.mxu0
          %3908 = vmatprep.mubr.f32.mxu0 0.0
          %3909 = vmatmul.mubr.f32.gmra.mxu0 %v3745
          %v3910 = vpop.f32.mrf.mxu0
          %v3911 = vadd.f32 %v3787, %v3910
          %v3912 = vpop.f32.mrf.mxu0
          %3913 = vmatprep.mubr.f32.mxu0 0.0
          %3914 = vmatmul.mubr.f32.gmra.mxu0 %v3746
          %v3915 = vpop.f32.mrf.mxu0
          %v3916 = vadd.f32 %v3787, %v3915
          %v3917 = vpop.f32.mrf.mxu0
          %3918 = vmatprep.mubr.f32.mxu0 0.0
          %3919 = vmatmul.mubr.f32.gmra.mxu0 %v3747
          %v3920 = vpop.f32.mrf.mxu0
          %v3921 = vadd.f32 %v3787, %v3920
          %v3922 = vpop.f32.mrf.mxu0
          %3923 = vmatprep.mubr.f32.mxu0 0.0
          %3924 = vmatmul.mubr.f32.gmra.mxu0 %v3748
          %v3925 = vpop.f32.mrf.mxu0
          %v3926 = vadd.f32 %v3787, %v3925
          %v3927 = vpop.f32.mrf.mxu0
          %3928 = vmatprep.mubr.f32.mxu0 0.0
          %3929 = vmatmul.mubr.f32.gmra.mxu0 %v3749
          %v3930 = vpop.f32.mrf.mxu0
          %v3931 = vadd.f32 %v3787, %v3930
          %v3932 = vpop.f32.mrf.mxu0
          %3933 = vmatprep.mubr.f32.mxu0 0.0
          %3934 = vmatmul.mubr.f32.gmra.mxu0 %v3750
          %v3935 = vpop.f32.mrf.mxu0
          %v3936 = vadd.f32 %v3787, %v3935
          %v3937 = vpop.f32.mrf.mxu0
          %3938 = vmatprep.mubr.f32.mxu0 0.0
          %3939 = vmatmul.mubr.f32.gmra.mxu0 %v3751
          %v3940 = vpop.f32.mrf.mxu0
          %v3941 = vadd.f32 %v3787, %v3940
          %v3942 = vpop.f32.mrf.mxu0
          %3943 = vmatprep.mubr.f32.mxu0 0.0
          %3944 = vmatmul.mubr.f32.gmra.mxu0 %v3752
          %v3945 = vpop.f32.mrf.mxu0
          %v3946 = vadd.f32 %v3787, %v3945
          %v3947 = vpop.f32.mrf.mxu0
          %3948 = vmatprep.mubr.f32.mxu0 0.0
          %3949 = vmatmul.mubr.f32.gmra.mxu0 %v3753
          %v3950 = vpop.f32.mrf.mxu0
          %v3951 = vadd.f32 %v3787, %v3950
          %v3952 = vpop.f32.mrf.mxu0
          %3953 = vmatprep.mubr.f32.mxu0 0.0
          %3954 = vmatmul.mubr.f32.gmra.mxu0 %v3754
          %v3955 = vpop.f32.mrf.mxu0
          %v3956 = vadd.f32 %v3787, %v3955
          %v3957 = vpop.f32.mrf.mxu0
          %3958 = vmatprep.mubr.f32.mxu0 0.0
          %3959 = vmatmul.mubr.f32.gmra.mxu0 %v3755
          %v3960 = vpop.f32.mrf.mxu0
          %v3961 = vadd.f32 %v3787, %v3960
          %v3962 = vpop.f32.mrf.mxu0
          %3963 = vmatprep.mubr.f32.mxu0 0.0
          %3964 = vmatmul.mubr.f32.gmra.mxu0 %v3756
          %v3965 = vpop.f32.mrf.mxu0
          %v3966 = vadd.f32 %v3787, %v3965
          %v3967 = vpop.f32.mrf.mxu0
          %3968 = vmatprep.mubr.f32.mxu0 0.0
          %3969 = vmatmul.mubr.f32.gmra.mxu0 %v3757
          %v3970 = vpop.f32.mrf.mxu0
          %v3971 = vadd.f32 %v3787, %v3970
          %v3972 = vpop.f32.mrf.mxu0
          %3973 = vmatprep.mubr.f32.mxu0 0.0
          %3974 = vmatmul.mubr.f32.gmra.mxu0 %v3758
          %v3975 = vpop.f32.mrf.mxu0
          %v3976 = vadd.f32 %v3787, %v3975
          %v3977 = vpop.f32.mrf.mxu0
          %3978 = vmatprep.mubr.f32.mxu0 0.0
          %3979 = vmatmul.mubr.f32.gmra.mxu0 %v3759
          %v3980 = vpop.f32.mrf.mxu0
          %v3981 = vadd.f32 %v3787, %v3980
          %v3982 = vpop.f32.mrf.mxu0
          %3983 = vmatprep.mubr.f32.mxu0 0.0
          %3984 = vmatmul.mubr.f32.gmra.mxu0 %v3760
          %v3985 = vpop.f32.mrf.mxu0
          %v3986 = vadd.f32 %v3787, %v3985
          %v3987 = vpop.f32.mrf.mxu0
          %3988 = vmatprep.mubr.f32.mxu0 0.0
          %3989 = vmatmul.mubr.f32.gmra.mxu0 %v3761
          %v3990 = vpop.f32.mrf.mxu0
          %v3991 = vadd.f32 %v3787, %v3990
          %v3992 = vpop.f32.mrf.mxu0
          %3993 = vmatprep.mubr.f32.mxu0 0.0
          %3994 = vmatmul.mubr.f32.gmra.mxu0 %v3762
          %v3995 = vpop.f32.mrf.mxu0
          %v3996 = vadd.f32 %v3787, %v3995
          %v3997 = vpop.f32.mrf.mxu0
          %3998 = vmatprep.mubr.f32.mxu0 0.0
          %3999 = vmatmul.mubr.f32.gmra.mxu0 %v3763
          %v4000 = vpop.f32.mrf.mxu0
          %v4001 = vadd.f32 %v3787, %v4000
          %v4002 = vpop.f32.mrf.mxu0
          %4003 = vmatprep.mubr.f32.mxu0 0.0
          %4004 = vmatmul.mubr.f32.gmra.mxu0 %v3764
          %v4005 = vpop.f32.mrf.mxu0
          %v4006 = vadd.f32 %v3787, %v4005
          %v4007 = vpop.f32.mrf.mxu0
          %4008 = vmatprep.mubr.f32.mxu0 0.0
          %4009 = vmatmul.mubr.f32.gmra.mxu0 %v3765
          %v4010 = vpop.f32.mrf.mxu0
          %v4011 = vadd.f32 %v3787, %v4010
          %v4012 = vpop.f32.mrf.mxu0
          %4013 = vdwg.mxu0
          %4014 = vadd.xlane.f32.xlu0 %v3856
          %v4015 = vpop.xlane.xlu0 %4014
          %4016 = vadd.xlane.f32.xlu0 %v3861
          %v4017 = vpop.xlane.xlu0 %4016
          %4018 = vadd.xlane.f32.xlu0 %v3866
          %v4019 = vpop.xlane.xlu0 %4018
          %4020 = vadd.xlane.f32.xlu0 %v3871
          %v4021 = vpop.xlane.xlu0 %4020
          %4022 = vadd.xlane.f32.xlu0 %v3876
          %v4023 = vpop.xlane.xlu0 %4022
          %4024 = vadd.xlane.f32.xlu0 %v3881
          %v4025 = vpop.xlane.xlu0 %4024
          %4026 = vadd.xlane.f32.xlu0 %v3886
          %v4027 = vpop.xlane.xlu0 %4026
          %4028 = vadd.xlane.f32.xlu0 %v3891
          %v4029 = vpop.xlane.xlu0 %4028
          %4030 = vadd.xlane.f32.xlu0 %v3896
          %v4031 = vpop.xlane.xlu0 %4030
          %4032 = vadd.xlane.f32.xlu0 %v3901
          %v4033 = vpop.xlane.xlu0 %4032
          %4034 = vadd.xlane.f32.xlu0 %v3906
          %v4035 = vpop.xlane.xlu0 %4034
          %4036 = vadd.xlane.f32.xlu0 %v3911
          %v4037 = vpop.xlane.xlu0 %4036
          %4038 = vadd.xlane.f32.xlu0 %v3916
          %v4039 = vpop.xlane.xlu0 %4038
          %4040 = vadd.xlane.f32.xlu0 %v3921
          %v4041 = vpop.xlane.xlu0 %4040
          %4042 = vadd.xlane.f32.xlu0 %v3926
          %v4043 = vpop.xlane.xlu0 %4042
          %4044 = vadd.xlane.f32.xlu0 %v3931
          %v4045 = vpop.xlane.xlu0 %4044
          %4046 = vadd.xlane.f32.xlu0 %v3936
          %v4047 = vpop.xlane.xlu0 %4046
          %4048 = vadd.xlane.f32.xlu0 %v3941
          %v4049 = vpop.xlane.xlu0 %4048
          %4050 = vadd.xlane.f32.xlu0 %v3946
          %v4051 = vpop.xlane.xlu0 %4050
          %4052 = vadd.xlane.f32.xlu0 %v3951
          %v4053 = vpop.xlane.xlu0 %4052
          %4054 = vadd.xlane.f32.xlu0 %v3956
          %v4055 = vpop.xlane.xlu0 %4054
          %4056 = vadd.xlane.f32.xlu0 %v3961
          %v4057 = vpop.xlane.xlu0 %4056
          %4058 = vadd.xlane.f32.xlu0 %v3966
          %v4059 = vpop.xlane.xlu0 %4058
          %4060 = vadd.xlane.f32.xlu0 %v3971
          %v4061 = vpop.xlane.xlu0 %4060
          %4062 = vadd.xlane.f32.xlu0 %v3976
          %v4063 = vpop.xlane.xlu0 %4062
          %4064 = vadd.xlane.f32.xlu0 %v3981
          %v4065 = vpop.xlane.xlu0 %4064
          %4066 = vadd.xlane.f32.xlu0 %v3986
          %v4067 = vpop.xlane.xlu0 %4066
          %4068 = vadd.xlane.f32.xlu0 %v3991
          %v4069 = vpop.xlane.xlu0 %4068
          %4070 = vadd.xlane.f32.xlu0 %v3996
          %v4071 = vpop.xlane.xlu0 %4070
          %4072 = vadd.xlane.f32.xlu0 %v4001
          %v4073 = vpop.xlane.xlu0 %4072
          %4074 = vadd.xlane.f32.xlu0 %v4006
          %v4075 = vpop.xlane.xlu0 %4074
          %4076 = vadd.xlane.f32.xlu0 %v4011
          %v4077 = vpop.xlane.xlu0 %4076
          %v4078 = vrcp.pop 128.0
          %v4079 = vmul.f32 %v4015, %v4078
          %v4080 = vmul.f32 %v4017, %v4078
          %v4081 = vmul.f32 %v4019, %v4078
          %v4082 = vmul.f32 %v4021, %v4078
          %v4083 = vmul.f32 %v4023, %v4078
          %v4084 = vmul.f32 %v4025, %v4078
          %v4085 = vmul.f32 %v4027, %v4078
          %v4086 = vmul.f32 %v4029, %v4078
          %v4087 = vmul.f32 %v4031, %v4078
          %v4088 = vmul.f32 %v4033, %v4078
          %v4089 = vmul.f32 %v4035, %v4078
          %v4090 = vmul.f32 %v4037, %v4078
          %v4091 = vmul.f32 %v4039, %v4078
          %v4092 = vmul.f32 %v4041, %v4078
          %v4093 = vmul.f32 %v4043, %v4078
          %v4094 = vmul.f32 %v4045, %v4078
          %v4095 = vmul.f32 %v4047, %v4078
          %v4096 = vmul.f32 %v4049, %v4078
          %v4097 = vmul.f32 %v4051, %v4078
          %v4098 = vmul.f32 %v4053, %v4078
          %v4099 = vmul.f32 %v4055, %v4078
          %v4100 = vmul.f32 %v4057, %v4078
          %v4101 = vmul.f32 %v4059, %v4078
          %v4102 = vmul.f32 %v4061, %v4078
          %v4103 = vmul.f32 %v4063, %v4078
          %v4104 = vmul.f32 %v4065, %v4078
          %v4105 = vmul.f32 %v4067, %v4078
          %v4106 = vmul.f32 %v4069, %v4078
          %v4107 = vmul.f32 %v4071, %v4078
          %v4108 = vmul.f32 %v4073, %v4078
          %v4109 = vmul.f32 %v4075, %v4078
          %v4110 = vmul.f32 %v4077, %v4078
          %v4111 = vsub.f32 %v3856, %v4079
          %v4112 = vsub.f32 %v3861, %v4080
          %v4113 = vsub.f32 %v3866, %v4081
          %v4114 = vsub.f32 %v3871, %v4082
          %v4115 = vsub.f32 %v3876, %v4083
          %v4116 = vsub.f32 %v3881, %v4084
          %v4117 = vsub.f32 %v3886, %v4085
          %v4118 = vsub.f32 %v3891, %v4086
          %v4119 = vsub.f32 %v3896, %v4087
          %v4120 = vsub.f32 %v3901, %v4088
          %v4121 = vsub.f32 %v3906, %v4089
          %v4122 = vsub.f32 %v3911, %v4090
          %v4123 = vsub.f32 %v3916, %v4091
          %v4124 = vsub.f32 %v3921, %v4092
          %v4125 = vsub.f32 %v3926, %v4093
          %v4126 = vsub.f32 %v3931, %v4094
          %v4127 = vsub.f32 %v3936, %v4095
          %v4128 = vsub.f32 %v3941, %v4096
          %v4129 = vsub.f32 %v3946, %v4097
          %v4130 = vsub.f32 %v3951, %v4098
          %v4131 = vsub.f32 %v3956, %v4099
          %v4132 = vsub.f32 %v3961, %v4100
          %v4133 = vsub.f32 %v3966, %v4101
          %v4134 = vsub.f32 %v3971, %v4102
          %v4135 = vsub.f32 %v3976, %v4103
          %v4136 = vsub.f32 %v3981, %v4104
          %v4137 = vsub.f32 %v3986, %v4105
          %v4138 = vsub.f32 %v3991, %v4106
          %v4139 = vsub.f32 %v3996, %v4107
          %v4140 = vsub.f32 %v4001, %v4108
          %v4141 = vsub.f32 %v4006, %v4109
          %v4142 = vsub.f32 %v4011, %v4110
          %v4143 = vmul.f32 %v4111, %v4111
          %v4144 = vmul.f32 %v4112, %v4112
          %v4145 = vmul.f32 %v4113, %v4113
          %v4146 = vmul.f32 %v4114, %v4114
          %v4147 = vmul.f32 %v4115, %v4115
          %v4148 = vmul.f32 %v4116, %v4116
          %v4149 = vmul.f32 %v4117, %v4117
          %v4150 = vmul.f32 %v4118, %v4118
          %v4151 = vmul.f32 %v4119, %v4119
          %v4152 = vmul.f32 %v4120, %v4120
          %v4153 = vmul.f32 %v4121, %v4121
          %v4154 = vmul.f32 %v4122, %v4122
          %v4155 = vmul.f32 %v4123, %v4123
          %v4156 = vmul.f32 %v4124, %v4124
          %v4157 = vmul.f32 %v4125, %v4125
          %v4158 = vmul.f32 %v4126, %v4126
          %v4159 = vmul.f32 %v4127, %v4127
          %v4160 = vmul.f32 %v4128, %v4128
          %v4161 = vmul.f32 %v4129, %v4129
          %v4162 = vmul.f32 %v4130, %v4130
          %v4163 = vmul.f32 %v4131, %v4131
          %v4164 = vmul.f32 %v4132, %v4132
          %v4165 = vmul.f32 %v4133, %v4133
          %v4166 = vmul.f32 %v4134, %v4134
          %v4167 = vmul.f32 %v4135, %v4135
          %v4168 = vmul.f32 %v4136, %v4136
          %v4169 = vmul.f32 %v4137, %v4137
          %v4170 = vmul.f32 %v4138, %v4138
          %v4171 = vmul.f32 %v4139, %v4139
          %v4172 = vmul.f32 %v4140, %v4140
          %v4173 = vmul.f32 %v4141, %v4141
          %v4174 = vmul.f32 %v4142, %v4142
          %4175 = vadd.xlane.f32.xlu0 %v4143
          %v4176 = vpop.xlane.xlu0 %4175
          %4177 = vadd.xlane.f32.xlu0 %v4144
          %v4178 = vpop.xlane.xlu0 %4177
          %4179 = vadd.xlane.f32.xlu0 %v4145
          %v4180 = vpop.xlane.xlu0 %4179
          %4181 = vadd.xlane.f32.xlu0 %v4146
          %v4182 = vpop.xlane.xlu0 %4181
          %4183 = vadd.xlane.f32.xlu0 %v4147
          %v4184 = vpop.xlane.xlu0 %4183
          %4185 = vadd.xlane.f32.xlu0 %v4148
          %v4186 = vpop.xlane.xlu0 %4185
          %4187 = vadd.xlane.f32.xlu0 %v4149
          %v4188 = vpop.xlane.xlu0 %4187
          %4189 = vadd.xlane.f32.xlu0 %v4150
          %v4190 = vpop.xlane.xlu0 %4189
          %4191 = vadd.xlane.f32.xlu0 %v4151
          %v4192 = vpop.xlane.xlu0 %4191
          %4193 = vadd.xlane.f32.xlu0 %v4152
          %v4194 = vpop.xlane.xlu0 %4193
          %4195 = vadd.xlane.f32.xlu0 %v4153
          %v4196 = vpop.xlane.xlu0 %4195
          %4197 = vadd.xlane.f32.xlu0 %v4154
          %v4198 = vpop.xlane.xlu0 %4197
          %4199 = vadd.xlane.f32.xlu0 %v4155
          %v4200 = vpop.xlane.xlu0 %4199
          %4201 = vadd.xlane.f32.xlu0 %v4156
          %v4202 = vpop.xlane.xlu0 %4201
          %4203 = vadd.xlane.f32.xlu0 %v4157
          %v4204 = vpop.xlane.xlu0 %4203
          %4205 = vadd.xlane.f32.xlu0 %v4158
          %v4206 = vpop.xlane.xlu0 %4205
          %4207 = vadd.xlane.f32.xlu0 %v4159
          %v4208 = vpop.xlane.xlu0 %4207
          %4209 = vadd.xlane.f32.xlu0 %v4160
          %v4210 = vpop.xlane.xlu0 %4209
          %4211 = vadd.xlane.f32.xlu0 %v4161
          %v4212 = vpop.xlane.xlu0 %4211
          %4213 = vadd.xlane.f32.xlu0 %v4162
          %v4214 = vpop.xlane.xlu0 %4213
          %4215 = vadd.xlane.f32.xlu0 %v4163
          %v4216 = vpop.xlane.xlu0 %4215
          %4217 = vadd.xlane.f32.xlu0 %v4164
          %v4218 = vpop.xlane.xlu0 %4217
          %4219 = vadd.xlane.f32.xlu0 %v4165
          %v4220 = vpop.xlane.xlu0 %4219
          %4221 = vadd.xlane.f32.xlu0 %v4166
          %v4222 = vpop.xlane.xlu0 %4221
          %4223 = vadd.xlane.f32.xlu0 %v4167
          %v4224 = vpop.xlane.xlu0 %4223
          %4225 = vadd.xlane.f32.xlu0 %v4168
          %v4226 = vpop.xlane.xlu0 %4225
          %4227 = vadd.xlane.f32.xlu0 %v4169
          %v4228 = vpop.xlane.xlu0 %4227
          %4229 = vadd.xlane.f32.xlu0 %v4170
          %v4230 = vpop.xlane.xlu0 %4229
          %4231 = vadd.xlane.f32.xlu0 %v4171
          %v4232 = vpop.xlane.xlu0 %4231
          %4233 = vadd.xlane.f32.xlu0 %v4172
          %v4234 = vpop.xlane.xlu0 %4233
          %4235 = vadd.xlane.f32.xlu0 %v4173
          %v4236 = vpop.xlane.xlu0 %4235
          %4237 = vadd.xlane.f32.xlu0 %v4174
          %v4238 = vpop.xlane.xlu0 %4237
          %v4239 = vmul.f32 %v4176, %v4078
          %v4240 = vmul.f32 %v4178, %v4078
          %v4241 = vmul.f32 %v4180, %v4078
          %v4242 = vmul.f32 %v4182, %v4078
          %v4243 = vmul.f32 %v4184, %v4078
          %v4244 = vmul.f32 %v4186, %v4078
          %v4245 = vmul.f32 %v4188, %v4078
          %v4246 = vmul.f32 %v4190, %v4078
          %v4247 = vmul.f32 %v4192, %v4078
          %v4248 = vmul.f32 %v4194, %v4078
          %v4249 = vmul.f32 %v4196, %v4078
          %v4250 = vmul.f32 %v4198, %v4078
          %v4251 = vmul.f32 %v4200, %v4078
          %v4252 = vmul.f32 %v4202, %v4078
          %v4253 = vmul.f32 %v4204, %v4078
          %v4254 = vmul.f32 %v4206, %v4078
          %v4255 = vmul.f32 %v4208, %v4078
          %v4256 = vmul.f32 %v4210, %v4078
          %v4257 = vmul.f32 %v4212, %v4078
          %v4258 = vmul.f32 %v4214, %v4078
          %v4259 = vmul.f32 %v4216, %v4078
          %v4260 = vmul.f32 %v4218, %v4078
          %v4261 = vmul.f32 %v4220, %v4078
          %v4262 = vmul.f32 %v4222, %v4078
          %v4263 = vmul.f32 %v4224, %v4078
          %v4264 = vmul.f32 %v4226, %v4078
          %v4265 = vmul.f32 %v4228, %v4078
          %v4266 = vmul.f32 %v4230, %v4078
          %v4267 = vmul.f32 %v4232, %v4078
          %v4268 = vmul.f32 %v4234, %v4078
          %v4269 = vmul.f32 %v4236, %v4078
          %v4270 = vmul.f32 %v4238, %v4078
          %v4271 = vadd.f32 %v4239, 1e-05
          %v4272 = vadd.f32 %v4240, 1e-05
          %v4273 = vadd.f32 %v4241, 1e-05
          %v4274 = vadd.f32 %v4242, 1e-05
          %v4275 = vadd.f32 %v4243, 1e-05
          %v4276 = vadd.f32 %v4244, 1e-05
          %v4277 = vadd.f32 %v4245, 1e-05
          %v4278 = vadd.f32 %v4246, 1e-05
          %v4279 = vadd.f32 %v4247, 1e-05
          %v4280 = vadd.f32 %v4248, 1e-05
          %v4281 = vadd.f32 %v4249, 1e-05
          %v4282 = vadd.f32 %v4250, 1e-05
          %v4283 = vadd.f32 %v4251, 1e-05
          %v4284 = vadd.f32 %v4252, 1e-05
          %v4285 = vadd.f32 %v4253, 1e-05
          %v4286 = vadd.f32 %v4254, 1e-05
          %v4287 = vadd.f32 %v4255, 1e-05
          %v4288 = vadd.f32 %v4256, 1e-05
          %v4289 = vadd.f32 %v4257, 1e-05
          %v4290 = vadd.f32 %v4258, 1e-05
          %v4291 = vadd.f32 %v4259, 1e-05
          %v4292 = vadd.f32 %v4260, 1e-05
          %v4293 = vadd.f32 %v4261, 1e-05
          %v4294 = vadd.f32 %v4262, 1e-05
          %v4295 = vadd.f32 %v4263, 1e-05
          %v4296 = vadd.f32 %v4264, 1e-05
          %v4297 = vadd.f32 %v4265, 1e-05
          %v4298 = vadd.f32 %v4266, 1e-05
          %v4299 = vadd.f32 %v4267, 1e-05
          %v4300 = vadd.f32 %v4268, 1e-05
          %v4301 = vadd.f32 %v4269, 1e-05
          %v4302 = vadd.f32 %v4270, 1e-05
          %v4303 = vrsqrt.pop %v4271
          %v4304 = vrsqrt.pop %v4272
          %v4305 = vrsqrt.pop %v4273
          %v4306 = vrsqrt.pop %v4274
          %v4307 = vrsqrt.pop %v4275
          %v4308 = vrsqrt.pop %v4276
          %v4309 = vrsqrt.pop %v4277
          %v4310 = vrsqrt.pop %v4278
          %v4311 = vrsqrt.pop %v4279
          %v4312 = vrsqrt.pop %v4280
          %v4313 = vrsqrt.pop %v4281
          %v4314 = vrsqrt.pop %v4282
          %v4315 = vrsqrt.pop %v4283
          %v4316 = vrsqrt.pop %v4284
          %v4317 = vrsqrt.pop %v4285
          %v4318 = vrsqrt.pop %v4286
          %v4319 = vrsqrt.pop %v4287
          %v4320 = vrsqrt.pop %v4288
          %v4321 = vrsqrt.pop %v4289
          %v4322 = vrsqrt.pop %v4290
          %v4323 = vrsqrt.pop %v4291
          %v4324 = vrsqrt.pop %v4292
          %v4325 = vrsqrt.pop %v4293
          %v4326 = vrsqrt.pop %v4294
          %v4327 = vrsqrt.pop %v4295
          %v4328 = vrsqrt.pop %v4296
          %v4329 = vrsqrt.pop %v4297
          %v4330 = vrsqrt.pop %v4298
          %v4331 = vrsqrt.pop %v4299
          %v4332 = vrsqrt.pop %v4300
          %v4333 = vrsqrt.pop %v4301
          %v4334 = vrsqrt.pop %v4302
          %v4335 = vmul.f32 %v4111, %v4303
          %v4336 = vmul.f32 %v4112, %v4304
          %v4337 = vmul.f32 %v4113, %v4305
          %v4338 = vmul.f32 %v4114, %v4306
          %v4339 = vmul.f32 %v4115, %v4307
          %v4340 = vmul.f32 %v4116, %v4308
          %v4341 = vmul.f32 %v4117, %v4309
          %v4342 = vmul.f32 %v4118, %v4310
          %v4343 = vmul.f32 %v4119, %v4311
          %v4344 = vmul.f32 %v4120, %v4312
          %v4345 = vmul.f32 %v4121, %v4313
          %v4346 = vmul.f32 %v4122, %v4314
          %v4347 = vmul.f32 %v4123, %v4315
          %v4348 = vmul.f32 %v4124, %v4316
          %v4349 = vmul.f32 %v4125, %v4317
          %v4350 = vmul.f32 %v4126, %v4318
          %v4351 = vmul.f32 %v4127, %v4319
          %v4352 = vmul.f32 %v4128, %v4320
          %v4353 = vmul.f32 %v4129, %v4321
          %v4354 = vmul.f32 %v4130, %v4322
          %v4355 = vmul.f32 %v4131, %v4323
          %v4356 = vmul.f32 %v4132, %v4324
          %v4357 = vmul.f32 %v4133, %v4325
          %v4358 = vmul.f32 %v4134, %v4326
          %v4359 = vmul.f32 %v4135, %v4327
          %v4360 = vmul.f32 %v4136, %v4328
          %v4361 = vmul.f32 %v4137, %v4329
          %v4362 = vmul.f32 %v4138, %v4330
          %v4363 = vmul.f32 %v4139, %v4331
          %v4364 = vmul.f32 %v4140, %v4332
          %v4365 = vmul.f32 %v4141, %v4333
          %v4366 = vmul.f32 %v4142, %v4334
          %v4367 = vld [vmem:[%s12] sm:$0x1]
          %v4369 = vlaneseq
          %v4370 = vshrl.u32 %v4369, 7
          %v4371 = vsub.s32 0, %v4370
          %v4372 = vrot.slane %v4367, %v4371
          %v4374 = vmul.f32 %v4335, %v4372
          %v4375 = vmul.f32 %v4336, %v4372
          %v4376 = vmul.f32 %v4337, %v4372
          %v4377 = vmul.f32 %v4338, %v4372
          %v4378 = vmul.f32 %v4339, %v4372
          %v4379 = vmul.f32 %v4340, %v4372
          %v4380 = vmul.f32 %v4341, %v4372
          %v4381 = vmul.f32 %v4342, %v4372
          %v4382 = vmul.f32 %v4343, %v4372
          %v4383 = vmul.f32 %v4344, %v4372
          %v4384 = vmul.f32 %v4345, %v4372
          %v4385 = vmul.f32 %v4346, %v4372
          %v4386 = vmul.f32 %v4347, %v4372
          %v4387 = vmul.f32 %v4348, %v4372
          %v4388 = vmul.f32 %v4349, %v4372
          %v4389 = vmul.f32 %v4350, %v4372
          %v4390 = vmul.f32 %v4351, %v4372
          %v4391 = vmul.f32 %v4352, %v4372
          %v4392 = vmul.f32 %v4353, %v4372
          %v4393 = vmul.f32 %v4354, %v4372
          %v4394 = vmul.f32 %v4355, %v4372
          %v4395 = vmul.f32 %v4356, %v4372
          %v4396 = vmul.f32 %v4357, %v4372
          %v4397 = vmul.f32 %v4358, %v4372
          %v4398 = vmul.f32 %v4359, %v4372
          %v4399 = vmul.f32 %v4360, %v4372
          %v4400 = vmul.f32 %v4361, %v4372
          %v4401 = vmul.f32 %v4362, %v4372
          %v4402 = vmul.f32 %v4363, %v4372
          %v4403 = vmul.f32 %v4364, %v4372
          %v4404 = vmul.f32 %v4365, %v4372
          %v4405 = vmul.f32 %v4366, %v4372
          %v4406 = vld [vmem:[%s13] sm:$0x1]
          %v4408 = vlaneseq
          %v4409 = vshrl.u32 %v4408, 7
          %v4410 = vsub.s32 0, %v4409
          %v4411 = vrot.slane %v4406, %v4410
          %v4413 = vadd.f32 %v4374, %v4411
          %v4414 = vadd.f32 %v4375, %v4411
          %v4415 = vadd.f32 %v4376, %v4411
          %v4416 = vadd.f32 %v4377, %v4411
          %v4417 = vadd.f32 %v4378, %v4411
          %v4418 = vadd.f32 %v4379, %v4411
          %v4419 = vadd.f32 %v4380, %v4411
          %v4420 = vadd.f32 %v4381, %v4411
          %v4421 = vadd.f32 %v4382, %v4411
          %v4422 = vadd.f32 %v4383, %v4411
          %v4423 = vadd.f32 %v4384, %v4411
          %v4424 = vadd.f32 %v4385, %v4411
          %v4425 = vadd.f32 %v4386, %v4411
          %v4426 = vadd.f32 %v4387, %v4411
          %v4427 = vadd.f32 %v4388, %v4411
          %v4428 = vadd.f32 %v4389, %v4411
          %v4429 = vadd.f32 %v4390, %v4411
          %v4430 = vadd.f32 %v4391, %v4411
          %v4431 = vadd.f32 %v4392, %v4411
          %v4432 = vadd.f32 %v4393, %v4411
          %v4433 = vadd.f32 %v4394, %v4411
          %v4434 = vadd.f32 %v4395, %v4411
          %v4435 = vadd.f32 %v4396, %v4411
          %v4436 = vadd.f32 %v4397, %v4411
          %v4437 = vadd.f32 %v4398, %v4411
          %v4438 = vadd.f32 %v4399, %v4411
          %v4439 = vadd.f32 %v4400, %v4411
          %v4440 = vadd.f32 %v4401, %v4411
          %v4441 = vadd.f32 %v4402, %v4411
          %v4442 = vadd.f32 %v4403, %v4411
          %v4443 = vadd.f32 %v4404, %v4411
          %v4444 = vadd.f32 %v4405, %v4411
          %v4445 = vadd.f32 %v4413, %v2869
          %v4446 = vadd.f32 %v4414, %v2870
          %v4447 = vadd.f32 %v4415, %v2871
          %v4448 = vadd.f32 %v4416, %v2872
          %v4449 = vadd.f32 %v4417, %v2873
          %v4450 = vadd.f32 %v4418, %v2874
          %v4451 = vadd.f32 %v4419, %v2875
          %v4452 = vadd.f32 %v4420, %v2876
          %v4453 = vadd.f32 %v4421, %v2877
          %v4454 = vadd.f32 %v4422, %v2878
          %v4455 = vadd.f32 %v4423, %v2879
          %v4456 = vadd.f32 %v4424, %v2880
          %v4457 = vadd.f32 %v4425, %v2881
          %v4458 = vadd.f32 %v4426, %v2882
          %v4459 = vadd.f32 %v4427, %v2883
          %v4460 = vadd.f32 %v4428, %v2884
          %v4461 = vadd.f32 %v4429, %v2885
          %v4462 = vadd.f32 %v4430, %v2886
          %v4463 = vadd.f32 %v4431, %v2887
          %v4464 = vadd.f32 %v4432, %v2888
          %v4465 = vadd.f32 %v4433, %v2889
          %v4466 = vadd.f32 %v4434, %v2890
          %v4467 = vadd.f32 %v4435, %v2891
          %v4468 = vadd.f32 %v4436, %v2892
          %v4469 = vadd.f32 %v4437, %v2893
          %v4470 = vadd.f32 %v4438, %v2894
          %v4471 = vadd.f32 %v4439, %v2895
          %v4472 = vadd.f32 %v4440, %v2896
          %v4473 = vadd.f32 %v4441, %v2897
          %v4474 = vadd.f32 %v4442, %v2898
          %v4475 = vadd.f32 %v4443, %v2899
          %v4476 = vadd.f32 %v4444, %v2900
          %4477 = vst [vmem:[%s598] sm:$0xff] %v4445
          %4478 = vst [vmem:[%s598 + $0x8] sm:$0xff] %v4446
          %4479 = vst [vmem:[%s598 + $0x10] sm:$0xff] %v4447
          %4480 = vst [vmem:[%s598 + $0x18] sm:$0xff] %v4448
          %4481 = vst [vmem:[%s598 + $0x20] sm:$0xff] %v4449
          %4482 = vst [vmem:[%s598 + $0x28] sm:$0xff] %v4450
          %4483 = vst [vmem:[%s598 + $0x30] sm:$0xff] %v4451
          %4484 = vst [vmem:[%s598 + $0x38] sm:$0xff] %v4452
          %4485 = vst [vmem:[%s598 + $0x40] sm:$0xff] %v4453
          %4486 = vst [vmem:[%s598 + $0x48] sm:$0xff] %v4454
          %4487 = vst [vmem:[%s598 + $0x50] sm:$0xff] %v4455
          %4488 = vst [vmem:[%s598 + $0x58] sm:$0xff] %v4456
          %4489 = vst [vmem:[%s598 + $0x60] sm:$0xff] %v4457
          %4490 = vst [vmem:[%s598 + $0x68] sm:$0xff] %v4458
          %4491 = vst [vmem:[%s598 + $0x70] sm:$0xff] %v4459
          %4492 = vst [vmem:[%s598 + $0x78] sm:$0xff] %v4460
          %4493 = vst [vmem:[%s598 + $0x80] sm:$0xff] %v4461
          %4494 = vst [vmem:[%s598 + $0x88] sm:$0xff] %v4462
          %4495 = vst [vmem:[%s598 + $0x90] sm:$0xff] %v4463
          %4496 = vst [vmem:[%s598 + $0x98] sm:$0xff] %v4464
          %4497 = vst [vmem:[%s598 + $0xa0] sm:$0xff] %v4465
          %4498 = vst [vmem:[%s598 + $0xa8] sm:$0xff] %v4466
          %4499 = vst [vmem:[%s598 + $0xb0] sm:$0xff] %v4467
          %4500 = vst [vmem:[%s598 + $0xb8] sm:$0xff] %v4468
          %4501 = vst [vmem:[%s598 + $0xc0] sm:$0xff] %v4469
          %4502 = vst [vmem:[%s598 + $0xc8] sm:$0xff] %v4470
          %4503 = vst [vmem:[%s598 + $0xd0] sm:$0xff] %v4471
          %4504 = vst [vmem:[%s598 + $0xd8] sm:$0xff] %v4472
          %4505 = vst [vmem:[%s598 + $0xe0] sm:$0xff] %v4473
          %4506 = vst [vmem:[%s598 + $0xe8] sm:$0xff] %v4474
          %4507 = vst [vmem:[%s598 + $0xf0] sm:$0xff] %v4475
          %4508 = vst [vmem:[%s598 + $0xf8] sm:$0xff] %v4476
        $region108: #{tpu_custom_call.1} parent=67 // pred_fallthru
          _
        %s4509 = sand.u32 %s339, 1
        %s4510 = scalar_lea.sflag [#allocation8], %s4509
        %s4511 = sand.u32 %s339, 1
        %s4512 = smul.addr %s4511, 256
        %s4513 = scalar_lea.vmem [#allocation18], %s4512
        // Predicated region
        $region109: #{tpu_custom_call.1} parent=67 // pred_check
          %p4514 = pneg %p349
        $region110: #{tpu_custom_call.1} parent=67 // pred_check_branch
          %4516 = sbr.rel (%p4514) target = $region112
        $region111: #{tpu_custom_call.1} parent=67 // pred_region
          %s4517 = smul.u32 32, %s48
          %s4519 = ssub.s32 4096, 4096
          %4520 = vsyncadd %s4510, %s4519
          %s4521 = smul.addr %s4517, 128
          %s4522 = scalar_lea.hbm %s14, %s4521
          %s4523 = sshll.u32 %s4513, 4
          %s4524 = int_to_ptr.vmem [resolvable:$true] %s4523
          %4529 = dma.vmem_to_hbm [thread:$0]  %s4524, 4096, %s4522, %s4510, 128, 128, 8
        $region112: #{tpu_custom_call.1} parent=67 // pred_fallthru
          _
      $region68: #{tpu_custom_call.1} parent=5 // pred_fallthru
        _
      %p4530 = scmp.le.s32.totalorder 2, %s39
      // Predicated region
      $region113: #{tpu_custom_call.1} parent=5 // pred_check
        %p4531 = pneg %p4530
      $region114: #{tpu_custom_call.1} parent=5 // pred_check_branch
        %4533 = sbr.rel (%p4531) target = $region116
      $region115: #{tpu_custom_call.1} parent=5 // pred_region
        %s4534 = ssub.s32 %s39, 2
        // Predicated region
        $region117: #{tpu_custom_call.1} parent=115 // pred_check
          %p4535 = pneg %p355
        $region118: #{tpu_custom_call.1} parent=115 // pred_check_branch
          %4537 = sbr.rel (%p4535) target = $region120
        $region119: #{tpu_custom_call.1} parent=115 // pred_region
          %s4538 = sand.u32 %s340, 1
          %s4539 = scalar_lea.sflag [#allocation8], %s4538
          %s4540 = sand.u32 %s340, 1
          %s4541 = smul.addr %s4540, 256
          %s4542 = scalar_lea.vmem [#allocation18], %s4541
          %4543 = dma.done %s4539, 4096
        $region120: #{tpu_custom_call.1} parent=115 // pred_fallthru
          _
      $region116: #{tpu_custom_call.1} parent=5 // pred_fallthru
        _
    $region6: #{tpu_custom_call.1} parent=1 // loop_footer
      %s43 = sadd.s32 1, %s39
    $region7: #{tpu_custom_call.1} parent=1 // loop_footer_branch
      %38 = sbr.rel target = $region3
    $region8: #{tpu_custom_call.1} parent=1 // loop_exit
      _
    %4544 = vsyncpa [#allocation7], 1
    %s4545 = scalar_lea.sflag [#allocation7], 1
    %4546 = vsyncpa %s4545, 1
    %4547 = vsyncpa [#allocation10], 1
    %s4548 = scalar_lea.sflag [#allocation10], 1
    %4549 = vsyncpa %s4548, 1
    %4550 = vsyncpa [#allocation13], 1
    %4551 = vsyncpa [#allocation16], 1
    %4552 = vsyncpa [#allocation8], 1
    %s4553 = scalar_lea.sflag [#allocation8], 1
    %4554 = vsyncpa %s4553, 1

</llo_original>
